<compile_context>
chip_gen: v5e
topology: v5e:2x2
jax: 0.10.0
libtpu: 0.0.40
codegen_flags: <defaults>
</compile_context>

<pallas_src>
import functools

import numpy as np

import jax
import jax.numpy as jnp
from jax.experimental import pallas as pl
from jax.experimental.pallas import tpu as pltpu


# ---------------------------------------------------------------------------
# Sub-pixel (parity) bookkeeping, shared by the host-side weight packing and
# the in-kernel patch builders.  A full-resolution index i is written as
# i = 2*a + p with parity p in {0, 1}; a lives on the half-resolution grid.
# ---------------------------------------------------------------------------
def _decomp(v):
    """v = 2*shift + parity, parity in {0, 1}."""
    return v // 2, v % 2


# (shift, parity) combos reachable by `po + kh - 1`, po in {0,1}, kh in {0,1,2}
RC_FULL = [(-1, 1), (0, 0), (0, 1), (1, 0)]
# combos reachable by `kh - 1` (stride-2 conv, output on the half grid)
RC_DOWN = [_decomp(k - 1) for k in range(3)]
# half-grid shifts reachable by a ConvTranspose2d(stride=2) contribution
RC_UP = [0, 1]


# ---------------------------------------------------------------------------
# Host-side weight packing: 3x3 kernels -> single (M, K) matmul matrices
# ---------------------------------------------------------------------------
def _pack_full(w_hwio):
    """Stride-1 3x3 conv acting on a parity-decomposed full-res map.

    Input  rows: (p*2+q)*Cin + ci   Output rows: (po*2+qo)*Cout + co
    Patch  rows: (i*4+j)*Cin + ci   with (i, j) indexing RC_FULL x RC_FULL.
    Returns (4*Cout, 16*Cin); ~9/16 of the Cin-blocks are non-zero.
    """
    _, _, cin, cout = w_hwio.shape
    wp = np.zeros((4 * cout, 16 * cin), np.float32)
    for po in range(2):
        for qo in range(2):
            for kh in range(3):
                i = RC_FULL.index(_decomp(po + kh - 1))
                for kw in range(3):
                    j = RC_FULL.index(_decomp(qo + kw - 1))
                    u = i * 4 + j
                    wp[(po * 2 + qo) * cout:(po * 2 + qo + 1) * cout,
                       u * cin:(u + 1) * cin] = w_hwio[kh, kw].T
    return wp


def _pack_taps(w_hwio):
    """Plain 9-tap packing (used for the stride-2 conv1 on the parity input
    and the stride-1 half-res convs conv2/conv3): (Cout, 9*Cin)."""
    _, _, cin, cout = w_hwio.shape
    wp = np.zeros((cout, 9 * cin), np.float32)
    for kh in range(3):
        for kw in range(3):
            t = kh * 3 + kw
            wp[:, t * cin:(t + 1) * cin] = w_hwio[kh, kw].T
    return wp


def _pack_up(w_hwio_flipped):
    """ConvTranspose2d(k=3, s=2, p=1, op=1) == 3x3 conv (flipped kernel) over
    the zero-upsampled input.  Only the (0,0) parity plane of the upsampled
    map is non-zero, so only 4 shifted copies of the half-res input are
    needed; the output is parity-decomposed.  Returns (4*Cout, 4*Cin)."""
    _, _, cin, cout = w_hwio_flipped.shape
    wp = np.zeros((4 * cout, 4 * cin), np.float32)
    for po in range(2):
        for qo in range(2):
            for kh in range(3):
                dr, p = _decomp(po + kh - 1)
                if p:                       # hits a structurally-zero plane
                    continue
                for kw in range(3):
                    dc, q = _decomp(qo + kw - 1)
                    if q:
                        continue
                    u = RC_UP.index(dr) * 2 + RC_UP.index(dc)
                    wp[(po * 2 + qo) * cout:(po * 2 + qo + 1) * cout,
                       u * cin:(u + 1) * cin] = w_hwio_flipped[kh, kw].T
    return wp


def _flip_transpose_weight(w_iohw):
    """Torch ConvTranspose2d weight (Cin, Cout, 3, 3) -> HWIO weight of the
    equivalent stride-1 conv applied to the zero-upsampled input."""
    return np.transpose(np.asarray(w_iohw)[:, :, ::-1, ::-1], (2, 3, 0, 1))


def pack_corrnet_params(params):
    """Pack weights to the single-matmul bf16 matrices used by the kernel and
    broadcast biases over the output parity rows (f32)."""
    f32 = lambda a: np.asarray(a, np.float32)
    w3 = _flip_transpose_weight(params["conv3_w"])
    w4 = _flip_transpose_weight(params["conv4_w"])
    packed = {
        "w0": _pack_full(f32(params["conv0_w"])),             # (32, 16*G)
        "b0": np.tile(f32(params["conv0_b"]), 4)[:, None],    # (32, 1)
        "w1": _pack_taps(f32(params["conv1_w"])),             # (16, 72)
        "b1": f32(params["conv1_b"])[:, None],                # (16, 1)
        "w2": _pack_taps(f32(params["conv2_w"])),             # (32, 144)
        "b2": f32(params["conv2_b"])[:, None],                # (32, 1)
        "w3": _pack_taps(w3),                                 # (16, 288)
        "w4": _pack_up(w4),                                   # (32, 64)
        "w5": _pack_full(f32(params["conv5_w"])),             # (4, 128)
        "b5": np.tile(f32(params["conv5_b"]), 4)[:, None],    # (4, 1)
    }
    return {k: jnp.asarray(v, jnp.bfloat16 if k.startswith("w") else jnp.float32)
            for k, v in packed.items()}


# ---------------------------------------------------------------------------
# Tiny constant tables (KBs — no O(L^2) operators)
# ---------------------------------------------------------------------------
def _shift_masks(hh, ww, n_img):
    """(9, 1, n_img*hh*ww) 0/1 masks on the packed half-res lane grid:
    entry t=(dr+1)*3+(dc+1) is 1 at (a, b) iff (a+dr, b+dc) is inside the
    hh x ww grid (this also kills roll wrap-around between packed images)."""
    m = np.zeros((9, hh, ww), np.float32)
    for dr in (-1, 0, 1):
        for dc in (-1, 0, 1):
            t = (dr + 1) * 3 + (dc + 1)
            m[t, max(0, -dr):min(hh, hh - dr), max(0, -dc):min(ww, ww - dc)] = 1.0
    return np.tile(m.reshape(9, 1, hh * ww), (1, 1, n_img))


def _even_mask(hh, ww, n_img):
    """(1, n_img*hh*ww): 1 where both half-grid coordinates are even — exactly
    the quarter-res positions a stride-2 conv produces (== zero-upsample)."""
    m = np.zeros((hh, ww), np.float32)
    m[0::2, 0::2] = 1.0
    return np.tile(m.reshape(1, hh * ww), (1, n_img))


# ---------------------------------------------------------------------------
# In-kernel patch builders (static Python-unrolled; rolls go to the XLU)
# ---------------------------------------------------------------------------
def _shift2d(x, dr, dc, m_ref, wh, L):
    """x: (C, L) on the packed half-res lane grid.  Returns y with
    y[:, (a, b)] = x[:, (a+dr, b+dc)], zero outside the image."""
    if dr == 0 and dc == 0:
        return x
    d = dr * wh + dc
    return pltpu.roll(x, shift=(-d) % L, axis=1) * m_ref[(dr + 1) * 3 + (dc + 1)]


def _patch_full(xp, cin, m_ref, wh, L):
    """16-combo patch for a stride-1 conv on a parity-decomposed map."""
    planes = []
    for dr, p in RC_FULL:
        for dc, q in RC_FULL:
            plane = xp[(p * 2 + q) * cin:(p * 2 + q + 1) * cin, :]
            planes.append(_shift2d(plane, dr, dc, m_ref, wh, L))
    return jnp.concatenate(planes, axis=0)             # (16*cin, L)


def _patch_down(xp, cin, m_ref, wh, L):
    """9-tap patch for a stride-2 conv (parity input -> half-res output)."""
    planes = []
    for kh in range(3):
        dr, p = RC_DOWN[kh]
        for kw in range(3):
            dc, q = RC_DOWN[kw]
            plane = xp[(p * 2 + q) * cin:(p * 2 + q + 1) * cin, :]
            planes.append(_shift2d(plane, dr, dc, m_ref, wh, L))
    return jnp.concatenate(planes, axis=0)              # (9*cin, L)


def _patch_half(x, m_ref, wh, L):
    """9-tap patch for a stride-1 conv on a half-res map."""
    planes = [_shift2d(x, kh - 1, kw - 1, m_ref, wh, L)
              for kh in range(3) for kw in range(3)]
    return jnp.concatenate(planes, axis=0)               # (9*C, L)


def _patch_up(x, m_ref, wh, L):
    """4-combo patch for ConvTranspose2d(stride=2): shifted copies of the
    half-res input (sub-pixel decomposition, no zero-upsampled tensor)."""
    planes = [_shift2d(x, dr, dc, m_ref, wh, L) for dr in RC_UP for dc in RC_UP]
    return jnp.concatenate(planes, axis=0)               # (4*C, L)


# ---------------------------------------------------------------------------
# Fused CorrNet kernel: 6 MXU matmuls per grid step, everything in VMEM/vregs
# ---------------------------------------------------------------------------
def _corrnet_kernel(x_ref, w0, b0, w1, b1, w2, b2, w3, w4, w5, b5,
                    m_ref, em_ref, o_ref, *, G, wh, L):
    f32, bf16 = jnp.float32, jnp.bfloat16

    def conv(w_ref, patch):                       # bf16 MXU, f32 accumulation
        return jnp.dot(w_ref[...], patch.astype(bf16), preferred_element_type=f32)

    xp = x_ref[0]                                                  # (4G, L)

    # conv0: ConvReLU(G, 8), stride 1 (full res, parity layout)
    c0 = jnp.maximum(conv(w0, _patch_full(xp, G, m_ref, wh, L)) + b0[...], 0.0)
    # conv1: ConvReLU(8, 16), stride 2 — computed exactly at its half-res
    # output positions (stride folded into the parity tap selection)
    c1 = jnp.maximum(conv(w1, _patch_down(c0, 8, m_ref, wh, L)) + b1[...], 0.0)
    # conv2: ConvReLU(16, 32), stride 2 — evaluated on the half-res grid and
    # masked to the even positions, which *is* the zero-upsampled c2 that
    # conv3 consumes.
    z2 = jnp.maximum(conv(w2, _patch_half(c1, m_ref, wh, L)) + b2[...], 0.0)
    z2 = z2 * em_ref[...]
    # conv3: ConvTranspose2d(32,16,3,s2,p1,op1) == 3x3 conv (flipped kernel)
    # over the zero-upsampled quarter-res map; residual add with conv1.
    x3 = c1 + conv(w3, _patch_half(z2, m_ref, wh, L))
    # conv4: ConvTranspose2d(16,8,3,s2,p1,op1) — sub-pixel decomposition,
    # output directly in the full-res parity layout; residual add with conv0.
    x4 = c0 + conv(w4, _patch_up(x3, m_ref, wh, L))
    # conv5: Conv2d(8, 1, 3, padding=1) + bias (full res, parity layout)
    o_ref[0] = conv(w5, _patch_full(x4, 8, m_ref, wh, L)) + b5[...]


# ---------------------------------------------------------------------------
# Wrapper: layout plumbing + single pallas_call
# ---------------------------------------------------------------------------
def corrnet_forward(packed, x, *, images_per_step=8):
    """x: (batch, G, num_depth, H, W) -> (batch, num_depth, H, W)."""
    batch, G, D, H, W = x.shape
    assert H % 4 == 0 and W % 4 == 0, "two stride-2 stages need H, W % 4 == 0"
    N = batch * D
    n_img = max(1, min(images_per_step, N))
    while N % n_img:
        n_img -= 1
    S = N // n_img
    hh, wh = H // 2, W // 2
    L = n_img * hh * wh                      # packed half-res lane width

    # (batch, G, D, H, W) -> (S, 4*G, L): parity planes on sublanes (row index
    # = (p*2+q)*G + g), packed half-res grid on lanes (lane = (m, a, b)).
    xn = jnp.transpose(x, (0, 2, 1, 3, 4)).reshape(N, G, H, W)
    xn = xn.reshape(S, n_img, G, hh, 2, wh, 2)
    xn = jnp.transpose(xn, (0, 4, 6, 2, 1, 3, 5)).reshape(S, 4 * G, L)
    xn = xn.astype(jnp.float32)

    m_tap = jnp.asarray(_shift_masks(hh, wh, n_img))    # (9, 1, L)
    m_even = jnp.asarray(_even_mask(hh, wh, n_img))     # (1, L)

    const_args = (packed["w0"], packed["b0"], packed["w1"], packed["b1"],
                  packed["w2"], packed["b2"], packed["w3"], packed["w4"],
                  packed["w5"], packed["b5"], m_tap, m_even)

    # Constant operands: their block index never changes, so Pallas DMAs them
    # once; total footprint is a few tens of KiB, so default double-buffering
    # is harmless even under v7x's smaller VMEM.
    def _const_spec(arr):
        nd = arr.ndim
        return pl.BlockSpec(arr.shape, lambda i, _nd=nd: (0,) * _nd)

    in_specs = [pl.BlockSpec((1, 4 * G, L), lambda i: (i, 0, 0))]
    in_specs += [_const_spec(a) for a in const_args]

    out = pl.pallas_call(
        functools.partial(_corrnet_kernel, G=G, wh=wh, L=L),
        out_shape=jax.ShapeDtypeStruct((S, 4, L), jnp.float32),
        grid_spec=pltpu.PrefetchScalarGridSpec(
            num_scalar_prefetch=0,
            grid=(S,),
            in_specs=in_specs,
            out_specs=pl.BlockSpec((1, 4, L), lambda i: (i, 0, 0)),
        ),
        compiler_params=pltpu.CompilerParams(
            dimension_semantics=("parallel",),
            vmem_limit_bytes=32 * 1024 * 1024,
        ),
    )(xn, *const_args)

    # (S, 4, L) -> (batch, D, H, W): interleave the 4 output parity planes.
    out = out.reshape(S, 2, 2, n_img, hh, wh)
    out = jnp.transpose(out, (0, 3, 4, 1, 5, 2)).reshape(batch, D, H, W)
    return out


# ---------------------------------------------------------------------------
# Deterministic parameter init (ConvReLU assumed = Conv2d(3x3, pad=1) + ReLU)
# ---------------------------------------------------------------------------
def init_params(G, key):
    ks = jax.random.split(key, 10)

    def w_hwio(k, cin, cout):
        return jax.random.normal(k, (3, 3, cin, cout), jnp.float32) / jnp.sqrt(
            9.0 * cin)

    return {
        "conv0_w": w_hwio(ks[0], G, 8),
        "conv0_b": 0.01 * jax.random.normal(ks[1], (8,), jnp.float32),
        "conv1_w": w_hwio(ks[2], 8, 16),
        "conv1_b": 0.01 * jax.random.normal(ks[3], (16,), jnp.float32),
        "conv2_w": w_hwio(ks[4], 16, 32),
        "conv2_b": 0.01 * jax.random.normal(ks[5], (32,), jnp.float32),
        # ConvTranspose2d weights, torch layout (Cin, Cout, kH, kW), bias=False
        "conv3_w": jax.random.normal(ks[6], (32, 16, 3, 3), jnp.float32)
        / jnp.sqrt(9.0 * 32),
        "conv4_w": jax.random.normal(ks[7], (16, 8, 3, 3), jnp.float32)
        / jnp.sqrt(9.0 * 16),
        "conv5_w": w_hwio(ks[8], 8, 1),
        "conv5_b": 0.01 * jax.random.normal(ks[9], (1,), jnp.float32),
    }


if __name__ == "__main__":
    key = jax.random.PRNGKey(0)
    kp, kx = jax.random.split(key)

    # Evaluation uses G = 8 for its CorrNet heads.
    batch, G, num_depth, H, W = 2, 8, 8, 16, 16
    params = init_params(G, kp)
    packed = pack_corrnet_params(params)
    x = jax.random.normal(kx, (batch, G, num_depth, H, W), jnp.float32)

    fwd = jax.jit(functools.partial(corrnet_forward, packed, images_per_step=8))
    out = jax.block_until_ready(fwd(x))

    assert out.shape == (batch, num_depth, H, W)
    assert bool(jnp.isfinite(out).all())
    print("KERNEL_OK")
</pallas_src>

<mosaic_0001>
module attributes {stable_mosaic.version = 11 : i64} {
  func.func @_corrnet_kernel(%arg0: i32, %arg1: memref<1x32x512xf32, #tpu.memory_space<vmem>>, %arg2: memref<32x128xbf16, #tpu.memory_space<vmem>>, %arg3: memref<32x1xf32, #tpu.memory_space<vmem>>, %arg4: memref<16x72xbf16, #tpu.memory_space<vmem>>, %arg5: memref<16x1xf32, #tpu.memory_space<vmem>>, %arg6: memref<32x144xbf16, #tpu.memory_space<vmem>>, %arg7: memref<32x1xf32, #tpu.memory_space<vmem>>, %arg8: memref<16x288xbf16, #tpu.memory_space<vmem>>, %arg9: memref<32x64xbf16, #tpu.memory_space<vmem>>, %arg10: memref<4x128xbf16, #tpu.memory_space<vmem>>, %arg11: memref<4x1xf32, #tpu.memory_space<vmem>>, %arg12: memref<9x1x512xf32, #tpu.memory_space<vmem>>, %arg13: memref<1x512xf32, #tpu.memory_space<vmem>>, %arg14: memref<1x4x512xf32, #tpu.memory_space<vmem>>) attributes {dimension_semantics = [#tpu.dimension_semantics<parallel>], iteration_bounds = array<i64: 2>, scalar_prefetch = 0 : i64, scratch_operands = 0 : i64, tpu.core_type = #tpu.core_type<tc>, window_params = [{transform_indices = @transform_0, window_bounds = array<i64: 1, 32, 512>}, {pipeline_mode = #tpu.pipeline_mode<synchronous>, transform_indices = @transform_1, window_bounds = array<i64: 32, 128>}, {pipeline_mode = #tpu.pipeline_mode<synchronous>, transform_indices = @transform_2, window_bounds = array<i64: 32, 1>}, {pipeline_mode = #tpu.pipeline_mode<synchronous>, transform_indices = @transform_3, window_bounds = array<i64: 16, 72>}, {pipeline_mode = #tpu.pipeline_mode<synchronous>, transform_indices = @transform_4, window_bounds = array<i64: 16, 1>}, {pipeline_mode = #tpu.pipeline_mode<synchronous>, transform_indices = @transform_5, window_bounds = array<i64: 32, 144>}, {pipeline_mode = #tpu.pipeline_mode<synchronous>, transform_indices = @transform_6, window_bounds = array<i64: 32, 1>}, {pipeline_mode = #tpu.pipeline_mode<synchronous>, transform_indices = @transform_7, window_bounds = array<i64: 16, 288>}, {pipeline_mode = #tpu.pipeline_mode<synchronous>, transform_indices = @transform_8, window_bounds = array<i64: 32, 64>}, {pipeline_mode = #tpu.pipeline_mode<synchronous>, transform_indices = @transform_9, window_bounds = array<i64: 4, 128>}, {pipeline_mode = #tpu.pipeline_mode<synchronous>, transform_indices = @transform_10, window_bounds = array<i64: 4, 1>}, {pipeline_mode = #tpu.pipeline_mode<synchronous>, transform_indices = @transform_11, window_bounds = array<i64: 9, 1, 512>}, {pipeline_mode = #tpu.pipeline_mode<synchronous>, transform_indices = @transform_12, window_bounds = array<i64: 1, 512>}, {transform_indices = @transform_13, window_bounds = array<i64: 1, 4, 512>}]} {
    %c0 = arith.constant 0 : index
    %c0_0 = arith.constant 0 : index
    %c0_1 = arith.constant 0 : index
    %0 = vector.load %arg1[%c0, %c0_0, %c0_1] : memref<1x32x512xf32, #tpu.memory_space<vmem>>, vector<1x32x512xf32>
    %1 = vector.shape_cast %0 : vector<1x32x512xf32> to vector<32x512xf32>
    %2 = vector.extract_strided_slice %1 {offsets = [24, 0], sizes = [8, 512], strides = [1, 1]} : vector<32x512xf32> to vector<8x512xf32>
    %c9_i32 = arith.constant 9 : i32
    %3 = tpu.dynamic_rotate %2 by %c9_i32 dim 1 : vector<8x512xf32>, i32 -> vector<8x512xf32>
    %c0_2 = arith.constant 0 : index
    %c0_3 = arith.constant 0 : index
    %c0_4 = arith.constant 0 : index
    %4 = vector.load %arg12[%c0_2, %c0_3, %c0_4] : memref<9x1x512xf32, #tpu.memory_space<vmem>>, vector<1x1x512xf32>
    %5 = vector.shape_cast %4 : vector<1x1x512xf32> to vector<1x512xf32>
    %6 = vector.broadcast %5 : vector<1x512xf32> to vector<8x512xf32>
    %7 = arith.mulf %3, %6 : vector<8x512xf32>
    %8 = vector.extract_strided_slice %1 {offsets = [16, 0], sizes = [8, 512], strides = [1, 1]} : vector<32x512xf32> to vector<8x512xf32>
    %c8_i32 = arith.constant 8 : i32
    %9 = tpu.dynamic_rotate %8 by %c8_i32 dim 1 : vector<8x512xf32>, i32 -> vector<8x512xf32>
    %c1 = arith.constant 1 : index
    %c0_5 = arith.constant 0 : index
    %c0_6 = arith.constant 0 : index
    %10 = vector.load %arg12[%c1, %c0_5, %c0_6] : memref<9x1x512xf32, #tpu.memory_space<vmem>>, vector<1x1x512xf32>
    %11 = vector.shape_cast %10 : vector<1x1x512xf32> to vector<1x512xf32>
    %12 = vector.broadcast %11 : vector<1x512xf32> to vector<8x512xf32>
    %13 = arith.mulf %9, %12 : vector<8x512xf32>
    %14 = vector.extract_strided_slice %1 {offsets = [24, 0], sizes = [8, 512], strides = [1, 1]} : vector<32x512xf32> to vector<8x512xf32>
    %c8_i32_7 = arith.constant 8 : i32
    %15 = tpu.dynamic_rotate %14 by %c8_i32_7 dim 1 : vector<8x512xf32>, i32 -> vector<8x512xf32>
    %c1_8 = arith.constant 1 : index
    %c0_9 = arith.constant 0 : index
    %c0_10 = arith.constant 0 : index
    %16 = vector.load %arg12[%c1_8, %c0_9, %c0_10] : memref<9x1x512xf32, #tpu.memory_space<vmem>>, vector<1x1x512xf32>
    %17 = vector.shape_cast %16 : vector<1x1x512xf32> to vector<1x512xf32>
    %18 = vector.broadcast %17 : vector<1x512xf32> to vector<8x512xf32>
    %19 = arith.mulf %15, %18 : vector<8x512xf32>
    %20 = vector.extract_strided_slice %1 {offsets = [16, 0], sizes = [8, 512], strides = [1, 1]} : vector<32x512xf32> to vector<8x512xf32>
    %c7_i32 = arith.constant 7 : i32
    %21 = tpu.dynamic_rotate %20 by %c7_i32 dim 1 : vector<8x512xf32>, i32 -> vector<8x512xf32>
    %c2 = arith.constant 2 : index
    %c0_11 = arith.constant 0 : index
    %c0_12 = arith.constant 0 : index
    %22 = vector.load %arg12[%c2, %c0_11, %c0_12] : memref<9x1x512xf32, #tpu.memory_space<vmem>>, vector<1x1x512xf32>
    %23 = vector.shape_cast %22 : vector<1x1x512xf32> to vector<1x512xf32>
    %24 = vector.broadcast %23 : vector<1x512xf32> to vector<8x512xf32>
    %25 = arith.mulf %21, %24 : vector<8x512xf32>
    %26 = vector.extract_strided_slice %1 {offsets = [8, 0], sizes = [8, 512], strides = [1, 1]} : vector<32x512xf32> to vector<8x512xf32>
    %c1_i32 = arith.constant 1 : i32
    %27 = tpu.dynamic_rotate %26 by %c1_i32 dim 1 : vector<8x512xf32>, i32 -> vector<8x512xf32>
    %c3 = arith.constant 3 : index
    %c0_13 = arith.constant 0 : index
    %c0_14 = arith.constant 0 : index
    %28 = vector.load %arg12[%c3, %c0_13, %c0_14] : memref<9x1x512xf32, #tpu.memory_space<vmem>>, vector<1x1x512xf32>
    %29 = vector.shape_cast %28 : vector<1x1x512xf32> to vector<1x512xf32>
    %30 = vector.broadcast %29 : vector<1x512xf32> to vector<8x512xf32>
    %31 = arith.mulf %27, %30 : vector<8x512xf32>
    %32 = vector.extract_strided_slice %1 {offsets = [0, 0], sizes = [8, 512], strides = [1, 1]} : vector<32x512xf32> to vector<8x512xf32>
    %33 = vector.extract_strided_slice %1 {offsets = [8, 0], sizes = [8, 512], strides = [1, 1]} : vector<32x512xf32> to vector<8x512xf32>
    %34 = vector.extract_strided_slice %1 {offsets = [0, 0], sizes = [8, 512], strides = [1, 1]} : vector<32x512xf32> to vector<8x512xf32>
    %c511_i32 = arith.constant 511 : i32
    %35 = tpu.dynamic_rotate %34 by %c511_i32 dim 1 : vector<8x512xf32>, i32 -> vector<8x512xf32>
    %c5 = arith.constant 5 : index
    %c0_15 = arith.constant 0 : index
    %c0_16 = arith.constant 0 : index
    %36 = vector.load %arg12[%c5, %c0_15, %c0_16] : memref<9x1x512xf32, #tpu.memory_space<vmem>>, vector<1x1x512xf32>
    %37 = vector.shape_cast %36 : vector<1x1x512xf32> to vector<1x512xf32>
    %38 = vector.broadcast %37 : vector<1x512xf32> to vector<8x512xf32>
    %39 = arith.mulf %35, %38 : vector<8x512xf32>
    %40 = vector.extract_strided_slice %1 {offsets = [24, 0], sizes = [8, 512], strides = [1, 1]} : vector<32x512xf32> to vector<8x512xf32>
    %c1_i32_17 = arith.constant 1 : i32
    %41 = tpu.dynamic_rotate %40 by %c1_i32_17 dim 1 : vector<8x512xf32>, i32 -> vector<8x512xf32>
    %c3_18 = arith.constant 3 : index
    %c0_19 = arith.constant 0 : index
    %c0_20 = arith.constant 0 : index
    %42 = vector.load %arg12[%c3_18, %c0_19, %c0_20] : memref<9x1x512xf32, #tpu.memory_space<vmem>>, vector<1x1x512xf32>
    %43 = vector.shape_cast %42 : vector<1x1x512xf32> to vector<1x512xf32>
    %44 = vector.broadcast %43 : vector<1x512xf32> to vector<8x512xf32>
    %45 = arith.mulf %41, %44 : vector<8x512xf32>
    %46 = vector.extract_strided_slice %1 {offsets = [16, 0], sizes = [8, 512], strides = [1, 1]} : vector<32x512xf32> to vector<8x512xf32>
    %47 = vector.extract_strided_slice %1 {offsets = [24, 0], sizes = [8, 512], strides = [1, 1]} : vector<32x512xf32> to vector<8x512xf32>
    %48 = vector.extract_strided_slice %1 {offsets = [16, 0], sizes = [8, 512], strides = [1, 1]} : vector<32x512xf32> to vector<8x512xf32>
    %c511_i32_21 = arith.constant 511 : i32
    %49 = tpu.dynamic_rotate %48 by %c511_i32_21 dim 1 : vector<8x512xf32>, i32 -> vector<8x512xf32>
    %c5_22 = arith.constant 5 : index
    %c0_23 = arith.constant 0 : index
    %c0_24 = arith.constant 0 : index
    %50 = vector.load %arg12[%c5_22, %c0_23, %c0_24] : memref<9x1x512xf32, #tpu.memory_space<vmem>>, vector<1x1x512xf32>
    %51 = vector.shape_cast %50 : vector<1x1x512xf32> to vector<1x512xf32>
    %52 = vector.broadcast %51 : vector<1x512xf32> to vector<8x512xf32>
    %53 = arith.mulf %49, %52 : vector<8x512xf32>
    %54 = vector.extract_strided_slice %1 {offsets = [8, 0], sizes = [8, 512], strides = [1, 1]} : vector<32x512xf32> to vector<8x512xf32>
    %c505_i32 = arith.constant 505 : i32
    %55 = tpu.dynamic_rotate %54 by %c505_i32 dim 1 : vector<8x512xf32>, i32 -> vector<8x512xf32>
    %c6 = arith.constant 6 : index
    %c0_25 = arith.constant 0 : index
    %c0_26 = arith.constant 0 : index
    %56 = vector.load %arg12[%c6, %c0_25, %c0_26] : memref<9x1x512xf32, #tpu.memory_space<vmem>>, vector<1x1x512xf32>
    %57 = vector.shape_cast %56 : vector<1x1x512xf32> to vector<1x512xf32>
    %58 = vector.broadcast %57 : vector<1x512xf32> to vector<8x512xf32>
    %59 = arith.mulf %55, %58 : vector<8x512xf32>
    %60 = vector.extract_strided_slice %1 {offsets = [0, 0], sizes = [8, 512], strides = [1, 1]} : vector<32x512xf32> to vector<8x512xf32>
    %c504_i32 = arith.constant 504 : i32
    %61 = tpu.dynamic_rotate %60 by %c504_i32 dim 1 : vector<8x512xf32>, i32 -> vector<8x512xf32>
    %c7 = arith.constant 7 : index
    %c0_27 = arith.constant 0 : index
    %c0_28 = arith.constant 0 : index
    %62 = vector.load %arg12[%c7, %c0_27, %c0_28] : memref<9x1x512xf32, #tpu.memory_space<vmem>>, vector<1x1x512xf32>
    %63 = vector.shape_cast %62 : vector<1x1x512xf32> to vector<1x512xf32>
    %64 = vector.broadcast %63 : vector<1x512xf32> to vector<8x512xf32>
    %65 = arith.mulf %61, %64 : vector<8x512xf32>
    %66 = vector.extract_strided_slice %1 {offsets = [8, 0], sizes = [8, 512], strides = [1, 1]} : vector<32x512xf32> to vector<8x512xf32>
    %c504_i32_29 = arith.constant 504 : i32
    %67 = tpu.dynamic_rotate %66 by %c504_i32_29 dim 1 : vector<8x512xf32>, i32 -> vector<8x512xf32>
    %c7_30 = arith.constant 7 : index
    %c0_31 = arith.constant 0 : index
    %c0_32 = arith.constant 0 : index
    %68 = vector.load %arg12[%c7_30, %c0_31, %c0_32] : memref<9x1x512xf32, #tpu.memory_space<vmem>>, vector<1x1x512xf32>
    %69 = vector.shape_cast %68 : vector<1x1x512xf32> to vector<1x512xf32>
    %70 = vector.broadcast %69 : vector<1x512xf32> to vector<8x512xf32>
    %71 = arith.mulf %67, %70 : vector<8x512xf32>
    %72 = vector.extract_strided_slice %1 {offsets = [0, 0], sizes = [8, 512], strides = [1, 1]} : vector<32x512xf32> to vector<8x512xf32>
    %c503_i32 = arith.constant 503 : i32
    %73 = tpu.dynamic_rotate %72 by %c503_i32 dim 1 : vector<8x512xf32>, i32 -> vector<8x512xf32>
    %c8 = arith.constant 8 : index
    %c0_33 = arith.constant 0 : index
    %c0_34 = arith.constant 0 : index
    %74 = vector.load %arg12[%c8, %c0_33, %c0_34] : memref<9x1x512xf32, #tpu.memory_space<vmem>>, vector<1x1x512xf32>
    %75 = vector.shape_cast %74 : vector<1x1x512xf32> to vector<1x512xf32>
    %76 = vector.broadcast %75 : vector<1x512xf32> to vector<8x512xf32>
    %77 = arith.mulf %73, %76 : vector<8x512xf32>
    %78 = tpu.concatenate %7, %13, %19, %25, %31, %32, %33, %39, %45, %46, %47, %53, %59, %65, %71, %77 in 0 : vector<8x512xf32>, vector<8x512xf32>, vector<8x512xf32>, vector<8x512xf32>, vector<8x512xf32>, vector<8x512xf32>, vector<8x512xf32>, vector<8x512xf32>, vector<8x512xf32>, vector<8x512xf32>, vector<8x512xf32>, vector<8x512xf32>, vector<8x512xf32>, vector<8x512xf32>, vector<8x512xf32>, vector<8x512xf32> -> vector<128x512xf32>
    %c0_35 = arith.constant 0 : index
    %c0_36 = arith.constant 0 : index
    %79 = vector.load %arg2[%c0_35, %c0_36] : memref<32x128xbf16, #tpu.memory_space<vmem>>, vector<32x128xbf16>
    %80 = arith.truncf %78 : vector<128x512xf32> to vector<128x512xbf16>
    %cst = arith.constant dense<0.000000e+00> : vector<32x512xf32>
    %81 = tpu.matmul %79, %80, %cst {dimension_numbers = #tpu.dot_dimension_numbers<[1], [0], [0], [1], [0, 0, 1, 1], [], []>} : vector<32x128xbf16>, vector<128x512xbf16>, vector<32x512xf32> -> vector<32x512xf32>
    %c0_37 = arith.constant 0 : index
    %c0_38 = arith.constant 0 : index
    %82 = vector.load %arg3[%c0_37, %c0_38] : memref<32x1xf32, #tpu.memory_space<vmem>>, vector<32x1xf32>
    %83 = vector.broadcast %82 : vector<32x1xf32> to vector<32x512xf32>
    %84 = arith.addf %81, %83 : vector<32x512xf32>
    %cst_39 = arith.constant 0.000000e+00 : f32
    %85 = vector.broadcast %cst_39 : f32 to vector<32x512xf32>
    %86 = arith.maximumf %84, %85 : vector<32x512xf32>
    %87 = vector.extract_strided_slice %86 {offsets = [24, 0], sizes = [8, 512], strides = [1, 1]} : vector<32x512xf32> to vector<8x512xf32>
    %c9_i32_40 = arith.constant 9 : i32
    %88 = tpu.dynamic_rotate %87 by %c9_i32_40 dim 1 : vector<8x512xf32>, i32 -> vector<8x512xf32>
    %c0_41 = arith.constant 0 : index
    %c0_42 = arith.constant 0 : index
    %c0_43 = arith.constant 0 : index
    %89 = vector.load %arg12[%c0_41, %c0_42, %c0_43] : memref<9x1x512xf32, #tpu.memory_space<vmem>>, vector<1x1x512xf32>
    %90 = vector.shape_cast %89 : vector<1x1x512xf32> to vector<1x512xf32>
    %91 = vector.broadcast %90 : vector<1x512xf32> to vector<8x512xf32>
    %92 = arith.mulf %88, %91 : vector<8x512xf32>
    %93 = vector.extract_strided_slice %86 {offsets = [16, 0], sizes = [8, 512], strides = [1, 1]} : vector<32x512xf32> to vector<8x512xf32>
    %c8_i32_44 = arith.constant 8 : i32
    %94 = tpu.dynamic_rotate %93 by %c8_i32_44 dim 1 : vector<8x512xf32>, i32 -> vector<8x512xf32>
    %c1_45 = arith.constant 1 : index
    %c0_46 = arith.constant 0 : index
    %c0_47 = arith.constant 0 : index
    %95 = vector.load %arg12[%c1_45, %c0_46, %c0_47] : memref<9x1x512xf32, #tpu.memory_space<vmem>>, vector<1x1x512xf32>
    %96 = vector.shape_cast %95 : vector<1x1x512xf32> to vector<1x512xf32>
    %97 = vector.broadcast %96 : vector<1x512xf32> to vector<8x512xf32>
    %98 = arith.mulf %94, %97 : vector<8x512xf32>
    %99 = vector.extract_strided_slice %86 {offsets = [24, 0], sizes = [8, 512], strides = [1, 1]} : vector<32x512xf32> to vector<8x512xf32>
    %c8_i32_48 = arith.constant 8 : i32
    %100 = tpu.dynamic_rotate %99 by %c8_i32_48 dim 1 : vector<8x512xf32>, i32 -> vector<8x512xf32>
    %c1_49 = arith.constant 1 : index
    %c0_50 = arith.constant 0 : index
    %c0_51 = arith.constant 0 : index
    %101 = vector.load %arg12[%c1_49, %c0_50, %c0_51] : memref<9x1x512xf32, #tpu.memory_space<vmem>>, vector<1x1x512xf32>
    %102 = vector.shape_cast %101 : vector<1x1x512xf32> to vector<1x512xf32>
    %103 = vector.broadcast %102 : vector<1x512xf32> to vector<8x512xf32>
    %104 = arith.mulf %100, %103 : vector<8x512xf32>
    %105 = vector.extract_strided_slice %86 {offsets = [8, 0], sizes = [8, 512], strides = [1, 1]} : vector<32x512xf32> to vector<8x512xf32>
    %c1_i32_52 = arith.constant 1 : i32
    %106 = tpu.dynamic_rotate %105 by %c1_i32_52 dim 1 : vector<8x512xf32>, i32 -> vector<8x512xf32>
    %c3_53 = arith.constant 3 : index
    %c0_54 = arith.constant 0 : index
    %c0_55 = arith.constant 0 : index
    %107 = vector.load %arg12[%c3_53, %c0_54, %c0_55] : memref<9x1x512xf32, #tpu.memory_space<vmem>>, vector<1x1x512xf32>
    %108 = vector.shape_cast %107 : vector<1x1x512xf32> to vector<1x512xf32>
    %109 = vector.broadcast %108 : vector<1x512xf32> to vector<8x512xf32>
    %110 = arith.mulf %106, %109 : vector<8x512xf32>
    %111 = vector.extract_strided_slice %86 {offsets = [0, 0], sizes = [8, 512], strides = [1, 1]} : vector<32x512xf32> to vector<8x512xf32>
    %112 = vector.extract_strided_slice %86 {offsets = [8, 0], sizes = [8, 512], strides = [1, 1]} : vector<32x512xf32> to vector<8x512xf32>
    %113 = vector.extract_strided_slice %86 {offsets = [24, 0], sizes = [8, 512], strides = [1, 1]} : vector<32x512xf32> to vector<8x512xf32>
    %c1_i32_56 = arith.constant 1 : i32
    %114 = tpu.dynamic_rotate %113 by %c1_i32_56 dim 1 : vector<8x512xf32>, i32 -> vector<8x512xf32>
    %c3_57 = arith.constant 3 : index
    %c0_58 = arith.constant 0 : index
    %c0_59 = arith.constant 0 : index
    %115 = vector.load %arg12[%c3_57, %c0_58, %c0_59] : memref<9x1x512xf32, #tpu.memory_space<vmem>>, vector<1x1x512xf32>
    %116 = vector.shape_cast %115 : vector<1x1x512xf32> to vector<1x512xf32>
    %117 = vector.broadcast %116 : vector<1x512xf32> to vector<8x512xf32>
    %118 = arith.mulf %114, %117 : vector<8x512xf32>
    %119 = vector.extract_strided_slice %86 {offsets = [16, 0], sizes = [8, 512], strides = [1, 1]} : vector<32x512xf32> to vector<8x512xf32>
    %120 = vector.extract_strided_slice %86 {offsets = [24, 0], sizes = [8, 512], strides = [1, 1]} : vector<32x512xf32> to vector<8x512xf32>
    %121 = tpu.concatenate %92, %98, %104, %110, %111, %112, %118, %119, %120 in 0 : vector<8x512xf32>, vector<8x512xf32>, vector<8x512xf32>, vector<8x512xf32>, vector<8x512xf32>, vector<8x512xf32>, vector<8x512xf32>, vector<8x512xf32>, vector<8x512xf32> -> vector<72x512xf32>
    %c0_60 = arith.constant 0 : index
    %c0_61 = arith.constant 0 : index
    %122 = vector.load %arg4[%c0_60, %c0_61] : memref<16x72xbf16, #tpu.memory_space<vmem>>, vector<16x72xbf16>
    %123 = arith.truncf %121 : vector<72x512xf32> to vector<72x512xbf16>
    %cst_62 = arith.constant dense<0.000000e+00> : vector<16x512xf32>
    %124 = tpu.matmul %122, %123, %cst_62 {dimension_numbers = #tpu.dot_dimension_numbers<[1], [0], [0], [1], [0, 0, 1, 1], [], []>} : vector<16x72xbf16>, vector<72x512xbf16>, vector<16x512xf32> -> vector<16x512xf32>
    %c0_63 = arith.constant 0 : index
    %c0_64 = arith.constant 0 : index
    %125 = vector.load %arg5[%c0_63, %c0_64] : memref<16x1xf32, #tpu.memory_space<vmem>>, vector<16x1xf32>
    %126 = vector.broadcast %125 : vector<16x1xf32> to vector<16x512xf32>
    %127 = arith.addf %124, %126 : vector<16x512xf32>
    %cst_65 = arith.constant 0.000000e+00 : f32
    %128 = vector.broadcast %cst_65 : f32 to vector<16x512xf32>
    %129 = arith.maximumf %127, %128 : vector<16x512xf32>
    %c9_i32_66 = arith.constant 9 : i32
    %130 = tpu.dynamic_rotate %129 by %c9_i32_66 dim 1 : vector<16x512xf32>, i32 -> vector<16x512xf32>
    %c0_67 = arith.constant 0 : index
    %c0_68 = arith.constant 0 : index
    %c0_69 = arith.constant 0 : index
    %131 = vector.load %arg12[%c0_67, %c0_68, %c0_69] : memref<9x1x512xf32, #tpu.memory_space<vmem>>, vector<1x1x512xf32>
    %132 = vector.shape_cast %131 : vector<1x1x512xf32> to vector<1x512xf32>
    %133 = vector.broadcast %132 : vector<1x512xf32> to vector<16x512xf32>
    %134 = arith.mulf %130, %133 : vector<16x512xf32>
    %c8_i32_70 = arith.constant 8 : i32
    %135 = tpu.dynamic_rotate %129 by %c8_i32_70 dim 1 : vector<16x512xf32>, i32 -> vector<16x512xf32>
    %c1_71 = arith.constant 1 : index
    %c0_72 = arith.constant 0 : index
    %c0_73 = arith.constant 0 : index
    %136 = vector.load %arg12[%c1_71, %c0_72, %c0_73] : memref<9x1x512xf32, #tpu.memory_space<vmem>>, vector<1x1x512xf32>
    %137 = vector.shape_cast %136 : vector<1x1x512xf32> to vector<1x512xf32>
    %138 = vector.broadcast %137 : vector<1x512xf32> to vector<16x512xf32>
    %139 = arith.mulf %135, %138 : vector<16x512xf32>
    %c7_i32_74 = arith.constant 7 : i32
    %140 = tpu.dynamic_rotate %129 by %c7_i32_74 dim 1 : vector<16x512xf32>, i32 -> vector<16x512xf32>
    %c2_75 = arith.constant 2 : index
    %c0_76 = arith.constant 0 : index
    %c0_77 = arith.constant 0 : index
    %141 = vector.load %arg12[%c2_75, %c0_76, %c0_77] : memref<9x1x512xf32, #tpu.memory_space<vmem>>, vector<1x1x512xf32>
    %142 = vector.shape_cast %141 : vector<1x1x512xf32> to vector<1x512xf32>
    %143 = vector.broadcast %142 : vector<1x512xf32> to vector<16x512xf32>
    %144 = arith.mulf %140, %143 : vector<16x512xf32>
    %c1_i32_78 = arith.constant 1 : i32
    %145 = tpu.dynamic_rotate %129 by %c1_i32_78 dim 1 : vector<16x512xf32>, i32 -> vector<16x512xf32>
    %c3_79 = arith.constant 3 : index
    %c0_80 = arith.constant 0 : index
    %c0_81 = arith.constant 0 : index
    %146 = vector.load %arg12[%c3_79, %c0_80, %c0_81] : memref<9x1x512xf32, #tpu.memory_space<vmem>>, vector<1x1x512xf32>
    %147 = vector.shape_cast %146 : vector<1x1x512xf32> to vector<1x512xf32>
    %148 = vector.broadcast %147 : vector<1x512xf32> to vector<16x512xf32>
    %149 = arith.mulf %145, %148 : vector<16x512xf32>
    %c511_i32_82 = arith.constant 511 : i32
    %150 = tpu.dynamic_rotate %129 by %c511_i32_82 dim 1 : vector<16x512xf32>, i32 -> vector<16x512xf32>
    %c5_83 = arith.constant 5 : index
    %c0_84 = arith.constant 0 : index
    %c0_85 = arith.constant 0 : index
    %151 = vector.load %arg12[%c5_83, %c0_84, %c0_85] : memref<9x1x512xf32, #tpu.memory_space<vmem>>, vector<1x1x512xf32>
    %152 = vector.shape_cast %151 : vector<1x1x512xf32> to vector<1x512xf32>
    %153 = vector.broadcast %152 : vector<1x512xf32> to vector<16x512xf32>
    %154 = arith.mulf %150, %153 : vector<16x512xf32>
    %c505_i32_86 = arith.constant 505 : i32
    %155 = tpu.dynamic_rotate %129 by %c505_i32_86 dim 1 : vector<16x512xf32>, i32 -> vector<16x512xf32>
    %c6_87 = arith.constant 6 : index
    %c0_88 = arith.constant 0 : index
    %c0_89 = arith.constant 0 : index
    %156 = vector.load %arg12[%c6_87, %c0_88, %c0_89] : memref<9x1x512xf32, #tpu.memory_space<vmem>>, vector<1x1x512xf32>
    %157 = vector.shape_cast %156 : vector<1x1x512xf32> to vector<1x512xf32>
    %158 = vector.broadcast %157 : vector<1x512xf32> to vector<16x512xf32>
    %159 = arith.mulf %155, %158 : vector<16x512xf32>
    %c504_i32_90 = arith.constant 504 : i32
    %160 = tpu.dynamic_rotate %129 by %c504_i32_90 dim 1 : vector<16x512xf32>, i32 -> vector<16x512xf32>
    %c7_91 = arith.constant 7 : index
    %c0_92 = arith.constant 0 : index
    %c0_93 = arith.constant 0 : index
    %161 = vector.load %arg12[%c7_91, %c0_92, %c0_93] : memref<9x1x512xf32, #tpu.memory_space<vmem>>, vector<1x1x512xf32>
    %162 = vector.shape_cast %161 : vector<1x1x512xf32> to vector<1x512xf32>
    %163 = vector.broadcast %162 : vector<1x512xf32> to vector<16x512xf32>
    %164 = arith.mulf %160, %163 : vector<16x512xf32>
    %c503_i32_94 = arith.constant 503 : i32
    %165 = tpu.dynamic_rotate %129 by %c503_i32_94 dim 1 : vector<16x512xf32>, i32 -> vector<16x512xf32>
    %c8_95 = arith.constant 8 : index
    %c0_96 = arith.constant 0 : index
    %c0_97 = arith.constant 0 : index
    %166 = vector.load %arg12[%c8_95, %c0_96, %c0_97] : memref<9x1x512xf32, #tpu.memory_space<vmem>>, vector<1x1x512xf32>
    %167 = vector.shape_cast %166 : vector<1x1x512xf32> to vector<1x512xf32>
    %168 = vector.broadcast %167 : vector<1x512xf32> to vector<16x512xf32>
    %169 = arith.mulf %165, %168 : vector<16x512xf32>
    %170 = tpu.concatenate %134, %139, %144, %149, %129, %154, %159, %164, %169 in 0 : vector<16x512xf32>, vector<16x512xf32>, vector<16x512xf32>, vector<16x512xf32>, vector<16x512xf32>, vector<16x512xf32>, vector<16x512xf32>, vector<16x512xf32>, vector<16x512xf32> -> vector<144x512xf32>
    %c0_98 = arith.constant 0 : index
    %c0_99 = arith.constant 0 : index
    %171 = vector.load %arg6[%c0_98, %c0_99] : memref<32x144xbf16, #tpu.memory_space<vmem>>, vector<32x144xbf16>
    %172 = arith.truncf %170 : vector<144x512xf32> to vector<144x512xbf16>
    %cst_100 = arith.constant dense<0.000000e+00> : vector<32x512xf32>
    %173 = tpu.matmul %171, %172, %cst_100 {dimension_numbers = #tpu.dot_dimension_numbers<[1], [0], [0], [1], [0, 0, 1, 1], [], []>} : vector<32x144xbf16>, vector<144x512xbf16>, vector<32x512xf32> -> vector<32x512xf32>
    %c0_101 = arith.constant 0 : index
    %c0_102 = arith.constant 0 : index
    %174 = vector.load %arg7[%c0_101, %c0_102] : memref<32x1xf32, #tpu.memory_space<vmem>>, vector<32x1xf32>
    %175 = vector.broadcast %174 : vector<32x1xf32> to vector<32x512xf32>
    %176 = arith.addf %173, %175 : vector<32x512xf32>
    %cst_103 = arith.constant 0.000000e+00 : f32
    %177 = vector.broadcast %cst_103 : f32 to vector<32x512xf32>
    %178 = arith.maximumf %176, %177 : vector<32x512xf32>
    %c0_104 = arith.constant 0 : index
    %c0_105 = arith.constant 0 : index
    %179 = vector.load %arg13[%c0_104, %c0_105] : memref<1x512xf32, #tpu.memory_space<vmem>>, vector<1x512xf32>
    %180 = vector.broadcast %179 : vector<1x512xf32> to vector<32x512xf32>
    %181 = arith.mulf %178, %180 : vector<32x512xf32>
    %c9_i32_106 = arith.constant 9 : i32
    %182 = tpu.dynamic_rotate %181 by %c9_i32_106 dim 1 : vector<32x512xf32>, i32 -> vector<32x512xf32>
    %c0_107 = arith.constant 0 : index
    %c0_108 = arith.constant 0 : index
    %c0_109 = arith.constant 0 : index
    %183 = vector.load %arg12[%c0_107, %c0_108, %c0_109] : memref<9x1x512xf32, #tpu.memory_space<vmem>>, vector<1x1x512xf32>
    %184 = vector.shape_cast %183 : vector<1x1x512xf32> to vector<1x512xf32>
    %185 = vector.broadcast %184 : vector<1x512xf32> to vector<32x512xf32>
    %186 = arith.mulf %182, %185 : vector<32x512xf32>
    %c8_i32_110 = arith.constant 8 : i32
    %187 = tpu.dynamic_rotate %181 by %c8_i32_110 dim 1 : vector<32x512xf32>, i32 -> vector<32x512xf32>
    %c1_111 = arith.constant 1 : index
    %c0_112 = arith.constant 0 : index
    %c0_113 = arith.constant 0 : index
    %188 = vector.load %arg12[%c1_111, %c0_112, %c0_113] : memref<9x1x512xf32, #tpu.memory_space<vmem>>, vector<1x1x512xf32>
    %189 = vector.shape_cast %188 : vector<1x1x512xf32> to vector<1x512xf32>
    %190 = vector.broadcast %189 : vector<1x512xf32> to vector<32x512xf32>
    %191 = arith.mulf %187, %190 : vector<32x512xf32>
    %c7_i32_114 = arith.constant 7 : i32
    %192 = tpu.dynamic_rotate %181 by %c7_i32_114 dim 1 : vector<32x512xf32>, i32 -> vector<32x512xf32>
    %c2_115 = arith.constant 2 : index
    %c0_116 = arith.constant 0 : index
    %c0_117 = arith.constant 0 : index
    %193 = vector.load %arg12[%c2_115, %c0_116, %c0_117] : memref<9x1x512xf32, #tpu.memory_space<vmem>>, vector<1x1x512xf32>
    %194 = vector.shape_cast %193 : vector<1x1x512xf32> to vector<1x512xf32>
    %195 = vector.broadcast %194 : vector<1x512xf32> to vector<32x512xf32>
    %196 = arith.mulf %192, %195 : vector<32x512xf32>
    %c1_i32_118 = arith.constant 1 : i32
    %197 = tpu.dynamic_rotate %181 by %c1_i32_118 dim 1 : vector<32x512xf32>, i32 -> vector<32x512xf32>
    %c3_119 = arith.constant 3 : index
    %c0_120 = arith.constant 0 : index
    %c0_121 = arith.constant 0 : index
    %198 = vector.load %arg12[%c3_119, %c0_120, %c0_121] : memref<9x1x512xf32, #tpu.memory_space<vmem>>, vector<1x1x512xf32>
    %199 = vector.shape_cast %198 : vector<1x1x512xf32> to vector<1x512xf32>
    %200 = vector.broadcast %199 : vector<1x512xf32> to vector<32x512xf32>
    %201 = arith.mulf %197, %200 : vector<32x512xf32>
    %c511_i32_122 = arith.constant 511 : i32
    %202 = tpu.dynamic_rotate %181 by %c511_i32_122 dim 1 : vector<32x512xf32>, i32 -> vector<32x512xf32>
    %c5_123 = arith.constant 5 : index
    %c0_124 = arith.constant 0 : index
    %c0_125 = arith.constant 0 : index
    %203 = vector.load %arg12[%c5_123, %c0_124, %c0_125] : memref<9x1x512xf32, #tpu.memory_space<vmem>>, vector<1x1x512xf32>
    %204 = vector.shape_cast %203 : vector<1x1x512xf32> to vector<1x512xf32>
    %205 = vector.broadcast %204 : vector<1x512xf32> to vector<32x512xf32>
    %206 = arith.mulf %202, %205 : vector<32x512xf32>
    %c505_i32_126 = arith.constant 505 : i32
    %207 = tpu.dynamic_rotate %181 by %c505_i32_126 dim 1 : vector<32x512xf32>, i32 -> vector<32x512xf32>
    %c6_127 = arith.constant 6 : index
    %c0_128 = arith.constant 0 : index
    %c0_129 = arith.constant 0 : index
    %208 = vector.load %arg12[%c6_127, %c0_128, %c0_129] : memref<9x1x512xf32, #tpu.memory_space<vmem>>, vector<1x1x512xf32>
    %209 = vector.shape_cast %208 : vector<1x1x512xf32> to vector<1x512xf32>
    %210 = vector.broadcast %209 : vector<1x512xf32> to vector<32x512xf32>
    %211 = arith.mulf %207, %210 : vector<32x512xf32>
    %c504_i32_130 = arith.constant 504 : i32
    %212 = tpu.dynamic_rotate %181 by %c504_i32_130 dim 1 : vector<32x512xf32>, i32 -> vector<32x512xf32>
    %c7_131 = arith.constant 7 : index
    %c0_132 = arith.constant 0 : index
    %c0_133 = arith.constant 0 : index
    %213 = vector.load %arg12[%c7_131, %c0_132, %c0_133] : memref<9x1x512xf32, #tpu.memory_space<vmem>>, vector<1x1x512xf32>
    %214 = vector.shape_cast %213 : vector<1x1x512xf32> to vector<1x512xf32>
    %215 = vector.broadcast %214 : vector<1x512xf32> to vector<32x512xf32>
    %216 = arith.mulf %212, %215 : vector<32x512xf32>
    %c503_i32_134 = arith.constant 503 : i32
    %217 = tpu.dynamic_rotate %181 by %c503_i32_134 dim 1 : vector<32x512xf32>, i32 -> vector<32x512xf32>
    %c8_135 = arith.constant 8 : index
    %c0_136 = arith.constant 0 : index
    %c0_137 = arith.constant 0 : index
    %218 = vector.load %arg12[%c8_135, %c0_136, %c0_137] : memref<9x1x512xf32, #tpu.memory_space<vmem>>, vector<1x1x512xf32>
    %219 = vector.shape_cast %218 : vector<1x1x512xf32> to vector<1x512xf32>
    %220 = vector.broadcast %219 : vector<1x512xf32> to vector<32x512xf32>
    %221 = arith.mulf %217, %220 : vector<32x512xf32>
    %222 = tpu.concatenate %186, %191, %196, %201, %181, %206, %211, %216, %221 in 0 : vector<32x512xf32>, vector<32x512xf32>, vector<32x512xf32>, vector<32x512xf32>, vector<32x512xf32>, vector<32x512xf32>, vector<32x512xf32>, vector<32x512xf32>, vector<32x512xf32> -> vector<288x512xf32>
    %c0_138 = arith.constant 0 : index
    %c0_139 = arith.constant 0 : index
    %223 = vector.load %arg8[%c0_138, %c0_139] : memref<16x288xbf16, #tpu.memory_space<vmem>>, vector<16x288xbf16>
    %224 = arith.truncf %222 : vector<288x512xf32> to vector<288x512xbf16>
    %cst_140 = arith.constant dense<0.000000e+00> : vector<16x512xf32>
    %225 = tpu.matmul %223, %224, %cst_140 {dimension_numbers = #tpu.dot_dimension_numbers<[1], [0], [0], [1], [0, 0, 1, 1], [], []>} : vector<16x288xbf16>, vector<288x512xbf16>, vector<16x512xf32> -> vector<16x512xf32>
    %226 = arith.addf %129, %225 : vector<16x512xf32>
    %c511_i32_141 = arith.constant 511 : i32
    %227 = tpu.dynamic_rotate %226 by %c511_i32_141 dim 1 : vector<16x512xf32>, i32 -> vector<16x512xf32>
    %c5_142 = arith.constant 5 : index
    %c0_143 = arith.constant 0 : index
    %c0_144 = arith.constant 0 : index
    %228 = vector.load %arg12[%c5_142, %c0_143, %c0_144] : memref<9x1x512xf32, #tpu.memory_space<vmem>>, vector<1x1x512xf32>
    %229 = vector.shape_cast %228 : vector<1x1x512xf32> to vector<1x512xf32>
    %230 = vector.broadcast %229 : vector<1x512xf32> to vector<16x512xf32>
    %231 = arith.mulf %227, %230 : vector<16x512xf32>
    %c504_i32_145 = arith.constant 504 : i32
    %232 = tpu.dynamic_rotate %226 by %c504_i32_145 dim 1 : vector<16x512xf32>, i32 -> vector<16x512xf32>
    %c7_146 = arith.constant 7 : index
    %c0_147 = arith.constant 0 : index
    %c0_148 = arith.constant 0 : index
    %233 = vector.load %arg12[%c7_146, %c0_147, %c0_148] : memref<9x1x512xf32, #tpu.memory_space<vmem>>, vector<1x1x512xf32>
    %234 = vector.shape_cast %233 : vector<1x1x512xf32> to vector<1x512xf32>
    %235 = vector.broadcast %234 : vector<1x512xf32> to vector<16x512xf32>
    %236 = arith.mulf %232, %235 : vector<16x512xf32>
    %c503_i32_149 = arith.constant 503 : i32
    %237 = tpu.dynamic_rotate %226 by %c503_i32_149 dim 1 : vector<16x512xf32>, i32 -> vector<16x512xf32>
    %c8_150 = arith.constant 8 : index
    %c0_151 = arith.constant 0 : index
    %c0_152 = arith.constant 0 : index
    %238 = vector.load %arg12[%c8_150, %c0_151, %c0_152] : memref<9x1x512xf32, #tpu.memory_space<vmem>>, vector<1x1x512xf32>
    %239 = vector.shape_cast %238 : vector<1x1x512xf32> to vector<1x512xf32>
    %240 = vector.broadcast %239 : vector<1x512xf32> to vector<16x512xf32>
    %241 = arith.mulf %237, %240 : vector<16x512xf32>
    %242 = tpu.concatenate %226, %231, %236, %241 in 0 : vector<16x512xf32>, vector<16x512xf32>, vector<16x512xf32>, vector<16x512xf32> -> vector<64x512xf32>
    %c0_153 = arith.constant 0 : index
    %c0_154 = arith.constant 0 : index
    %243 = vector.load %arg9[%c0_153, %c0_154] : memref<32x64xbf16, #tpu.memory_space<vmem>>, vector<32x64xbf16>
    %244 = arith.truncf %242 : vector<64x512xf32> to vector<64x512xbf16>
    %cst_155 = arith.constant dense<0.000000e+00> : vector<32x512xf32>
    %245 = tpu.matmul %243, %244, %cst_155 {dimension_numbers = #tpu.dot_dimension_numbers<[1], [0], [0], [1], [0, 0, 1, 1], [], []>} : vector<32x64xbf16>, vector<64x512xbf16>, vector<32x512xf32> -> vector<32x512xf32>
    %246 = arith.addf %86, %245 : vector<32x512xf32>
    %247 = vector.extract_strided_slice %246 {offsets = [24, 0], sizes = [8, 512], strides = [1, 1]} : vector<32x512xf32> to vector<8x512xf32>
    %c9_i32_156 = arith.constant 9 : i32
    %248 = tpu.dynamic_rotate %247 by %c9_i32_156 dim 1 : vector<8x512xf32>, i32 -> vector<8x512xf32>
    %c0_157 = arith.constant 0 : index
    %c0_158 = arith.constant 0 : index
    %c0_159 = arith.constant 0 : index
    %249 = vector.load %arg12[%c0_157, %c0_158, %c0_159] : memref<9x1x512xf32, #tpu.memory_space<vmem>>, vector<1x1x512xf32>
    %250 = vector.shape_cast %249 : vector<1x1x512xf32> to vector<1x512xf32>
    %251 = vector.broadcast %250 : vector<1x512xf32> to vector<8x512xf32>
    %252 = arith.mulf %248, %251 : vector<8x512xf32>
    %253 = vector.extract_strided_slice %246 {offsets = [16, 0], sizes = [8, 512], strides = [1, 1]} : vector<32x512xf32> to vector<8x512xf32>
    %c8_i32_160 = arith.constant 8 : i32
    %254 = tpu.dynamic_rotate %253 by %c8_i32_160 dim 1 : vector<8x512xf32>, i32 -> vector<8x512xf32>
    %c1_161 = arith.constant 1 : index
    %c0_162 = arith.constant 0 : index
    %c0_163 = arith.constant 0 : index
    %255 = vector.load %arg12[%c1_161, %c0_162, %c0_163] : memref<9x1x512xf32, #tpu.memory_space<vmem>>, vector<1x1x512xf32>
    %256 = vector.shape_cast %255 : vector<1x1x512xf32> to vector<1x512xf32>
    %257 = vector.broadcast %256 : vector<1x512xf32> to vector<8x512xf32>
    %258 = arith.mulf %254, %257 : vector<8x512xf32>
    %259 = vector.extract_strided_slice %246 {offsets = [24, 0], sizes = [8, 512], strides = [1, 1]} : vector<32x512xf32> to vector<8x512xf32>
    %c8_i32_164 = arith.constant 8 : i32
    %260 = tpu.dynamic_rotate %259 by %c8_i32_164 dim 1 : vector<8x512xf32>, i32 -> vector<8x512xf32>
    %c1_165 = arith.constant 1 : index
    %c0_166 = arith.constant 0 : index
    %c0_167 = arith.constant 0 : index
    %261 = vector.load %arg12[%c1_165, %c0_166, %c0_167] : memref<9x1x512xf32, #tpu.memory_space<vmem>>, vector<1x1x512xf32>
    %262 = vector.shape_cast %261 : vector<1x1x512xf32> to vector<1x512xf32>
    %263 = vector.broadcast %262 : vector<1x512xf32> to vector<8x512xf32>
    %264 = arith.mulf %260, %263 : vector<8x512xf32>
    %265 = vector.extract_strided_slice %246 {offsets = [16, 0], sizes = [8, 512], strides = [1, 1]} : vector<32x512xf32> to vector<8x512xf32>
    %c7_i32_168 = arith.constant 7 : i32
    %266 = tpu.dynamic_rotate %265 by %c7_i32_168 dim 1 : vector<8x512xf32>, i32 -> vector<8x512xf32>
    %c2_169 = arith.constant 2 : index
    %c0_170 = arith.constant 0 : index
    %c0_171 = arith.constant 0 : index
    %267 = vector.load %arg12[%c2_169, %c0_170, %c0_171] : memref<9x1x512xf32, #tpu.memory_space<vmem>>, vector<1x1x512xf32>
    %268 = vector.shape_cast %267 : vector<1x1x512xf32> to vector<1x512xf32>
    %269 = vector.broadcast %268 : vector<1x512xf32> to vector<8x512xf32>
    %270 = arith.mulf %266, %269 : vector<8x512xf32>
    %271 = vector.extract_strided_slice %246 {offsets = [8, 0], sizes = [8, 512], strides = [1, 1]} : vector<32x512xf32> to vector<8x512xf32>
    %c1_i32_172 = arith.constant 1 : i32
    %272 = tpu.dynamic_rotate %271 by %c1_i32_172 dim 1 : vector<8x512xf32>, i32 -> vector<8x512xf32>
    %c3_173 = arith.constant 3 : index
    %c0_174 = arith.constant 0 : index
    %c0_175 = arith.constant 0 : index
    %273 = vector.load %arg12[%c3_173, %c0_174, %c0_175] : memref<9x1x512xf32, #tpu.memory_space<vmem>>, vector<1x1x512xf32>
    %274 = vector.shape_cast %273 : vector<1x1x512xf32> to vector<1x512xf32>
    %275 = vector.broadcast %274 : vector<1x512xf32> to vector<8x512xf32>
    %276 = arith.mulf %272, %275 : vector<8x512xf32>
    %277 = vector.extract_strided_slice %246 {offsets = [0, 0], sizes = [8, 512], strides = [1, 1]} : vector<32x512xf32> to vector<8x512xf32>
    %278 = vector.extract_strided_slice %246 {offsets = [8, 0], sizes = [8, 512], strides = [1, 1]} : vector<32x512xf32> to vector<8x512xf32>
    %279 = vector.extract_strided_slice %246 {offsets = [0, 0], sizes = [8, 512], strides = [1, 1]} : vector<32x512xf32> to vector<8x512xf32>
    %c511_i32_176 = arith.constant 511 : i32
    %280 = tpu.dynamic_rotate %279 by %c511_i32_176 dim 1 : vector<8x512xf32>, i32 -> vector<8x512xf32>
    %c5_177 = arith.constant 5 : index
    %c0_178 = arith.constant 0 : index
    %c0_179 = arith.constant 0 : index
    %281 = vector.load %arg12[%c5_177, %c0_178, %c0_179] : memref<9x1x512xf32, #tpu.memory_space<vmem>>, vector<1x1x512xf32>
    %282 = vector.shape_cast %281 : vector<1x1x512xf32> to vector<1x512xf32>
    %283 = vector.broadcast %282 : vector<1x512xf32> to vector<8x512xf32>
    %284 = arith.mulf %280, %283 : vector<8x512xf32>
    %285 = vector.extract_strided_slice %246 {offsets = [24, 0], sizes = [8, 512], strides = [1, 1]} : vector<32x512xf32> to vector<8x512xf32>
    %c1_i32_180 = arith.constant 1 : i32
    %286 = tpu.dynamic_rotate %285 by %c1_i32_180 dim 1 : vector<8x512xf32>, i32 -> vector<8x512xf32>
    %c3_181 = arith.constant 3 : index
    %c0_182 = arith.constant 0 : index
    %c0_183 = arith.constant 0 : index
    %287 = vector.load %arg12[%c3_181, %c0_182, %c0_183] : memref<9x1x512xf32, #tpu.memory_space<vmem>>, vector<1x1x512xf32>
    %288 = vector.shape_cast %287 : vector<1x1x512xf32> to vector<1x512xf32>
    %289 = vector.broadcast %288 : vector<1x512xf32> to vector<8x512xf32>
    %290 = arith.mulf %286, %289 : vector<8x512xf32>
    %291 = vector.extract_strided_slice %246 {offsets = [16, 0], sizes = [8, 512], strides = [1, 1]} : vector<32x512xf32> to vector<8x512xf32>
    %292 = vector.extract_strided_slice %246 {offsets = [24, 0], sizes = [8, 512], strides = [1, 1]} : vector<32x512xf32> to vector<8x512xf32>
    %293 = vector.extract_strided_slice %246 {offsets = [16, 0], sizes = [8, 512], strides = [1, 1]} : vector<32x512xf32> to vector<8x512xf32>
    %c511_i32_184 = arith.constant 511 : i32
    %294 = tpu.dynamic_rotate %293 by %c511_i32_184 dim 1 : vector<8x512xf32>, i32 -> vector<8x512xf32>
    %c5_185 = arith.constant 5 : index
    %c0_186 = arith.constant 0 : index
    %c0_187 = arith.constant 0 : index
    %295 = vector.load %arg12[%c5_185, %c0_186, %c0_187] : memref<9x1x512xf32, #tpu.memory_space<vmem>>, vector<1x1x512xf32>
    %296 = vector.shape_cast %295 : vector<1x1x512xf32> to vector<1x512xf32>
    %297 = vector.broadcast %296 : vector<1x512xf32> to vector<8x512xf32>
    %298 = arith.mulf %294, %297 : vector<8x512xf32>
    %299 = vector.extract_strided_slice %246 {offsets = [8, 0], sizes = [8, 512], strides = [1, 1]} : vector<32x512xf32> to vector<8x512xf32>
    %c505_i32_188 = arith.constant 505 : i32
    %300 = tpu.dynamic_rotate %299 by %c505_i32_188 dim 1 : vector<8x512xf32>, i32 -> vector<8x512xf32>
    %c6_189 = arith.constant 6 : index
    %c0_190 = arith.constant 0 : index
    %c0_191 = arith.constant 0 : index
    %301 = vector.load %arg12[%c6_189, %c0_190, %c0_191] : memref<9x1x512xf32, #tpu.memory_space<vmem>>, vector<1x1x512xf32>
    %302 = vector.shape_cast %301 : vector<1x1x512xf32> to vector<1x512xf32>
    %303 = vector.broadcast %302 : vector<1x512xf32> to vector<8x512xf32>
    %304 = arith.mulf %300, %303 : vector<8x512xf32>
    %305 = vector.extract_strided_slice %246 {offsets = [0, 0], sizes = [8, 512], strides = [1, 1]} : vector<32x512xf32> to vector<8x512xf32>
    %c504_i32_192 = arith.constant 504 : i32
    %306 = tpu.dynamic_rotate %305 by %c504_i32_192 dim 1 : vector<8x512xf32>, i32 -> vector<8x512xf32>
    %c7_193 = arith.constant 7 : index
    %c0_194 = arith.constant 0 : index
    %c0_195 = arith.constant 0 : index
    %307 = vector.load %arg12[%c7_193, %c0_194, %c0_195] : memref<9x1x512xf32, #tpu.memory_space<vmem>>, vector<1x1x512xf32>
    %308 = vector.shape_cast %307 : vector<1x1x512xf32> to vector<1x512xf32>
    %309 = vector.broadcast %308 : vector<1x512xf32> to vector<8x512xf32>
    %310 = arith.mulf %306, %309 : vector<8x512xf32>
    %311 = vector.extract_strided_slice %246 {offsets = [8, 0], sizes = [8, 512], strides = [1, 1]} : vector<32x512xf32> to vector<8x512xf32>
    %c504_i32_196 = arith.constant 504 : i32
    %312 = tpu.dynamic_rotate %311 by %c504_i32_196 dim 1 : vector<8x512xf32>, i32 -> vector<8x512xf32>
    %c7_197 = arith.constant 7 : index
    %c0_198 = arith.constant 0 : index
    %c0_199 = arith.constant 0 : index
    %313 = vector.load %arg12[%c7_197, %c0_198, %c0_199] : memref<9x1x512xf32, #tpu.memory_space<vmem>>, vector<1x1x512xf32>
    %314 = vector.shape_cast %313 : vector<1x1x512xf32> to vector<1x512xf32>
    %315 = vector.broadcast %314 : vector<1x512xf32> to vector<8x512xf32>
    %316 = arith.mulf %312, %315 : vector<8x512xf32>
    %317 = vector.extract_strided_slice %246 {offsets = [0, 0], sizes = [8, 512], strides = [1, 1]} : vector<32x512xf32> to vector<8x512xf32>
    %c503_i32_200 = arith.constant 503 : i32
    %318 = tpu.dynamic_rotate %317 by %c503_i32_200 dim 1 : vector<8x512xf32>, i32 -> vector<8x512xf32>
    %c8_201 = arith.constant 8 : index
    %c0_202 = arith.constant 0 : index
    %c0_203 = arith.constant 0 : index
    %319 = vector.load %arg12[%c8_201, %c0_202, %c0_203] : memref<9x1x512xf32, #tpu.memory_space<vmem>>, vector<1x1x512xf32>
    %320 = vector.shape_cast %319 : vector<1x1x512xf32> to vector<1x512xf32>
    %321 = vector.broadcast %320 : vector<1x512xf32> to vector<8x512xf32>
    %322 = arith.mulf %318, %321 : vector<8x512xf32>
    %323 = tpu.concatenate %252, %258, %264, %270, %276, %277, %278, %284, %290, %291, %292, %298, %304, %310, %316, %322 in 0 : vector<8x512xf32>, vector<8x512xf32>, vector<8x512xf32>, vector<8x512xf32>, vector<8x512xf32>, vector<8x512xf32>, vector<8x512xf32>, vector<8x512xf32>, vector<8x512xf32>, vector<8x512xf32>, vector<8x512xf32>, vector<8x512xf32>, vector<8x512xf32>, vector<8x512xf32>, vector<8x512xf32>, vector<8x512xf32> -> vector<128x512xf32>
    %c0_204 = arith.constant 0 : index
    %c0_205 = arith.constant 0 : index
    %324 = vector.load %arg10[%c0_204, %c0_205] : memref<4x128xbf16, #tpu.memory_space<vmem>>, vector<4x128xbf16>
    %325 = arith.truncf %323 : vector<128x512xf32> to vector<128x512xbf16>
    %cst_206 = arith.constant dense<0.000000e+00> : vector<4x512xf32>
    %326 = tpu.matmul %324, %325, %cst_206 {dimension_numbers = #tpu.dot_dimension_numbers<[1], [0], [0], [1], [0, 0, 1, 1], [], []>} : vector<4x128xbf16>, vector<128x512xbf16>, vector<4x512xf32> -> vector<4x512xf32>
    %c0_207 = arith.constant 0 : index
    %c0_208 = arith.constant 0 : index
    %327 = vector.load %arg11[%c0_207, %c0_208] : memref<4x1xf32, #tpu.memory_space<vmem>>, vector<4x1xf32>
    %328 = vector.broadcast %327 : vector<4x1xf32> to vector<4x512xf32>
    %329 = arith.addf %326, %328 : vector<4x512xf32>
    %c0_209 = arith.constant 0 : index
    %c0_210 = arith.constant 0 : index
    %c0_211 = arith.constant 0 : index
    %330 = vector.load %arg14[%c0_209, %c0_210, %c0_211] : memref<1x4x512xf32, #tpu.memory_space<vmem>>, vector<1x4x512xf32>
    %331 = vector.shape_cast %330 : vector<1x4x512xf32> to vector<4x512xf32>
    %332 = vector.shape_cast %329 : vector<4x512xf32> to vector<1x4x512xf32>
    tpu.vector_store %arg14[%c0_209, %c0_210, %c0_211], %332 {strides = array<i32>} : memref<1x4x512xf32, #tpu.memory_space<vmem>>, vector<1x4x512xf32>,
    return
  }
  func.func @transform_0(%arg0: i32) -> (i32, i32, i32) {
    %c0_i32 = arith.constant 0 : i32
    %c0_i32_0 = arith.constant 0 : i32
    %c0_i32_1 = arith.constant 0 : i32
    return %arg0, %c0_i32, %c0_i32_0 : i32, i32, i32
  }
  func.func @transform_1(%arg0: i32) -> (i32, i32) {
    %c0_i32 = arith.constant 0 : i32
    %c0_i32_0 = arith.constant 0 : i32
    %c0_i32_1 = arith.constant 0 : i32
    return %c0_i32, %c0_i32_0 : i32, i32
  }
  func.func @transform_2(%arg0: i32) -> (i32, i32) {
    %c0_i32 = arith.constant 0 : i32
    %c0_i32_0 = arith.constant 0 : i32
    %c0_i32_1 = arith.constant 0 : i32
    return %c0_i32, %c0_i32_0 : i32, i32
  }
  func.func @transform_3(%arg0: i32) -> (i32, i32) {
    %c0_i32 = arith.constant 0 : i32
    %c0_i32_0 = arith.constant 0 : i32
    %c0_i32_1 = arith.constant 0 : i32
    return %c0_i32, %c0_i32_0 : i32, i32
  }
  func.func @transform_4(%arg0: i32) -> (i32, i32) {
    %c0_i32 = arith.constant 0 : i32
    %c0_i32_0 = arith.constant 0 : i32
    %c0_i32_1 = arith.constant 0 : i32
    return %c0_i32, %c0_i32_0 : i32, i32
  }
  func.func @transform_5(%arg0: i32) -> (i32, i32) {
    %c0_i32 = arith.constant 0 : i32
    %c0_i32_0 = arith.constant 0 : i32
    %c0_i32_1 = arith.constant 0 : i32
    return %c0_i32, %c0_i32_0 : i32, i32
  }
  func.func @transform_6(%arg0: i32) -> (i32, i32) {
    %c0_i32 = arith.constant 0 : i32
    %c0_i32_0 = arith.constant 0 : i32
    %c0_i32_1 = arith.constant 0 : i32
    return %c0_i32, %c0_i32_0 : i32, i32
  }
  func.func @transform_7(%arg0: i32) -> (i32, i32) {
    %c0_i32 = arith.constant 0 : i32
    %c0_i32_0 = arith.constant 0 : i32
    %c0_i32_1 = arith.constant 0 : i32
    return %c0_i32, %c0_i32_0 : i32, i32
  }
  func.func @transform_8(%arg0: i32) -> (i32, i32) {
    %c0_i32 = arith.constant 0 : i32
    %c0_i32_0 = arith.constant 0 : i32
    %c0_i32_1 = arith.constant 0 : i32
    return %c0_i32, %c0_i32_0 : i32, i32
  }
  func.func @transform_9(%arg0: i32) -> (i32, i32) {
    %c0_i32 = arith.constant 0 : i32
    %c0_i32_0 = arith.constant 0 : i32
    %c0_i32_1 = arith.constant 0 : i32
    return %c0_i32, %c0_i32_0 : i32, i32
  }
  func.func @transform_10(%arg0: i32) -> (i32, i32) {
    %c0_i32 = arith.constant 0 : i32
    %c0_i32_0 = arith.constant 0 : i32
    %c0_i32_1 = arith.constant 0 : i32
    return %c0_i32, %c0_i32_0 : i32, i32
  }
  func.func @transform_11(%arg0: i32) -> (i32, i32, i32) {
    %c0_i32 = arith.constant 0 : i32
    %c0_i32_0 = arith.constant 0 : i32
    %c0_i32_1 = arith.constant 0 : i32
    %c0_i32_2 = arith.constant 0 : i32
    return %c0_i32, %c0_i32_0, %c0_i32_1 : i32, i32, i32
  }
  func.func @transform_12(%arg0: i32) -> (i32, i32) {
    %c0_i32 = arith.constant 0 : i32
    %c0_i32_0 = arith.constant 0 : i32
    %c0_i32_1 = arith.constant 0 : i32
    return %c0_i32, %c0_i32_0 : i32, i32
  }
  func.func @transform_13(%arg0: i32) -> (i32, i32, i32) {
    %c0_i32 = arith.constant 0 : i32
    %c0_i32_0 = arith.constant 0 : i32
    %c0_i32_1 = arith.constant 0 : i32
    return %arg0, %c0_i32, %c0_i32_0 : i32, i32, i32
  }
}

</mosaic_0001>

<llo_original>
// kernel: corrnet_forward.1
$region0: #{corrnet_forward.1}
  #allocation0 [shape = 'u32[]', space=smem, size = 0x4, offset = 0x4, fixed_abs, tag = 'smem constant byte address 0x4 - core index']
  #allocation1 [shape = 'u32[72,128]{1,0:T(1,128)}', space=vmem, size = 0x9000, scoped, tag = 'internal scratch']
  %s0 = inlined_call_operand.vmem [shape: f32[2,32,512], index: 0, kind: input, shape index: {}]
  %s1 = inlined_call_operand.vmem [shape: bf16[32,128], index: 1, kind: input, shape index: {}]
  %s2 = inlined_call_operand.vmem [shape: f32[32,1], index: 2, kind: input, shape index: {}]
  %s3 = inlined_call_operand.vmem [shape: bf16[16,72], index: 3, kind: input, shape index: {}]
  %s4 = inlined_call_operand.vmem [shape: f32[16,1], index: 4, kind: input, shape index: {}]
  %s5 = inlined_call_operand.vmem [shape: bf16[32,144], index: 5, kind: input, shape index: {}]
  %s6 = inlined_call_operand.vmem [shape: f32[32,1], index: 6, kind: input, shape index: {}]
  %s7 = inlined_call_operand.vmem [shape: bf16[16,288], index: 7, kind: input, shape index: {}]
  %s8 = inlined_call_operand.vmem [shape: bf16[32,64], index: 8, kind: input, shape index: {}]
  %s9 = inlined_call_operand.vmem [shape: bf16[4,128], index: 9, kind: input, shape index: {}]
  %s10 = inlined_call_operand.vmem [shape: f32[4,1], index: 10, kind: input, shape index: {}]
  %s11 = inlined_call_operand.vmem [shape: f32[9,1,512], index: 11, kind: input, shape index: {}]
  %s12 = inlined_call_operand.vmem [shape: f32[1,512], index: 12, kind: input, shape index: {}]
  %s13 = inlined_call_operand.vmem [shape: f32[2,4,512], index: 13, kind: output, shape index: {}]
  %s14 = sld [smem:[#allocation0]]
  $region85: #{corrnet_forward.1} parent=0
    _
  %s16 = ssub.s32 1, %s14
  %s17 = scalar_select 0, %s16, %s14
  loop: start=0, step=1, limit=4
  $region2: #{corrnet_forward.1} parent=0 // loop_pre_header
    _
  $region3: #{corrnet_forward.1} parent=0 // loop_header
    %s19 = sphi 0, %s23
    %p20 = scmp.ge.s32.totalorder %s19, 4
    %s29 = sphi 0, %s31
    %s32 = sphi 0, %s29
    %s33 = sphi 0, %s32
    %s49 = sphi 0, %s33
    %s53 = sphi 0, %s53
    %s55 = sphi 0, %s53
    %s56 = sphi 0, %s55
    %s70 = sphi 0, %s56
    %s74 = sphi 0, %s74
    %s76 = sphi 0, %s74
    %s77 = sphi 0, %s76
    %s91 = sphi 0, %s77
    %s95 = sphi 0, %s95
    %s97 = sphi 0, %s95
    %s98 = sphi 0, %s97
    %s112 = sphi 0, %s98
    %s116 = sphi 0, %s116
    %s118 = sphi 0, %s116
    %s119 = sphi 0, %s118
    %s133 = sphi 0, %s119
    %s137 = sphi 0, %s137
    %s139 = sphi 0, %s137
    %s140 = sphi 0, %s139
    %s154 = sphi 0, %s140
    %s158 = sphi 0, %s158
    %s160 = sphi 0, %s158
    %s161 = sphi 0, %s160
    %s175 = sphi 0, %s161
    %s179 = sphi 0, %s179
    %s181 = sphi 0, %s179
    %s182 = sphi 0, %s181
    %s196 = sphi 0, %s182
    %s200 = sphi 0, %s200
    %s202 = sphi 0, %s200
    %s203 = sphi 0, %s202
    %s217 = sphi 0, %s203
    %s221 = sphi 0, %s221
    %s223 = sphi 0, %s221
    %s224 = sphi 0, %s223
    %s238 = sphi 0, %s224
    %s242 = sphi 0, %s242
    %s244 = sphi 0, %s242
    %s245 = sphi 0, %s244
    %s259 = sphi 0, %s245
    %s263 = sphi 0, %s263
    %s265 = sphi 0, %s263
    %s266 = sphi 0, %s265
    %s280 = sphi 0, %s266
    %s284 = sphi 0, %s284
    %s286 = sphi 0, %s284
    %s287 = sphi 0, %s286
    %s301 = sphi 0, %s287
    %s307 = sphi 0, %s309
    %s310 = sphi 0, %s307
    %s311 = sphi 0, %s310
    %s327 = sphi 0, %s311
  $region4: #{corrnet_forward.1} parent=0 // loop_header_branch
    %22 = sbr.rel (%p20) target = $region8
  $region5: #{corrnet_forward.1} parent=0 // loop_body
    %s24 = ssub.s32 %s19, 1
    %s25 = ssub.s32 %s19, 2
    %s26 = sadd.s32 %s19, 1
    %s27 = ssub.s32 %s19, %s26
    %p28 = scmp.eq.s32.totalorder %s27, 0
    %s30 = sadd.s32 %s29, 1
    %s31 = scalar_select %p28, %s29, %s30
    %p34 = pneg %p28
    %p35 = scmp.eq.s32.totalorder %s19, 1
    %p36 = por %p34, %p35
    %p37 = scmp.ne.s32.totalorder %s29, %s32
    %p38 = scmp.eq.s32.totalorder %s19, 0
    %p39 = por %p37, %p38
    %p40 = scmp.ne.s32.totalorder %s29, %s32
    %p41 = scmp.eq.s32.totalorder %s24, 1
    %p42 = por %p40, %p41
    %p43 = scmp.ne.s32.totalorder %s32, %s33
    %p44 = scmp.eq.s32.totalorder %s24, 0
    %p45 = por %p43, %p44
    %p46 = scmp.ne.s32.totalorder %s32, %s33
    %p47 = scmp.eq.s32.totalorder %s25, 1
    %p48 = por %p46, %p47
    %p50 = scmp.ne.s32.totalorder %s33, %s49
    %p51 = scmp.eq.s32.totalorder %s25, 0
    %p52 = por %p50, %p51
    %s54 = sadd.s32 %s53, 1
    %p57 = scmp.eq.s32.totalorder %s19, 1
    %p58 = scmp.ne.s32.totalorder %s53, %s55
    %p59 = scmp.eq.s32.totalorder %s19, 0
    %p60 = por %p58, %p59
    %p61 = scmp.ne.s32.totalorder %s53, %s55
    %p62 = scmp.eq.s32.totalorder %s24, 1
    %p63 = por %p61, %p62
    %p64 = scmp.ne.s32.totalorder %s55, %s56
    %p65 = scmp.eq.s32.totalorder %s24, 0
    %p66 = por %p64, %p65
    %p67 = scmp.ne.s32.totalorder %s55, %s56
    %p68 = scmp.eq.s32.totalorder %s25, 1
    %p69 = por %p67, %p68
    %p71 = scmp.ne.s32.totalorder %s56, %s70
    %p72 = scmp.eq.s32.totalorder %s25, 0
    %p73 = por %p71, %p72
    %s75 = sadd.s32 %s74, 1
    %p78 = scmp.eq.s32.totalorder %s19, 1
    %p79 = scmp.ne.s32.totalorder %s74, %s76
    %p80 = scmp.eq.s32.totalorder %s19, 0
    %p81 = por %p79, %p80
    %p82 = scmp.ne.s32.totalorder %s74, %s76
    %p83 = scmp.eq.s32.totalorder %s24, 1
    %p84 = por %p82, %p83
    %p85 = scmp.ne.s32.totalorder %s76, %s77
    %p86 = scmp.eq.s32.totalorder %s24, 0
    %p87 = por %p85, %p86
    %p88 = scmp.ne.s32.totalorder %s76, %s77
    %p89 = scmp.eq.s32.totalorder %s25, 1
    %p90 = por %p88, %p89
    %p92 = scmp.ne.s32.totalorder %s77, %s91
    %p93 = scmp.eq.s32.totalorder %s25, 0
    %p94 = por %p92, %p93
    %s96 = sadd.s32 %s95, 1
    %p99 = scmp.eq.s32.totalorder %s19, 1
    %p100 = scmp.ne.s32.totalorder %s95, %s97
    %p101 = scmp.eq.s32.totalorder %s19, 0
    %p102 = por %p100, %p101
    %p103 = scmp.ne.s32.totalorder %s95, %s97
    %p104 = scmp.eq.s32.totalorder %s24, 1
    %p105 = por %p103, %p104
    %p106 = scmp.ne.s32.totalorder %s97, %s98
    %p107 = scmp.eq.s32.totalorder %s24, 0
    %p108 = por %p106, %p107
    %p109 = scmp.ne.s32.totalorder %s97, %s98
    %p110 = scmp.eq.s32.totalorder %s25, 1
    %p111 = por %p109, %p110
    %p113 = scmp.ne.s32.totalorder %s98, %s112
    %p114 = scmp.eq.s32.totalorder %s25, 0
    %p115 = por %p113, %p114
    %s117 = sadd.s32 %s116, 1
    %p120 = scmp.eq.s32.totalorder %s19, 1
    %p121 = scmp.ne.s32.totalorder %s116, %s118
    %p122 = scmp.eq.s32.totalorder %s19, 0
    %p123 = por %p121, %p122
    %p124 = scmp.ne.s32.totalorder %s116, %s118
    %p125 = scmp.eq.s32.totalorder %s24, 1
    %p126 = por %p124, %p125
    %p127 = scmp.ne.s32.totalorder %s118, %s119
    %p128 = scmp.eq.s32.totalorder %s24, 0
    %p129 = por %p127, %p128
    %p130 = scmp.ne.s32.totalorder %s118, %s119
    %p131 = scmp.eq.s32.totalorder %s25, 1
    %p132 = por %p130, %p131
    %p134 = scmp.ne.s32.totalorder %s119, %s133
    %p135 = scmp.eq.s32.totalorder %s25, 0
    %p136 = por %p134, %p135
    %s138 = sadd.s32 %s137, 1
    %p141 = scmp.eq.s32.totalorder %s19, 1
    %p142 = scmp.ne.s32.totalorder %s137, %s139
    %p143 = scmp.eq.s32.totalorder %s19, 0
    %p144 = por %p142, %p143
    %p145 = scmp.ne.s32.totalorder %s137, %s139
    %p146 = scmp.eq.s32.totalorder %s24, 1
    %p147 = por %p145, %p146
    %p148 = scmp.ne.s32.totalorder %s139, %s140
    %p149 = scmp.eq.s32.totalorder %s24, 0
    %p150 = por %p148, %p149
    %p151 = scmp.ne.s32.totalorder %s139, %s140
    %p152 = scmp.eq.s32.totalorder %s25, 1
    %p153 = por %p151, %p152
    %p155 = scmp.ne.s32.totalorder %s140, %s154
    %p156 = scmp.eq.s32.totalorder %s25, 0
    %p157 = por %p155, %p156
    %s159 = sadd.s32 %s158, 1
    %p162 = scmp.eq.s32.totalorder %s19, 1
    %p163 = scmp.ne.s32.totalorder %s158, %s160
    %p164 = scmp.eq.s32.totalorder %s19, 0
    %p165 = por %p163, %p164
    %p166 = scmp.ne.s32.totalorder %s158, %s160
    %p167 = scmp.eq.s32.totalorder %s24, 1
    %p168 = por %p166, %p167
    %p169 = scmp.ne.s32.totalorder %s160, %s161
    %p170 = scmp.eq.s32.totalorder %s24, 0
    %p171 = por %p169, %p170
    %p172 = scmp.ne.s32.totalorder %s160, %s161
    %p173 = scmp.eq.s32.totalorder %s25, 1
    %p174 = por %p172, %p173
    %p176 = scmp.ne.s32.totalorder %s161, %s175
    %p177 = scmp.eq.s32.totalorder %s25, 0
    %p178 = por %p176, %p177
    %s180 = sadd.s32 %s179, 1
    %p183 = scmp.eq.s32.totalorder %s19, 1
    %p184 = scmp.ne.s32.totalorder %s179, %s181
    %p185 = scmp.eq.s32.totalorder %s19, 0
    %p186 = por %p184, %p185
    %p187 = scmp.ne.s32.totalorder %s179, %s181
    %p188 = scmp.eq.s32.totalorder %s24, 1
    %p189 = por %p187, %p188
    %p190 = scmp.ne.s32.totalorder %s181, %s182
    %p191 = scmp.eq.s32.totalorder %s24, 0
    %p192 = por %p190, %p191
    %p193 = scmp.ne.s32.totalorder %s181, %s182
    %p194 = scmp.eq.s32.totalorder %s25, 1
    %p195 = por %p193, %p194
    %p197 = scmp.ne.s32.totalorder %s182, %s196
    %p198 = scmp.eq.s32.totalorder %s25, 0
    %p199 = por %p197, %p198
    %s201 = sadd.s32 %s200, 1
    %p204 = scmp.eq.s32.totalorder %s19, 1
    %p205 = scmp.ne.s32.totalorder %s200, %s202
    %p206 = scmp.eq.s32.totalorder %s19, 0
    %p207 = por %p205, %p206
    %p208 = scmp.ne.s32.totalorder %s200, %s202
    %p209 = scmp.eq.s32.totalorder %s24, 1
    %p210 = por %p208, %p209
    %p211 = scmp.ne.s32.totalorder %s202, %s203
    %p212 = scmp.eq.s32.totalorder %s24, 0
    %p213 = por %p211, %p212
    %p214 = scmp.ne.s32.totalorder %s202, %s203
    %p215 = scmp.eq.s32.totalorder %s25, 1
    %p216 = por %p214, %p215
    %p218 = scmp.ne.s32.totalorder %s203, %s217
    %p219 = scmp.eq.s32.totalorder %s25, 0
    %p220 = por %p218, %p219
    %s222 = sadd.s32 %s221, 1
    %p225 = scmp.eq.s32.totalorder %s19, 1
    %p226 = scmp.ne.s32.totalorder %s221, %s223
    %p227 = scmp.eq.s32.totalorder %s19, 0
    %p228 = por %p226, %p227
    %p229 = scmp.ne.s32.totalorder %s221, %s223
    %p230 = scmp.eq.s32.totalorder %s24, 1
    %p231 = por %p229, %p230
    %p232 = scmp.ne.s32.totalorder %s223, %s224
    %p233 = scmp.eq.s32.totalorder %s24, 0
    %p234 = por %p232, %p233
    %p235 = scmp.ne.s32.totalorder %s223, %s224
    %p236 = scmp.eq.s32.totalorder %s25, 1
    %p237 = por %p235, %p236
    %p239 = scmp.ne.s32.totalorder %s224, %s238
    %p240 = scmp.eq.s32.totalorder %s25, 0
    %p241 = por %p239, %p240
    %s243 = sadd.s32 %s242, 1
    %p246 = scmp.eq.s32.totalorder %s19, 1
    %p247 = scmp.ne.s32.totalorder %s242, %s244
    %p248 = scmp.eq.s32.totalorder %s19, 0
    %p249 = por %p247, %p248
    %p250 = scmp.ne.s32.totalorder %s242, %s244
    %p251 = scmp.eq.s32.totalorder %s24, 1
    %p252 = por %p250, %p251
    %p253 = scmp.ne.s32.totalorder %s244, %s245
    %p254 = scmp.eq.s32.totalorder %s24, 0
    %p255 = por %p253, %p254
    %p256 = scmp.ne.s32.totalorder %s244, %s245
    %p257 = scmp.eq.s32.totalorder %s25, 1
    %p258 = por %p256, %p257
    %p260 = scmp.ne.s32.totalorder %s245, %s259
    %p261 = scmp.eq.s32.totalorder %s25, 0
    %p262 = por %p260, %p261
    %s264 = sadd.s32 %s263, 1
    %p267 = scmp.eq.s32.totalorder %s19, 1
    %p268 = scmp.ne.s32.totalorder %s263, %s265
    %p269 = scmp.eq.s32.totalorder %s19, 0
    %p270 = por %p268, %p269
    %p271 = scmp.ne.s32.totalorder %s263, %s265
    %p272 = scmp.eq.s32.totalorder %s24, 1
    %p273 = por %p271, %p272
    %p274 = scmp.ne.s32.totalorder %s265, %s266
    %p275 = scmp.eq.s32.totalorder %s24, 0
    %p276 = por %p274, %p275
    %p277 = scmp.ne.s32.totalorder %s265, %s266
    %p278 = scmp.eq.s32.totalorder %s25, 1
    %p279 = por %p277, %p278
    %p281 = scmp.ne.s32.totalorder %s266, %s280
    %p282 = scmp.eq.s32.totalorder %s25, 0
    %p283 = por %p281, %p282
    %s285 = sadd.s32 %s284, 1
    %p288 = scmp.eq.s32.totalorder %s19, 1
    %p289 = scmp.ne.s32.totalorder %s284, %s286
    %p290 = scmp.eq.s32.totalorder %s19, 0
    %p291 = por %p289, %p290
    %p292 = scmp.ne.s32.totalorder %s284, %s286
    %p293 = scmp.eq.s32.totalorder %s24, 1
    %p294 = por %p292, %p293
    %p295 = scmp.ne.s32.totalorder %s286, %s287
    %p296 = scmp.eq.s32.totalorder %s24, 0
    %p297 = por %p295, %p296
    %p298 = scmp.ne.s32.totalorder %s286, %s287
    %p299 = scmp.eq.s32.totalorder %s25, 1
    %p300 = por %p298, %p299
    %p302 = scmp.ne.s32.totalorder %s287, %s301
    %p303 = scmp.eq.s32.totalorder %s25, 0
    %p304 = por %p302, %p303
    %s305 = ssub.s32 %s19, %s26
    %p306 = scmp.eq.s32.totalorder %s305, 0
    %s308 = sadd.s32 %s307, 1
    %s309 = scalar_select %p306, %s307, %s308
    %p312 = pneg %p306
    %p313 = scmp.eq.s32.totalorder %s19, 1
    %p314 = por %p312, %p313
    %p315 = scmp.ne.s32.totalorder %s307, %s310
    %p316 = scmp.eq.s32.totalorder %s19, 0
    %p317 = por %p315, %p316
    %p318 = scmp.ne.s32.totalorder %s307, %s310
    %p319 = scmp.eq.s32.totalorder %s24, 1
    %p320 = por %p318, %p319
    %p321 = scmp.ne.s32.totalorder %s310, %s311
    %p322 = scmp.eq.s32.totalorder %s24, 0
    %p323 = por %p321, %p322
    %p324 = scmp.ne.s32.totalorder %s310, %s311
    %p325 = scmp.eq.s32.totalorder %s25, 1
    %p326 = por %p324, %p325
    %p328 = scmp.ne.s32.totalorder %s311, %s327
    %p329 = scmp.eq.s32.totalorder %s25, 0
    %p330 = por %p328, %p329
    %p331 = scmp.le.s32.totalorder 1, %s19
    %p332 = scmp.lt.s32.totalorder %s19, 3
    %p333 = pnand %p331, %p332
    %p334 = pneg %p333
    // Predicated region
    $region9: #{corrnet_forward.1} parent=5 // pred_check
      _
    $region10: #{corrnet_forward.1} parent=5 // pred_check_branch
      %336 = sbr.rel (%p333) target = $region12
    $region11: #{corrnet_forward.1} parent=5 // pred_region
      %s337 = ssub.s32 %s19, 1
      // Predicated region
      $region13: #{corrnet_forward.1} parent=11 // pred_check
        %p338 = pneg %p66
      $region14: #{corrnet_forward.1} parent=11 // pred_check_branch
        %340 = sbr.rel (%p338) target = $region16
      $region15: #{corrnet_forward.1} parent=11 // pred_region
        _
      $region16: #{corrnet_forward.1} parent=11 // pred_fallthru
        _
      // Predicated region
      $region17: #{corrnet_forward.1} parent=11 // pred_check
        %p341 = pneg %p87
      $region18: #{corrnet_forward.1} parent=11 // pred_check_branch
        %343 = sbr.rel (%p341) target = $region20
      $region19: #{corrnet_forward.1} parent=11 // pred_region
        _
      $region20: #{corrnet_forward.1} parent=11 // pred_fallthru
        _
      // Predicated region
      $region21: #{corrnet_forward.1} parent=11 // pred_check
        %p344 = pneg %p108
      $region22: #{corrnet_forward.1} parent=11 // pred_check_branch
        %346 = sbr.rel (%p344) target = $region24
      $region23: #{corrnet_forward.1} parent=11 // pred_region
        _
      $region24: #{corrnet_forward.1} parent=11 // pred_fallthru
        _
      // Predicated region
      $region25: #{corrnet_forward.1} parent=11 // pred_check
        %p347 = pneg %p129
      $region26: #{corrnet_forward.1} parent=11 // pred_check_branch
        %349 = sbr.rel (%p347) target = $region28
      $region27: #{corrnet_forward.1} parent=11 // pred_region
        _
      $region28: #{corrnet_forward.1} parent=11 // pred_fallthru
        _
      // Predicated region
      $region29: #{corrnet_forward.1} parent=11 // pred_check
        %p350 = pneg %p150
      $region30: #{corrnet_forward.1} parent=11 // pred_check_branch
        %352 = sbr.rel (%p350) target = $region32
      $region31: #{corrnet_forward.1} parent=11 // pred_region
        _
      $region32: #{corrnet_forward.1} parent=11 // pred_fallthru
        _
      // Predicated region
      $region33: #{corrnet_forward.1} parent=11 // pred_check
        %p353 = pneg %p171
      $region34: #{corrnet_forward.1} parent=11 // pred_check_branch
        %355 = sbr.rel (%p353) target = $region36
      $region35: #{corrnet_forward.1} parent=11 // pred_region
        _
      $region36: #{corrnet_forward.1} parent=11 // pred_fallthru
        _
      // Predicated region
      $region37: #{corrnet_forward.1} parent=11 // pred_check
        %p356 = pneg %p192
      $region38: #{corrnet_forward.1} parent=11 // pred_check_branch
        %358 = sbr.rel (%p356) target = $region40
      $region39: #{corrnet_forward.1} parent=11 // pred_region
        _
      $region40: #{corrnet_forward.1} parent=11 // pred_fallthru
        _
      // Predicated region
      $region41: #{corrnet_forward.1} parent=11 // pred_check
        %p359 = pneg %p213
      $region42: #{corrnet_forward.1} parent=11 // pred_check_branch
        %361 = sbr.rel (%p359) target = $region44
      $region43: #{corrnet_forward.1} parent=11 // pred_region
        _
      $region44: #{corrnet_forward.1} parent=11 // pred_fallthru
        _
      // Predicated region
      $region45: #{corrnet_forward.1} parent=11 // pred_check
        %p362 = pneg %p234
      $region46: #{corrnet_forward.1} parent=11 // pred_check_branch
        %364 = sbr.rel (%p362) target = $region48
      $region47: #{corrnet_forward.1} parent=11 // pred_region
        _
      $region48: #{corrnet_forward.1} parent=11 // pred_fallthru
        _
      // Predicated region
      $region49: #{corrnet_forward.1} parent=11 // pred_check
        %p365 = pneg %p255
      $region50: #{corrnet_forward.1} parent=11 // pred_check_branch
        %367 = sbr.rel (%p365) target = $region52
      $region51: #{corrnet_forward.1} parent=11 // pred_region
        _
      $region52: #{corrnet_forward.1} parent=11 // pred_fallthru
        _
      // Predicated region
      $region53: #{corrnet_forward.1} parent=11 // pred_check
        %p368 = pneg %p276
      $region54: #{corrnet_forward.1} parent=11 // pred_check_branch
        %370 = sbr.rel (%p368) target = $region56
      $region55: #{corrnet_forward.1} parent=11 // pred_region
        _
      $region56: #{corrnet_forward.1} parent=11 // pred_fallthru
        _
      // Predicated region
      $region57: #{corrnet_forward.1} parent=11 // pred_check
        %p371 = pneg %p297
      $region58: #{corrnet_forward.1} parent=11 // pred_check_branch
        %373 = sbr.rel (%p371) target = $region60
      $region59: #{corrnet_forward.1} parent=11 // pred_region
        _
      $region60: #{corrnet_forward.1} parent=11 // pred_fallthru
        _
    $region12: #{corrnet_forward.1} parent=5 // pred_fallthru
      _
    %p374 = scmp.lt.s32.totalorder %s19, 2
    // Predicated region
    $region61: #{corrnet_forward.1} parent=5 // pred_check
      %p375 = pneg %p374
    $region62: #{corrnet_forward.1} parent=5 // pred_check_branch
      %377 = sbr.rel (%p375) target = $region64
    $region63: #{corrnet_forward.1} parent=5 // pred_region
      // Predicated region
      $region65: #{corrnet_forward.1} parent=63 // pred_check
        %p378 = pneg %p39
      $region66: #{corrnet_forward.1} parent=63 // pred_check_branch
        %380 = sbr.rel (%p378) target = $region68
      $region67: #{corrnet_forward.1} parent=63 // pred_region
        %p381 = scmp.lt.s32.totalorder %s19, 1
        %s382 = scalar_select %p381, %s19, 1
        %s383 = smul.addr %s382, 16
        %s384 = smul.addr %s383, 8
        %s385 = scalar_lea.vmem %s0, %s384
      $region68: #{corrnet_forward.1} parent=63 // pred_fallthru
        _
    $region64: #{corrnet_forward.1} parent=5 // pred_fallthru
      _
    %p386 = scmp.le.s32.totalorder 1, %s19
    %p387 = scmp.lt.s32.totalorder %s19, 3
    %p388 = pnand %p386, %p387
    %p389 = pneg %p388
    // Predicated region
    $region69: #{corrnet_forward.1} parent=5 // pred_check
      _
    $region70: #{corrnet_forward.1} parent=5 // pred_check_branch
      %391 = sbr.rel (%p388) target = $region72
    $region71: #{corrnet_forward.1} parent=5 // pred_region
      %s392 = ssub.s32 %s19, 1
      %p393 = scmp.lt.s32.totalorder %s24, 1
      %s394 = scalar_select %p393, %s24, 1
      %s395 = smul.addr %s394, 16
      %s396 = smul.addr %s395, 8
      %s397 = scalar_lea.vmem %s0, %s396
      %p398 = pneg %p45
      %p399 = pneg %p42
      %p400 = pneg %p66
      %p401 = pneg %p63
      %p402 = pneg %p87
      %p403 = pneg %p84
      %p404 = pneg %p108
      %p405 = pneg %p105
      %p406 = pneg %p129
      %p407 = pneg %p126
      %p408 = pneg %p150
      %p409 = pneg %p147
      %p410 = pneg %p171
      %p411 = pneg %p168
      %p412 = pneg %p192
      %p413 = pneg %p189
      %p414 = pneg %p213
      %p415 = pneg %p210
      %p416 = pneg %p234
      %p417 = pneg %p231
      %p418 = pneg %p255
      %p419 = pneg %p252
      %p420 = pneg %p276
      %p421 = pneg %p273
      %p422 = pneg %p297
      %p423 = pneg %p294
      %p424 = pneg %p323
      %p425 = pneg %p320
      %p426 = scmp.lt.s32.totalorder %s24, 1
      %s427 = scalar_select %p426, %s24, 1
      %s428 = smul.addr %s427, 4
      %s429 = smul.addr %s428, 4
      %s430 = scalar_lea.vmem %s13, %s429
      %p431 = scmp.lt.s32.totalorder %s24, 1
      %s432 = scalar_select %p431, %s24, 1
      %s433 = smul.addr %s432, 16
      %s434 = smul.addr %s433, 8
      %s435 = scalar_lea.vmem %s0, %s434
      %p436 = scmp.lt.s32.totalorder %s24, 1
      %s437 = scalar_select %p436, %s24, 1
      %s438 = smul.addr %s437, 4
      %s439 = smul.addr %s438, 4
      %s440 = scalar_lea.vmem %s13, %s439
      %v442 = vld [vmem:[%s435] sm:$0xff]
      %v443 = vld [vmem:[%s435 + $0x8] sm:$0xff]
      %v444 = vld [vmem:[%s435 + $0x10] sm:$0xff]
      %v445 = vld [vmem:[%s435 + $0x18] sm:$0xff]
      %v446 = vld [vmem:[%s435 + $0x20] sm:$0xff]
      %v447 = vld [vmem:[%s435 + $0x28] sm:$0xff]
      %v448 = vld [vmem:[%s435 + $0x30] sm:$0xff]
      %v449 = vld [vmem:[%s435 + $0x38] sm:$0xff]
      %v450 = vld [vmem:[%s435 + $0x40] sm:$0xff]
      %v451 = vld [vmem:[%s435 + $0x48] sm:$0xff]
      %v452 = vld [vmem:[%s435 + $0x50] sm:$0xff]
      %v453 = vld [vmem:[%s435 + $0x58] sm:$0xff]
      %v454 = vld [vmem:[%s435 + $0x60] sm:$0xff]
      %v455 = vld [vmem:[%s435 + $0x68] sm:$0xff]
      %v456 = vld [vmem:[%s435 + $0x70] sm:$0xff]
      %v457 = vld [vmem:[%s435 + $0x78] sm:$0xff]
      %458 = vrot.lane.b32.xlu0 %v454, 9
      %v459 = vpop.permute.xlu0 %458
      %460 = vrot.lane.b32.xlu0 %v455, 9
      %v461 = vpop.permute.xlu0 %460
      %462 = vrot.lane.b32.xlu0 %v456, 9
      %v463 = vpop.permute.xlu0 %462
      %464 = vrot.lane.b32.xlu0 %v457, 9
      %v465 = vpop.permute.xlu0 %464
      %v466 = vlaneseq
      %v467 = vand.u32 %v466, 127
      %vm468 = vcmp.lt.s32.totalorder %v467, 9
      %v469 = vsel %vm468, %v463, %v465
      %v470 = vsel %vm468, %v461, %v463
      %v471 = vsel %vm468, %v459, %v461
      %v472 = vsel %vm468, %v465, %v459
      %v473 = vld [vmem:[%s11] sm:$0xf]
      %v475 = vperm.slane %v473, 0
      %v476 = vperm.slane %v473, 1
      %v477 = vperm.slane %v473, 2
      %v478 = vperm.slane %v473, 3
      %v483 = vmul.f32 %v472, %v475
      %v484 = vmul.f32 %v471, %v476
      %v485 = vmul.f32 %v470, %v477
      %v486 = vmul.f32 %v469, %v478
      %487 = vrot.lane.b32.xlu0 %v450, 8
      %v488 = vpop.permute.xlu0 %487
      %489 = vrot.lane.b32.xlu0 %v451, 8
      %v490 = vpop.permute.xlu0 %489
      %491 = vrot.lane.b32.xlu0 %v452, 8
      %v492 = vpop.permute.xlu0 %491
      %493 = vrot.lane.b32.xlu0 %v453, 8
      %v494 = vpop.permute.xlu0 %493
      %vm495 = vcmp.lt.s32.totalorder %v467, 8
      %v496 = vsel %vm495, %v492, %v494
      %v497 = vsel %vm495, %v490, %v492
      %v498 = vsel %vm495, %v488, %v490
      %v499 = vsel %vm495, %v494, %v488
      %s500 = scalar_lea.vmem %s11, 4
      %v501 = vld [vmem:[%s500] sm:$0xf]
      %v503 = vperm.slane %v501, 0
      %v504 = vperm.slane %v501, 1
      %v505 = vperm.slane %v501, 2
      %v506 = vperm.slane %v501, 3
      %v511 = vmul.f32 %v499, %v503
      %v512 = vmul.f32 %v498, %v504
      %v513 = vmul.f32 %v497, %v505
      %v514 = vmul.f32 %v496, %v506
      %515 = vrot.lane.b32.xlu0 %v454, 8
      %v516 = vpop.permute.xlu0 %515
      %517 = vrot.lane.b32.xlu0 %v455, 8
      %v518 = vpop.permute.xlu0 %517
      %519 = vrot.lane.b32.xlu0 %v456, 8
      %v520 = vpop.permute.xlu0 %519
      %521 = vrot.lane.b32.xlu0 %v457, 8
      %v522 = vpop.permute.xlu0 %521
      %v523 = vsel %vm495, %v520, %v522
      %v524 = vsel %vm495, %v518, %v520
      %v525 = vsel %vm495, %v516, %v518
      %v526 = vsel %vm495, %v522, %v516
      %v527 = vmul.f32 %v526, %v503
      %v528 = vmul.f32 %v525, %v504
      %v529 = vmul.f32 %v524, %v505
      %v530 = vmul.f32 %v523, %v506
      %531 = vrot.lane.b32.xlu0 %v450, 7
      %v532 = vpop.permute.xlu0 %531
      %533 = vrot.lane.b32.xlu0 %v451, 7
      %v534 = vpop.permute.xlu0 %533
      %535 = vrot.lane.b32.xlu0 %v452, 7
      %v536 = vpop.permute.xlu0 %535
      %537 = vrot.lane.b32.xlu0 %v453, 7
      %v538 = vpop.permute.xlu0 %537
      %vm539 = vcmp.lt.s32.totalorder %v467, 7
      %v540 = vsel %vm539, %v536, %v538
      %v541 = vsel %vm539, %v534, %v536
      %v542 = vsel %vm539, %v532, %v534
      %v543 = vsel %vm539, %v538, %v532
      %s544 = scalar_lea.vmem %s11, 8
      %v545 = vld [vmem:[%s544] sm:$0xf]
      %v547 = vperm.slane %v545, 0
      %v548 = vperm.slane %v545, 1
      %v549 = vperm.slane %v545, 2
      %v550 = vperm.slane %v545, 3
      %v555 = vmul.f32 %v543, %v547
      %v556 = vmul.f32 %v542, %v548
      %v557 = vmul.f32 %v541, %v549
      %v558 = vmul.f32 %v540, %v550
      %559 = vrot.lane.b32.xlu0 %v446, 1
      %v560 = vpop.permute.xlu0 %559
      %561 = vrot.lane.b32.xlu0 %v447, 1
      %v562 = vpop.permute.xlu0 %561
      %563 = vrot.lane.b32.xlu0 %v448, 1
      %v564 = vpop.permute.xlu0 %563
      %565 = vrot.lane.b32.xlu0 %v449, 1
      %v566 = vpop.permute.xlu0 %565
      %vm567 = vcmp.lt.s32.totalorder %v467, 1
      %v568 = vsel %vm567, %v564, %v566
      %v569 = vsel %vm567, %v562, %v564
      %v570 = vsel %vm567, %v560, %v562
      %v571 = vsel %vm567, %v566, %v560
      %s572 = scalar_lea.vmem %s11, 12
      %v573 = vld [vmem:[%s572] sm:$0xf]
      %v575 = vperm.slane %v573, 0
      %v576 = vperm.slane %v573, 1
      %v577 = vperm.slane %v573, 2
      %v578 = vperm.slane %v573, 3
      %v583 = vmul.f32 %v571, %v575
      %v584 = vmul.f32 %v570, %v576
      %v585 = vmul.f32 %v569, %v577
      %v586 = vmul.f32 %v568, %v578
      %587 = vrot.lane.b32.xlu0 %v442, 127
      %v588 = vpop.permute.xlu0 %587
      %589 = vrot.lane.b32.xlu0 %v443, 127
      %v590 = vpop.permute.xlu0 %589
      %591 = vrot.lane.b32.xlu0 %v444, 127
      %v592 = vpop.permute.xlu0 %591
      %593 = vrot.lane.b32.xlu0 %v445, 127
      %v594 = vpop.permute.xlu0 %593
      %vm595 = vcmp.lt.s32.totalorder %v467, 127
      %v596 = vsel %vm595, %v592, %v594
      %v597 = vsel %vm595, %v590, %v592
      %v598 = vsel %vm595, %v588, %v590
      %v599 = vsel %vm595, %v594, %v588
      %s600 = scalar_lea.vmem %s11, 20
      %v601 = vld [vmem:[%s600] sm:$0xf]
      %v603 = vperm.slane %v601, 0
      %v604 = vperm.slane %v601, 1
      %v605 = vperm.slane %v601, 2
      %v606 = vperm.slane %v601, 3
      %v611 = vmul.f32 %v598, %v603
      %v612 = vmul.f32 %v597, %v604
      %v613 = vmul.f32 %v596, %v605
      %v614 = vmul.f32 %v599, %v606
      %615 = vrot.lane.b32.xlu0 %v454, 1
      %v616 = vpop.permute.xlu0 %615
      %617 = vrot.lane.b32.xlu0 %v455, 1
      %v618 = vpop.permute.xlu0 %617
      %619 = vrot.lane.b32.xlu0 %v456, 1
      %v620 = vpop.permute.xlu0 %619
      %621 = vrot.lane.b32.xlu0 %v457, 1
      %v622 = vpop.permute.xlu0 %621
      %v623 = vsel %vm567, %v620, %v622
      %v624 = vsel %vm567, %v618, %v620
      %v625 = vsel %vm567, %v616, %v618
      %v626 = vsel %vm567, %v622, %v616
      %v627 = vmul.f32 %v626, %v575
      %v628 = vmul.f32 %v625, %v576
      %v629 = vmul.f32 %v624, %v577
      %v630 = vmul.f32 %v623, %v578
      %631 = vrot.lane.b32.xlu0 %v450, 127
      %v632 = vpop.permute.xlu0 %631
      %633 = vrot.lane.b32.xlu0 %v451, 127
      %v634 = vpop.permute.xlu0 %633
      %635 = vrot.lane.b32.xlu0 %v452, 127
      %v636 = vpop.permute.xlu0 %635
      %637 = vrot.lane.b32.xlu0 %v453, 127
      %v638 = vpop.permute.xlu0 %637
      %v639 = vsel %vm595, %v636, %v638
      %v640 = vsel %vm595, %v634, %v636
      %v641 = vsel %vm595, %v632, %v634
      %v642 = vsel %vm595, %v638, %v632
      %v643 = vmul.f32 %v641, %v603
      %v644 = vmul.f32 %v640, %v604
      %v645 = vmul.f32 %v639, %v605
      %v646 = vmul.f32 %v642, %v606
      %647 = vrot.lane.b32.xlu0 %v446, 121
      %v648 = vpop.permute.xlu0 %647
      %649 = vrot.lane.b32.xlu0 %v447, 121
      %v650 = vpop.permute.xlu0 %649
      %651 = vrot.lane.b32.xlu0 %v448, 121
      %v652 = vpop.permute.xlu0 %651
      %653 = vrot.lane.b32.xlu0 %v449, 121
      %v654 = vpop.permute.xlu0 %653
      %vm655 = vcmp.lt.s32.totalorder %v467, 121
      %v656 = vsel %vm655, %v652, %v654
      %v657 = vsel %vm655, %v650, %v652
      %v658 = vsel %vm655, %v648, %v650
      %v659 = vsel %vm655, %v654, %v648
      %s660 = scalar_lea.vmem %s11, 24
      %v661 = vld [vmem:[%s660] sm:$0xf]
      %v663 = vperm.slane %v661, 0
      %v664 = vperm.slane %v661, 1
      %v665 = vperm.slane %v661, 2
      %v666 = vperm.slane %v661, 3
      %v671 = vmul.f32 %v658, %v663
      %v672 = vmul.f32 %v657, %v664
      %v673 = vmul.f32 %v656, %v665
      %v674 = vmul.f32 %v659, %v666
      %675 = vrot.lane.b32.xlu0 %v442, 120
      %v676 = vpop.permute.xlu0 %675
      %677 = vrot.lane.b32.xlu0 %v443, 120
      %v678 = vpop.permute.xlu0 %677
      %679 = vrot.lane.b32.xlu0 %v444, 120
      %v680 = vpop.permute.xlu0 %679
      %681 = vrot.lane.b32.xlu0 %v445, 120
      %v682 = vpop.permute.xlu0 %681
      %vm683 = vcmp.lt.s32.totalorder %v467, 120
      %v684 = vsel %vm683, %v680, %v682
      %v685 = vsel %vm683, %v678, %v680
      %v686 = vsel %vm683, %v676, %v678
      %v687 = vsel %vm683, %v682, %v676
      %s688 = scalar_lea.vmem %s11, 28
      %v689 = vld [vmem:[%s688] sm:$0xf]
      %v691 = vperm.slane %v689, 0
      %v692 = vperm.slane %v689, 1
      %v693 = vperm.slane %v689, 2
      %v694 = vperm.slane %v689, 3
      %v699 = vmul.f32 %v686, %v691
      %v700 = vmul.f32 %v685, %v692
      %v701 = vmul.f32 %v684, %v693
      %v702 = vmul.f32 %v687, %v694
      %703 = vrot.lane.b32.xlu0 %v446, 120
      %v704 = vpop.permute.xlu0 %703
      %705 = vrot.lane.b32.xlu0 %v447, 120
      %v706 = vpop.permute.xlu0 %705
      %707 = vrot.lane.b32.xlu0 %v448, 120
      %v708 = vpop.permute.xlu0 %707
      %709 = vrot.lane.b32.xlu0 %v449, 120
      %v710 = vpop.permute.xlu0 %709
      %v711 = vsel %vm683, %v708, %v710
      %v712 = vsel %vm683, %v706, %v708
      %v713 = vsel %vm683, %v704, %v706
      %v714 = vsel %vm683, %v710, %v704
      %v715 = vmul.f32 %v713, %v691
      %v716 = vmul.f32 %v712, %v692
      %v717 = vmul.f32 %v711, %v693
      %v718 = vmul.f32 %v714, %v694
      %719 = vrot.lane.b32.xlu0 %v442, 119
      %v720 = vpop.permute.xlu0 %719
      %721 = vrot.lane.b32.xlu0 %v443, 119
      %v722 = vpop.permute.xlu0 %721
      %723 = vrot.lane.b32.xlu0 %v444, 119
      %v724 = vpop.permute.xlu0 %723
      %725 = vrot.lane.b32.xlu0 %v445, 119
      %v726 = vpop.permute.xlu0 %725
      %vm727 = vcmp.lt.s32.totalorder %v467, 119
      %v728 = vsel %vm727, %v724, %v726
      %v729 = vsel %vm727, %v722, %v724
      %v730 = vsel %vm727, %v720, %v722
      %v731 = vsel %vm727, %v726, %v720
      %s732 = scalar_lea.vmem %s11, 32
      %v733 = vld [vmem:[%s732] sm:$0xf]
      %v735 = vperm.slane %v733, 0
      %v736 = vperm.slane %v733, 1
      %v737 = vperm.slane %v733, 2
      %v738 = vperm.slane %v733, 3
      %v743 = vmul.f32 %v730, %v735
      %v744 = vmul.f32 %v729, %v736
      %v745 = vmul.f32 %v728, %v737
      %v746 = vmul.f32 %v731, %v738
      %v747 = vld [vmem:[%s1] sm:$0xf]
      %v748 = vld [vmem:[%s1 + $0x4] sm:$0xf]
      %v749 = vld [vmem:[%s1 + $0x8] sm:$0xf]
      %v750 = vld [vmem:[%s1 + $0xc] sm:$0xf]
      %v751 = vpack.c.bf16 %v511, %v483
      %v752 = vpack.c.bf16 %v512, %v484
      %v753 = vpack.c.bf16 %v513, %v485
      %v754 = vpack.c.bf16 %v514, %v486
      %v755 = vpack.c.bf16 %v555, %v527
      %v756 = vpack.c.bf16 %v556, %v528
      %v757 = vpack.c.bf16 %v557, %v529
      %v758 = vpack.c.bf16 %v558, %v530
      %v759 = vpack.c.bf16 %v442, %v583
      %v760 = vpack.c.bf16 %v443, %v584
      %v761 = vpack.c.bf16 %v444, %v585
      %v762 = vpack.c.bf16 %v445, %v586
      %v763 = vpack.c.bf16 %v611, %v446
      %v764 = vpack.c.bf16 %v612, %v447
      %v765 = vpack.c.bf16 %v613, %v448
      %v766 = vpack.c.bf16 %v614, %v449
      %v767 = vpack.c.bf16 %v450, %v627
      %v768 = vpack.c.bf16 %v451, %v628
      %v769 = vpack.c.bf16 %v452, %v629
      %v770 = vpack.c.bf16 %v453, %v630
      %v771 = vpack.c.bf16 %v643, %v454
      %v772 = vpack.c.bf16 %v644, %v455
      %v773 = vpack.c.bf16 %v645, %v456
      %v774 = vpack.c.bf16 %v646, %v457
      %v775 = vpack.c.bf16 %v699, %v671
      %v776 = vpack.c.bf16 %v700, %v672
      %v777 = vpack.c.bf16 %v701, %v673
      %v778 = vpack.c.bf16 %v702, %v674
      %v779 = vpack.c.bf16 %v743, %v715
      %v780 = vpack.c.bf16 %v744, %v716
      %v781 = vpack.c.bf16 %v745, %v717
      %v782 = vpack.c.bf16 %v746, %v718
      %v783 = vld [vmem:[%s2] sm:$0xff]
      %v784 = vld [vmem:[%s2 + $0x8] sm:$0xff]
      %v785 = vld [vmem:[%s2 + $0x10] sm:$0xff]
      %v786 = vld [vmem:[%s2 + $0x18] sm:$0xff]
      %788 = vset.pattern.permute.xlu0 0
      %789 = vperm.xlu0 %788, %v783
      %v790 = vpop.permute.xlu0 %789
      %793 = vset.pattern.permute.xlu0 0
      %794 = vperm.xlu0 %793, %v784
      %v795 = vpop.permute.xlu0 %794
      %798 = vset.pattern.permute.xlu0 0
      %799 = vperm.xlu0 %798, %v785
      %v800 = vpop.permute.xlu0 %799
      %803 = vset.pattern.permute.xlu0 0
      %804 = vperm.xlu0 %803, %v786
      %v805 = vpop.permute.xlu0 %804
      %v811 = vunpack.c.l.b16 %v747
      %v812 = vunpack.c.l.b16 %v748
      %v813 = vunpack.c.l.b16 %v749
      %v814 = vunpack.c.l.b16 %v750
      %v815 = vpack.c.b16 %v812, %v811
      %v816 = vpack.c.b16 %v814, %v813
      %819 = vmatpush.bf16.msra.mxu0 %v779
      %820 = vmatpush.bf16.msra.mxu0 %v775
      %821 = vmatpush.bf16.msra.mxu0 %v771
      %822 = vmatpush.bf16.msra.mxu0 %v767
      %823 = vmatpush.bf16.msra.mxu0 %v763
      %824 = vmatpush.bf16.msra.mxu0 %v759
      %825 = vmatpush.bf16.msra.mxu0 %v755
      %826 = vmatpush.bf16.msra.mxu0 %v751
      %827 = vmatmul.bf16.gmra.mxu0 %v815
      %v828 = vpop.f32.mrf.mxu0
      %v829 = vadd.f32 %v790, %v828
      %v830 = vpop.f32.mrf.mxu0
      %v831 = vadd.f32 %v795, %v830
      %832 = vmatmul.bf16.gmra.mxu0 %v816
      %v833 = vpop.f32.mrf.mxu0
      %v834 = vadd.f32 %v800, %v833
      %v835 = vpop.f32.mrf.mxu0
      %v836 = vadd.f32 %v805, %v835
      %837 = vdwg.mxu0
      %838 = vmatpush.bf16.msra.mxu0 %v780
      %839 = vmatpush.bf16.msra.mxu0 %v776
      %840 = vmatpush.bf16.msra.mxu0 %v772
      %841 = vmatpush.bf16.msra.mxu0 %v768
      %842 = vmatpush.bf16.msra.mxu0 %v764
      %843 = vmatpush.bf16.msra.mxu0 %v760
      %844 = vmatpush.bf16.msra.mxu0 %v756
      %845 = vmatpush.bf16.msra.mxu0 %v752
      %846 = vmatmul.bf16.gmra.mxu0 %v815
      %v847 = vpop.f32.mrf.mxu0
      %v848 = vadd.f32 %v790, %v847
      %v849 = vpop.f32.mrf.mxu0
      %v850 = vadd.f32 %v795, %v849
      %851 = vmatmul.bf16.gmra.mxu0 %v816
      %v852 = vpop.f32.mrf.mxu0
      %v853 = vadd.f32 %v800, %v852
      %v854 = vpop.f32.mrf.mxu0
      %v855 = vadd.f32 %v805, %v854
      %856 = vdwg.mxu0
      %857 = vmatpush.bf16.msra.mxu0 %v781
      %858 = vmatpush.bf16.msra.mxu0 %v777
      %859 = vmatpush.bf16.msra.mxu0 %v773
      %860 = vmatpush.bf16.msra.mxu0 %v769
      %861 = vmatpush.bf16.msra.mxu0 %v765
      %862 = vmatpush.bf16.msra.mxu0 %v761
      %863 = vmatpush.bf16.msra.mxu0 %v757
      %864 = vmatpush.bf16.msra.mxu0 %v753
      %865 = vmatmul.bf16.gmra.mxu0 %v815
      %v866 = vpop.f32.mrf.mxu0
      %v867 = vadd.f32 %v790, %v866
      %v868 = vpop.f32.mrf.mxu0
      %v869 = vadd.f32 %v795, %v868
      %870 = vmatmul.bf16.gmra.mxu0 %v816
      %v871 = vpop.f32.mrf.mxu0
      %v872 = vadd.f32 %v800, %v871
      %v873 = vpop.f32.mrf.mxu0
      %v874 = vadd.f32 %v805, %v873
      %875 = vdwg.mxu0
      %876 = vmatpush.bf16.msra.mxu0 %v782
      %877 = vmatpush.bf16.msra.mxu0 %v778
      %878 = vmatpush.bf16.msra.mxu0 %v774
      %879 = vmatpush.bf16.msra.mxu0 %v770
      %880 = vmatpush.bf16.msra.mxu0 %v766
      %881 = vmatpush.bf16.msra.mxu0 %v762
      %882 = vmatpush.bf16.msra.mxu0 %v758
      %883 = vmatpush.bf16.msra.mxu0 %v754
      %884 = vmatmul.bf16.gmra.mxu0 %v815
      %v885 = vpop.f32.mrf.mxu0
      %v886 = vadd.f32 %v790, %v885
      %v887 = vpop.f32.mrf.mxu0
      %v888 = vadd.f32 %v795, %v887
      %889 = vmatmul.bf16.gmra.mxu0 %v816
      %v890 = vpop.f32.mrf.mxu0
      %v891 = vadd.f32 %v800, %v890
      %v892 = vpop.f32.mrf.mxu0
      %v893 = vadd.f32 %v805, %v892
      %894 = vdwg.mxu0
      %v895 = vmax.f32 %v829, 0.0
      %v896 = vmax.f32 %v848, 0.0
      %v897 = vmax.f32 %v867, 0.0
      %v898 = vmax.f32 %v886, 0.0
      %v899 = vmax.f32 %v831, 0.0
      %v900 = vmax.f32 %v850, 0.0
      %v901 = vmax.f32 %v869, 0.0
      %v902 = vmax.f32 %v888, 0.0
      %v903 = vmax.f32 %v834, 0.0
      %v904 = vmax.f32 %v853, 0.0
      %v905 = vmax.f32 %v872, 0.0
      %v906 = vmax.f32 %v891, 0.0
      %v907 = vmax.f32 %v836, 0.0
      %v908 = vmax.f32 %v855, 0.0
      %v909 = vmax.f32 %v874, 0.0
      %v910 = vmax.f32 %v893, 0.0
      %911 = vrot.lane.b32.xlu0 %v907, 9
      %v912 = vpop.permute.xlu0 %911
      %913 = vrot.lane.b32.xlu0 %v908, 9
      %v914 = vpop.permute.xlu0 %913
      %915 = vrot.lane.b32.xlu0 %v909, 9
      %v916 = vpop.permute.xlu0 %915
      %917 = vrot.lane.b32.xlu0 %v910, 9
      %v918 = vpop.permute.xlu0 %917
      %v919 = vsel %vm468, %v916, %v918
      %v920 = vsel %vm468, %v914, %v916
      %v921 = vsel %vm468, %v912, %v914
      %v922 = vsel %vm468, %v918, %v912
      %v923 = vmul.f32 %v922, %v475
      %v924 = vmul.f32 %v921, %v476
      %v925 = vmul.f32 %v920, %v477
      %v926 = vmul.f32 %v919, %v478
      %927 = vrot.lane.b32.xlu0 %v903, 8
      %v928 = vpop.permute.xlu0 %927
      %929 = vrot.lane.b32.xlu0 %v904, 8
      %v930 = vpop.permute.xlu0 %929
      %931 = vrot.lane.b32.xlu0 %v905, 8
      %v932 = vpop.permute.xlu0 %931
      %933 = vrot.lane.b32.xlu0 %v906, 8
      %v934 = vpop.permute.xlu0 %933
      %v935 = vsel %vm495, %v932, %v934
      %v936 = vsel %vm495, %v930, %v932
      %v937 = vsel %vm495, %v928, %v930
      %v938 = vsel %vm495, %v934, %v928
      %v939 = vmul.f32 %v938, %v503
      %v940 = vmul.f32 %v937, %v504
      %v941 = vmul.f32 %v936, %v505
      %v942 = vmul.f32 %v935, %v506
      %943 = vrot.lane.b32.xlu0 %v907, 8
      %v944 = vpop.permute.xlu0 %943
      %945 = vrot.lane.b32.xlu0 %v908, 8
      %v946 = vpop.permute.xlu0 %945
      %947 = vrot.lane.b32.xlu0 %v909, 8
      %v948 = vpop.permute.xlu0 %947
      %949 = vrot.lane.b32.xlu0 %v910, 8
      %v950 = vpop.permute.xlu0 %949
      %v951 = vsel %vm495, %v948, %v950
      %v952 = vsel %vm495, %v946, %v948
      %v953 = vsel %vm495, %v944, %v946
      %v954 = vsel %vm495, %v950, %v944
      %v955 = vmul.f32 %v954, %v503
      %v956 = vmul.f32 %v953, %v504
      %v957 = vmul.f32 %v952, %v505
      %v958 = vmul.f32 %v951, %v506
      %959 = vrot.lane.b32.xlu0 %v899, 1
      %v960 = vpop.permute.xlu0 %959
      %961 = vrot.lane.b32.xlu0 %v900, 1
      %v962 = vpop.permute.xlu0 %961
      %963 = vrot.lane.b32.xlu0 %v901, 1
      %v964 = vpop.permute.xlu0 %963
      %965 = vrot.lane.b32.xlu0 %v902, 1
      %v966 = vpop.permute.xlu0 %965
      %v967 = vsel %vm567, %v964, %v966
      %v968 = vsel %vm567, %v962, %v964
      %v969 = vsel %vm567, %v960, %v962
      %v970 = vsel %vm567, %v966, %v960
      %v971 = vmul.f32 %v970, %v575
      %v972 = vmul.f32 %v969, %v576
      %v973 = vmul.f32 %v968, %v577
      %v974 = vmul.f32 %v967, %v578
      %975 = vrot.lane.b32.xlu0 %v907, 1
      %v976 = vpop.permute.xlu0 %975
      %977 = vrot.lane.b32.xlu0 %v908, 1
      %v978 = vpop.permute.xlu0 %977
      %979 = vrot.lane.b32.xlu0 %v909, 1
      %v980 = vpop.permute.xlu0 %979
      %981 = vrot.lane.b32.xlu0 %v910, 1
      %v982 = vpop.permute.xlu0 %981
      %v983 = vsel %vm567, %v980, %v982
      %v984 = vsel %vm567, %v978, %v980
      %v985 = vsel %vm567, %v976, %v978
      %v986 = vsel %vm567, %v982, %v976
      %v987 = vmul.f32 %v986, %v575
      %v988 = vmul.f32 %v985, %v576
      %v989 = vmul.f32 %v984, %v577
      %v990 = vmul.f32 %v983, %v578
      %v991 = vld [vmem:[%s3] sm:$0xf]
      %v992 = vld [vmem:[%s3 + $0x4] sm:$0xf]
      %v993 = vpack.c.bf16 %v939, %v923
      %v994 = vpack.c.bf16 %v940, %v924
      %v995 = vpack.c.bf16 %v941, %v925
      %v996 = vpack.c.bf16 %v942, %v926
      %v997 = vpack.c.bf16 %v971, %v955
      %v998 = vpack.c.bf16 %v972, %v956
      %v999 = vpack.c.bf16 %v973, %v957
      %v1000 = vpack.c.bf16 %v974, %v958
      %v1001 = vpack.c.bf16 %v899, %v895
      %v1002 = vpack.c.bf16 %v900, %v896
      %v1003 = vpack.c.bf16 %v901, %v897
      %v1004 = vpack.c.bf16 %v902, %v898
      %v1005 = vpack.c.bf16 %v903, %v987
      %v1006 = vpack.c.bf16 %v904, %v988
      %v1007 = vpack.c.bf16 %v905, %v989
      %v1008 = vpack.c.bf16 %v906, %v990
      %v1009 = vpack.c.bf16 %v907, %v907
      %v1010 = vpack.c.bf16 %v908, %v908
      %v1011 = vpack.c.bf16 %v909, %v909
      %v1012 = vpack.c.bf16 %v910, %v910
      %v1013 = vld [vmem:[%s4] sm:$0xff]
      %v1014 = vld [vmem:[%s4 + $0x8] sm:$0xff]
      %1016 = vset.pattern.permute.xlu0 0
      %1017 = vperm.xlu0 %1016, %v1013
      %v1018 = vpop.permute.xlu0 %1017
      %1021 = vset.pattern.permute.xlu0 0
      %1022 = vperm.xlu0 %1021, %v1014
      %v1023 = vpop.permute.xlu0 %1022
      %v1027 = vunpack.c.l.b16 %v991
      %v1028 = vunpack.c.l.b16 %v992
      %v1029 = vpack.c.b16 %v1028, %v1027
      %vm1030 = vcmask 588800
      %v1032 = vsel %vm1030, %v1029, 0
      %vm1034 = vcmask 1043456
      %v1036 = vsel %vm1034, %v1009, 0
      %v1039 = vsel %vm1034, %v1010, 0
      %v1042 = vsel %vm1034, %v1011, 0
      %v1045 = vsel %vm1034, %v1012, 0
      %1047 = vmatpush.bf16.msra.mxu0 0
      %1048 = vmatpush.bf16.msra.mxu0 0
      %1049 = vmatpush.bf16.msra.mxu0 0
      %1050 = vmatpush.bf16.msra.mxu0 %v1036
      %1051 = vmatpush.bf16.msra.mxu0 %v1005
      %1052 = vmatpush.bf16.msra.mxu0 %v1001
      %1053 = vmatpush.bf16.msra.mxu0 %v997
      %1054 = vmatpush.bf16.msra.mxu0 %v993
      %1055 = vmatmul.bf16.gmra.mxu0 %v1032
      %v1056 = vpop.f32.mrf.mxu0
      %v1057 = vadd.f32 %v1018, %v1056
      %v1058 = vpop.f32.mrf.mxu0
      %v1059 = vadd.f32 %v1023, %v1058
      %1060 = vdwg.mxu0
      %1061 = vmatpush.bf16.msra.mxu0 0
      %1062 = vmatpush.bf16.msra.mxu0 0
      %1063 = vmatpush.bf16.msra.mxu0 0
      %1064 = vmatpush.bf16.msra.mxu0 %v1039
      %1065 = vmatpush.bf16.msra.mxu0 %v1006
      %1066 = vmatpush.bf16.msra.mxu0 %v1002
      %1067 = vmatpush.bf16.msra.mxu0 %v998
      %1068 = vmatpush.bf16.msra.mxu0 %v994
      %1069 = vmatmul.bf16.gmra.mxu0 %v1032
      %v1070 = vpop.f32.mrf.mxu0
      %v1071 = vadd.f32 %v1018, %v1070
      %v1072 = vpop.f32.mrf.mxu0
      %v1073 = vadd.f32 %v1023, %v1072
      %1074 = vdwg.mxu0
      %1075 = vmatpush.bf16.msra.mxu0 0
      %1076 = vmatpush.bf16.msra.mxu0 0
      %1077 = vmatpush.bf16.msra.mxu0 0
      %1078 = vmatpush.bf16.msra.mxu0 %v1042
      %1079 = vmatpush.bf16.msra.mxu0 %v1007
      %1080 = vmatpush.bf16.msra.mxu0 %v1003
      %1081 = vmatpush.bf16.msra.mxu0 %v999
      %1082 = vmatpush.bf16.msra.mxu0 %v995
      %1083 = vmatmul.bf16.gmra.mxu0 %v1032
      %v1084 = vpop.f32.mrf.mxu0
      %v1085 = vadd.f32 %v1018, %v1084
      %v1086 = vpop.f32.mrf.mxu0
      %v1087 = vadd.f32 %v1023, %v1086
      %1088 = vdwg.mxu0
      %1089 = vmatpush.bf16.msra.mxu0 0
      %1090 = vmatpush.bf16.msra.mxu0 0
      %1091 = vmatpush.bf16.msra.mxu0 0
      %1092 = vmatpush.bf16.msra.mxu0 %v1045
      %1093 = vmatpush.bf16.msra.mxu0 %v1008
      %1094 = vmatpush.bf16.msra.mxu0 %v1004
      %1095 = vmatpush.bf16.msra.mxu0 %v1000
      %1096 = vmatpush.bf16.msra.mxu0 %v996
      %1097 = vmatmul.bf16.gmra.mxu0 %v1032
      %v1098 = vpop.f32.mrf.mxu0
      %v1099 = vadd.f32 %v1018, %v1098
      %v1100 = vpop.f32.mrf.mxu0
      %v1101 = vadd.f32 %v1023, %v1100
      %1102 = vdwg.mxu0
      %v1103 = vmax.f32 %v1057, 0.0
      %v1104 = vmax.f32 %v1071, 0.0
      %v1105 = vmax.f32 %v1085, 0.0
      %v1106 = vmax.f32 %v1099, 0.0
      %v1107 = vmax.f32 %v1059, 0.0
      %v1108 = vmax.f32 %v1073, 0.0
      %v1109 = vmax.f32 %v1087, 0.0
      %v1110 = vmax.f32 %v1101, 0.0
      %1111 = vrot.lane.b32.xlu0 %v1103, 9
      %v1112 = vpop.permute.xlu0 %1111
      %1113 = vrot.lane.b32.xlu0 %v1107, 9
      %v1114 = vpop.permute.xlu0 %1113
      %1115 = vrot.lane.b32.xlu0 %v1104, 9
      %v1116 = vpop.permute.xlu0 %1115
      %1117 = vrot.lane.b32.xlu0 %v1108, 9
      %v1118 = vpop.permute.xlu0 %1117
      %1119 = vrot.lane.b32.xlu0 %v1105, 9
      %v1120 = vpop.permute.xlu0 %1119
      %1121 = vrot.lane.b32.xlu0 %v1109, 9
      %v1122 = vpop.permute.xlu0 %1121
      %1123 = vrot.lane.b32.xlu0 %v1106, 9
      %v1124 = vpop.permute.xlu0 %1123
      %1125 = vrot.lane.b32.xlu0 %v1110, 9
      %v1126 = vpop.permute.xlu0 %1125
      %v1127 = vsel %vm468, %v1120, %v1124
      %v1128 = vsel %vm468, %v1122, %v1126
      %v1129 = vsel %vm468, %v1116, %v1120
      %v1130 = vsel %vm468, %v1118, %v1122
      %v1131 = vsel %vm468, %v1112, %v1116
      %v1132 = vsel %vm468, %v1114, %v1118
      %v1133 = vsel %vm468, %v1124, %v1112
      %v1134 = vsel %vm468, %v1126, %v1114
      %v1135 = vmul.f32 %v1133, %v475
      %v1136 = vmul.f32 %v1131, %v476
      %v1137 = vmul.f32 %v1129, %v477
      %v1138 = vmul.f32 %v1127, %v478
      %v1139 = vmul.f32 %v1134, %v475
      %v1140 = vmul.f32 %v1132, %v476
      %v1141 = vmul.f32 %v1130, %v477
      %v1142 = vmul.f32 %v1128, %v478
      %1143 = vrot.lane.b32.xlu0 %v1103, 8
      %v1144 = vpop.permute.xlu0 %1143
      %1145 = vrot.lane.b32.xlu0 %v1107, 8
      %v1146 = vpop.permute.xlu0 %1145
      %1147 = vrot.lane.b32.xlu0 %v1104, 8
      %v1148 = vpop.permute.xlu0 %1147
      %1149 = vrot.lane.b32.xlu0 %v1108, 8
      %v1150 = vpop.permute.xlu0 %1149
      %1151 = vrot.lane.b32.xlu0 %v1105, 8
      %v1152 = vpop.permute.xlu0 %1151
      %1153 = vrot.lane.b32.xlu0 %v1109, 8
      %v1154 = vpop.permute.xlu0 %1153
      %1155 = vrot.lane.b32.xlu0 %v1106, 8
      %v1156 = vpop.permute.xlu0 %1155
      %1157 = vrot.lane.b32.xlu0 %v1110, 8
      %v1158 = vpop.permute.xlu0 %1157
      %v1159 = vsel %vm495, %v1152, %v1156
      %v1160 = vsel %vm495, %v1154, %v1158
      %v1161 = vsel %vm495, %v1148, %v1152
      %v1162 = vsel %vm495, %v1150, %v1154
      %v1163 = vsel %vm495, %v1144, %v1148
      %v1164 = vsel %vm495, %v1146, %v1150
      %v1165 = vsel %vm495, %v1156, %v1144
      %v1166 = vsel %vm495, %v1158, %v1146
      %v1167 = vmul.f32 %v1165, %v503
      %v1168 = vmul.f32 %v1163, %v504
      %v1169 = vmul.f32 %v1161, %v505
      %v1170 = vmul.f32 %v1159, %v506
      %v1171 = vmul.f32 %v1166, %v503
      %v1172 = vmul.f32 %v1164, %v504
      %v1173 = vmul.f32 %v1162, %v505
      %v1174 = vmul.f32 %v1160, %v506
      %1175 = vrot.lane.b32.xlu0 %v1103, 7
      %v1176 = vpop.permute.xlu0 %1175
      %1177 = vrot.lane.b32.xlu0 %v1107, 7
      %v1178 = vpop.permute.xlu0 %1177
      %1179 = vrot.lane.b32.xlu0 %v1104, 7
      %v1180 = vpop.permute.xlu0 %1179
      %1181 = vrot.lane.b32.xlu0 %v1108, 7
      %v1182 = vpop.permute.xlu0 %1181
      %1183 = vrot.lane.b32.xlu0 %v1105, 7
      %v1184 = vpop.permute.xlu0 %1183
      %1185 = vrot.lane.b32.xlu0 %v1109, 7
      %v1186 = vpop.permute.xlu0 %1185
      %1187 = vrot.lane.b32.xlu0 %v1106, 7
      %v1188 = vpop.permute.xlu0 %1187
      %1189 = vrot.lane.b32.xlu0 %v1110, 7
      %v1190 = vpop.permute.xlu0 %1189
      %v1191 = vsel %vm539, %v1184, %v1188
      %v1192 = vsel %vm539, %v1186, %v1190
      %v1193 = vsel %vm539, %v1180, %v1184
      %v1194 = vsel %vm539, %v1182, %v1186
      %v1195 = vsel %vm539, %v1176, %v1180
      %v1196 = vsel %vm539, %v1178, %v1182
      %v1197 = vsel %vm539, %v1188, %v1176
      %v1198 = vsel %vm539, %v1190, %v1178
      %v1199 = vmul.f32 %v1197, %v547
      %v1200 = vmul.f32 %v1195, %v548
      %v1201 = vmul.f32 %v1193, %v549
      %v1202 = vmul.f32 %v1191, %v550
      %v1203 = vmul.f32 %v1198, %v547
      %v1204 = vmul.f32 %v1196, %v548
      %v1205 = vmul.f32 %v1194, %v549
      %v1206 = vmul.f32 %v1192, %v550
      %1207 = vrot.lane.b32.xlu0 %v1103, 1
      %v1208 = vpop.permute.xlu0 %1207
      %1209 = vrot.lane.b32.xlu0 %v1107, 1
      %v1210 = vpop.permute.xlu0 %1209
      %1211 = vrot.lane.b32.xlu0 %v1104, 1
      %v1212 = vpop.permute.xlu0 %1211
      %1213 = vrot.lane.b32.xlu0 %v1108, 1
      %v1214 = vpop.permute.xlu0 %1213
      %1215 = vrot.lane.b32.xlu0 %v1105, 1
      %v1216 = vpop.permute.xlu0 %1215
      %1217 = vrot.lane.b32.xlu0 %v1109, 1
      %v1218 = vpop.permute.xlu0 %1217
      %1219 = vrot.lane.b32.xlu0 %v1106, 1
      %v1220 = vpop.permute.xlu0 %1219
      %1221 = vrot.lane.b32.xlu0 %v1110, 1
      %v1222 = vpop.permute.xlu0 %1221
      %v1223 = vsel %vm567, %v1216, %v1220
      %v1224 = vsel %vm567, %v1218, %v1222
      %v1225 = vsel %vm567, %v1212, %v1216
      %v1226 = vsel %vm567, %v1214, %v1218
      %v1227 = vsel %vm567, %v1208, %v1212
      %v1228 = vsel %vm567, %v1210, %v1214
      %v1229 = vsel %vm567, %v1220, %v1208
      %v1230 = vsel %vm567, %v1222, %v1210
      %v1231 = vmul.f32 %v1229, %v575
      %v1232 = vmul.f32 %v1227, %v576
      %v1233 = vmul.f32 %v1225, %v577
      %v1234 = vmul.f32 %v1223, %v578
      %v1235 = vmul.f32 %v1230, %v575
      %v1236 = vmul.f32 %v1228, %v576
      %v1237 = vmul.f32 %v1226, %v577
      %v1238 = vmul.f32 %v1224, %v578
      %1239 = vrot.lane.b32.xlu0 %v1103, 127
      %v1240 = vpop.permute.xlu0 %1239
      %1241 = vrot.lane.b32.xlu0 %v1107, 127
      %v1242 = vpop.permute.xlu0 %1241
      %1243 = vrot.lane.b32.xlu0 %v1104, 127
      %v1244 = vpop.permute.xlu0 %1243
      %1245 = vrot.lane.b32.xlu0 %v1108, 127
      %v1246 = vpop.permute.xlu0 %1245
      %1247 = vrot.lane.b32.xlu0 %v1105, 127
      %v1248 = vpop.permute.xlu0 %1247
      %1249 = vrot.lane.b32.xlu0 %v1109, 127
      %v1250 = vpop.permute.xlu0 %1249
      %1251 = vrot.lane.b32.xlu0 %v1106, 127
      %v1252 = vpop.permute.xlu0 %1251
      %1253 = vrot.lane.b32.xlu0 %v1110, 127
      %v1254 = vpop.permute.xlu0 %1253
      %v1255 = vsel %vm595, %v1248, %v1252
      %v1256 = vsel %vm595, %v1250, %v1254
      %v1257 = vsel %vm595, %v1244, %v1248
      %v1258 = vsel %vm595, %v1246, %v1250
      %v1259 = vsel %vm595, %v1240, %v1244
      %v1260 = vsel %vm595, %v1242, %v1246
      %v1261 = vsel %vm595, %v1252, %v1240
      %v1262 = vsel %vm595, %v1254, %v1242
      %v1263 = vmul.f32 %v1259, %v603
      %v1264 = vmul.f32 %v1257, %v604
      %v1265 = vmul.f32 %v1255, %v605
      %v1266 = vmul.f32 %v1261, %v606
      %v1267 = vmul.f32 %v1260, %v603
      %v1268 = vmul.f32 %v1258, %v604
      %v1269 = vmul.f32 %v1256, %v605
      %v1270 = vmul.f32 %v1262, %v606
      %1271 = vrot.lane.b32.xlu0 %v1103, 121
      %v1272 = vpop.permute.xlu0 %1271
      %1273 = vrot.lane.b32.xlu0 %v1107, 121
      %v1274 = vpop.permute.xlu0 %1273
      %1275 = vrot.lane.b32.xlu0 %v1104, 121
      %v1276 = vpop.permute.xlu0 %1275
      %1277 = vrot.lane.b32.xlu0 %v1108, 121
      %v1278 = vpop.permute.xlu0 %1277
      %1279 = vrot.lane.b32.xlu0 %v1105, 121
      %v1280 = vpop.permute.xlu0 %1279
      %1281 = vrot.lane.b32.xlu0 %v1109, 121
      %v1282 = vpop.permute.xlu0 %1281
      %1283 = vrot.lane.b32.xlu0 %v1106, 121
      %v1284 = vpop.permute.xlu0 %1283
      %1285 = vrot.lane.b32.xlu0 %v1110, 121
      %v1286 = vpop.permute.xlu0 %1285
      %v1287 = vsel %vm655, %v1280, %v1284
      %v1288 = vsel %vm655, %v1282, %v1286
      %v1289 = vsel %vm655, %v1276, %v1280
      %v1290 = vsel %vm655, %v1278, %v1282
      %v1291 = vsel %vm655, %v1272, %v1276
      %v1292 = vsel %vm655, %v1274, %v1278
      %v1293 = vsel %vm655, %v1284, %v1272
      %v1294 = vsel %vm655, %v1286, %v1274
      %v1295 = vmul.f32 %v1291, %v663
      %v1296 = vmul.f32 %v1289, %v664
      %v1297 = vmul.f32 %v1287, %v665
      %v1298 = vmul.f32 %v1293, %v666
      %v1299 = vmul.f32 %v1292, %v663
      %v1300 = vmul.f32 %v1290, %v664
      %v1301 = vmul.f32 %v1288, %v665
      %v1302 = vmul.f32 %v1294, %v666
      %1303 = vrot.lane.b32.xlu0 %v1103, 120
      %v1304 = vpop.permute.xlu0 %1303
      %1305 = vrot.lane.b32.xlu0 %v1107, 120
      %v1306 = vpop.permute.xlu0 %1305
      %1307 = vrot.lane.b32.xlu0 %v1104, 120
      %v1308 = vpop.permute.xlu0 %1307
      %1309 = vrot.lane.b32.xlu0 %v1108, 120
      %v1310 = vpop.permute.xlu0 %1309
      %1311 = vrot.lane.b32.xlu0 %v1105, 120
      %v1312 = vpop.permute.xlu0 %1311
      %1313 = vrot.lane.b32.xlu0 %v1109, 120
      %v1314 = vpop.permute.xlu0 %1313
      %1315 = vrot.lane.b32.xlu0 %v1106, 120
      %v1316 = vpop.permute.xlu0 %1315
      %1317 = vrot.lane.b32.xlu0 %v1110, 120
      %v1318 = vpop.permute.xlu0 %1317
      %v1319 = vsel %vm683, %v1312, %v1316
      %v1320 = vsel %vm683, %v1314, %v1318
      %v1321 = vsel %vm683, %v1308, %v1312
      %v1322 = vsel %vm683, %v1310, %v1314
      %v1323 = vsel %vm683, %v1304, %v1308
      %v1324 = vsel %vm683, %v1306, %v1310
      %v1325 = vsel %vm683, %v1316, %v1304
      %v1326 = vsel %vm683, %v1318, %v1306
      %v1327 = vmul.f32 %v1323, %v691
      %v1328 = vmul.f32 %v1321, %v692
      %v1329 = vmul.f32 %v1319, %v693
      %v1330 = vmul.f32 %v1325, %v694
      %v1331 = vmul.f32 %v1324, %v691
      %v1332 = vmul.f32 %v1322, %v692
      %v1333 = vmul.f32 %v1320, %v693
      %v1334 = vmul.f32 %v1326, %v694
      %1335 = vrot.lane.b32.xlu0 %v1103, 119
      %v1336 = vpop.permute.xlu0 %1335
      %1337 = vrot.lane.b32.xlu0 %v1107, 119
      %v1338 = vpop.permute.xlu0 %1337
      %1339 = vrot.lane.b32.xlu0 %v1104, 119
      %v1340 = vpop.permute.xlu0 %1339
      %1341 = vrot.lane.b32.xlu0 %v1108, 119
      %v1342 = vpop.permute.xlu0 %1341
      %1343 = vrot.lane.b32.xlu0 %v1105, 119
      %v1344 = vpop.permute.xlu0 %1343
      %1345 = vrot.lane.b32.xlu0 %v1109, 119
      %v1346 = vpop.permute.xlu0 %1345
      %1347 = vrot.lane.b32.xlu0 %v1106, 119
      %v1348 = vpop.permute.xlu0 %1347
      %1349 = vrot.lane.b32.xlu0 %v1110, 119
      %v1350 = vpop.permute.xlu0 %1349
      %v1351 = vsel %vm727, %v1344, %v1348
      %v1352 = vsel %vm727, %v1346, %v1350
      %v1353 = vsel %vm727, %v1340, %v1344
      %v1354 = vsel %vm727, %v1342, %v1346
      %v1355 = vsel %vm727, %v1336, %v1340
      %v1356 = vsel %vm727, %v1338, %v1342
      %v1357 = vsel %vm727, %v1348, %v1336
      %v1358 = vsel %vm727, %v1350, %v1338
      %v1359 = vmul.f32 %v1355, %v735
      %v1360 = vmul.f32 %v1353, %v736
      %v1361 = vmul.f32 %v1351, %v737
      %v1362 = vmul.f32 %v1357, %v738
      %v1363 = vmul.f32 %v1356, %v735
      %v1364 = vmul.f32 %v1354, %v736
      %v1365 = vmul.f32 %v1352, %v737
      %v1366 = vmul.f32 %v1358, %v738
      %v1367 = vld [vmem:[%s5] sm:$0xff]
      %v1368 = vld [vmem:[%s5 + $0x8] sm:$0xff]
      %v1369 = vld [vmem:[%s5 + $0x10] sm:$0xff]
      %v1370 = vld [vmem:[%s5 + $0x18] sm:$0xff]
      %v1371 = vpack.c.bf16 %v1139, %v1135
      %v1372 = vpack.c.bf16 %v1140, %v1136
      %v1373 = vpack.c.bf16 %v1141, %v1137
      %v1374 = vpack.c.bf16 %v1142, %v1138
      %v1375 = vpack.c.bf16 %v1171, %v1167
      %v1376 = vpack.c.bf16 %v1172, %v1168
      %v1377 = vpack.c.bf16 %v1173, %v1169
      %v1378 = vpack.c.bf16 %v1174, %v1170
      %v1379 = vpack.c.bf16 %v1203, %v1199
      %v1380 = vpack.c.bf16 %v1204, %v1200
      %v1381 = vpack.c.bf16 %v1205, %v1201
      %v1382 = vpack.c.bf16 %v1206, %v1202
      %v1383 = vpack.c.bf16 %v1235, %v1231
      %v1384 = vpack.c.bf16 %v1236, %v1232
      %v1385 = vpack.c.bf16 %v1237, %v1233
      %v1386 = vpack.c.bf16 %v1238, %v1234
      %v1387 = vpack.c.bf16 %v1107, %v1103
      %v1388 = vpack.c.bf16 %v1108, %v1104
      %v1389 = vpack.c.bf16 %v1109, %v1105
      %v1390 = vpack.c.bf16 %v1110, %v1106
      %v1391 = vpack.c.bf16 %v1267, %v1263
      %v1392 = vpack.c.bf16 %v1268, %v1264
      %v1393 = vpack.c.bf16 %v1269, %v1265
      %v1394 = vpack.c.bf16 %v1270, %v1266
      %v1395 = vpack.c.bf16 %v1299, %v1295
      %v1396 = vpack.c.bf16 %v1300, %v1296
      %v1397 = vpack.c.bf16 %v1301, %v1297
      %v1398 = vpack.c.bf16 %v1302, %v1298
      %v1399 = vpack.c.bf16 %v1331, %v1327
      %v1400 = vpack.c.bf16 %v1332, %v1328
      %v1401 = vpack.c.bf16 %v1333, %v1329
      %v1402 = vpack.c.bf16 %v1334, %v1330
      %v1403 = vpack.c.bf16 %v1363, %v1359
      %v1404 = vpack.c.bf16 %v1364, %v1360
      %v1405 = vpack.c.bf16 %v1365, %v1361
      %v1406 = vpack.c.bf16 %v1366, %v1362
      %v1407 = vld [vmem:[%s6] sm:$0xff]
      %v1408 = vld [vmem:[%s6 + $0x8] sm:$0xff]
      %v1409 = vld [vmem:[%s6 + $0x10] sm:$0xff]
      %v1410 = vld [vmem:[%s6 + $0x18] sm:$0xff]
      %1412 = vset.pattern.permute.xlu0 0
      %1413 = vperm.xlu0 %1412, %v1407
      %v1414 = vpop.permute.xlu0 %1413
      %1417 = vset.pattern.permute.xlu0 0
      %1418 = vperm.xlu0 %1417, %v1408
      %v1419 = vpop.permute.xlu0 %1418
      %1422 = vset.pattern.permute.xlu0 0
      %1423 = vperm.xlu0 %1422, %v1409
      %v1424 = vpop.permute.xlu0 %1423
      %1427 = vset.pattern.permute.xlu0 0
      %1428 = vperm.xlu0 %1427, %v1410
      %v1429 = vpop.permute.xlu0 %1428
      %v1435 = vunpack.c.l.b16 %v1367
      %v1436 = vunpack.c.h.b16 %v1367
      %v1437 = vunpack.c.l.b16 %v1368
      %v1438 = vunpack.c.h.b16 %v1368
      %v1439 = vunpack.c.l.b16 %v1369
      %v1440 = vunpack.c.h.b16 %v1369
      %v1441 = vunpack.c.l.b16 %v1370
      %v1442 = vunpack.c.h.b16 %v1370
      %v1443 = vpack.c.b16 %v1437, %v1435
      %v1444 = vpack.c.b16 %v1438, %v1436
      %v1445 = vpack.c.b16 %v1441, %v1439
      %v1446 = vpack.c.b16 %v1442, %v1440
      %vm1449 = vcmask 130048
      %v1451 = vsel %vm1449, %v1444, 0
      %v1454 = vsel %vm1449, %v1446, 0
      %1456 = vmatpush.bf16.msra.mxu0 %v1399
      %1457 = vmatpush.bf16.msra.mxu0 %v1395
      %1458 = vmatpush.bf16.msra.mxu0 %v1391
      %1459 = vmatpush.bf16.msra.mxu0 %v1387
      %1460 = vmatpush.bf16.msra.mxu0 %v1383
      %1461 = vmatpush.bf16.msra.mxu0 %v1379
      %1462 = vmatpush.bf16.msra.mxu0 %v1375
      %1463 = vmatpush.bf16.msra.mxu0 %v1371
      %1464 = vmatmul.bf16.gmra.mxu0 %v1443
      %v1465 = vpop.f32.mrf.mxu0
      %v1466 = vadd.f32 %v1414, %v1465
      %v1467 = vpop.f32.mrf.mxu0
      %v1468 = vadd.f32 %v1419, %v1467
      %1469 = vmatmul.bf16.gmra.mxu0 %v1445
      %v1470 = vpop.f32.mrf.mxu0
      %v1471 = vadd.f32 %v1424, %v1470
      %v1472 = vpop.f32.mrf.mxu0
      %v1473 = vadd.f32 %v1429, %v1472
      %1474 = vdwg.mxu0
      %1475 = vmatpush.bf16.msra.mxu0 0
      %1476 = vmatpush.bf16.msra.mxu0 0
      %1477 = vmatpush.bf16.msra.mxu0 0
      %1478 = vmatpush.bf16.msra.mxu0 0
      %1479 = vmatpush.bf16.msra.mxu0 0
      %1480 = vmatpush.bf16.msra.mxu0 0
      %1481 = vmatpush.bf16.msra.mxu0 0
      %1482 = vmatpush.bf16.msra.mxu0 %v1403
      %1483 = vmatmul.bf16.gmra.mxu0 %v1451
      %v1484 = vpop.f32.mrf.mxu0
      %v1485 = vadd.f32 %v1466, %v1484
      %v1486 = vpop.f32.mrf.mxu0
      %v1487 = vadd.f32 %v1468, %v1486
      %1488 = vmatmul.bf16.gmra.mxu0 %v1454
      %v1489 = vpop.f32.mrf.mxu0
      %v1490 = vadd.f32 %v1471, %v1489
      %v1491 = vpop.f32.mrf.mxu0
      %v1492 = vadd.f32 %v1473, %v1491
      %1493 = vdwg.mxu0
      %1494 = vmatpush.bf16.msra.mxu0 %v1400
      %1495 = vmatpush.bf16.msra.mxu0 %v1396
      %1496 = vmatpush.bf16.msra.mxu0 %v1392
      %1497 = vmatpush.bf16.msra.mxu0 %v1388
      %1498 = vmatpush.bf16.msra.mxu0 %v1384
      %1499 = vmatpush.bf16.msra.mxu0 %v1380
      %1500 = vmatpush.bf16.msra.mxu0 %v1376
      %1501 = vmatpush.bf16.msra.mxu0 %v1372
      %1502 = vmatmul.bf16.gmra.mxu0 %v1443
      %v1503 = vpop.f32.mrf.mxu0
      %v1504 = vadd.f32 %v1414, %v1503
      %v1505 = vpop.f32.mrf.mxu0
      %v1506 = vadd.f32 %v1419, %v1505
      %1507 = vmatmul.bf16.gmra.mxu0 %v1445
      %v1508 = vpop.f32.mrf.mxu0
      %v1509 = vadd.f32 %v1424, %v1508
      %v1510 = vpop.f32.mrf.mxu0
      %v1511 = vadd.f32 %v1429, %v1510
      %1512 = vdwg.mxu0
      %1513 = vmatpush.bf16.msra.mxu0 0
      %1514 = vmatpush.bf16.msra.mxu0 0
      %1515 = vmatpush.bf16.msra.mxu0 0
      %1516 = vmatpush.bf16.msra.mxu0 0
      %1517 = vmatpush.bf16.msra.mxu0 0
      %1518 = vmatpush.bf16.msra.mxu0 0
      %1519 = vmatpush.bf16.msra.mxu0 0
      %1520 = vmatpush.bf16.msra.mxu0 %v1404
      %1521 = vmatmul.bf16.gmra.mxu0 %v1451
      %v1522 = vpop.f32.mrf.mxu0
      %v1523 = vadd.f32 %v1504, %v1522
      %v1524 = vpop.f32.mrf.mxu0
      %v1525 = vadd.f32 %v1506, %v1524
      %1526 = vmatmul.bf16.gmra.mxu0 %v1454
      %v1527 = vpop.f32.mrf.mxu0
      %v1528 = vadd.f32 %v1509, %v1527
      %v1529 = vpop.f32.mrf.mxu0
      %v1530 = vadd.f32 %v1511, %v1529
      %1531 = vdwg.mxu0
      %1532 = vmatpush.bf16.msra.mxu0 %v1401
      %1533 = vmatpush.bf16.msra.mxu0 %v1397
      %1534 = vmatpush.bf16.msra.mxu0 %v1393
      %1535 = vmatpush.bf16.msra.mxu0 %v1389
      %1536 = vmatpush.bf16.msra.mxu0 %v1385
      %1537 = vmatpush.bf16.msra.mxu0 %v1381
      %1538 = vmatpush.bf16.msra.mxu0 %v1377
      %1539 = vmatpush.bf16.msra.mxu0 %v1373
      %1540 = vmatmul.bf16.gmra.mxu0 %v1443
      %v1541 = vpop.f32.mrf.mxu0
      %v1542 = vadd.f32 %v1414, %v1541
      %v1543 = vpop.f32.mrf.mxu0
      %v1544 = vadd.f32 %v1419, %v1543
      %1545 = vmatmul.bf16.gmra.mxu0 %v1445
      %v1546 = vpop.f32.mrf.mxu0
      %v1547 = vadd.f32 %v1424, %v1546
      %v1548 = vpop.f32.mrf.mxu0
      %v1549 = vadd.f32 %v1429, %v1548
      %1550 = vdwg.mxu0
      %1551 = vmatpush.bf16.msra.mxu0 0
      %1552 = vmatpush.bf16.msra.mxu0 0
      %1553 = vmatpush.bf16.msra.mxu0 0
      %1554 = vmatpush.bf16.msra.mxu0 0
      %1555 = vmatpush.bf16.msra.mxu0 0
      %1556 = vmatpush.bf16.msra.mxu0 0
      %1557 = vmatpush.bf16.msra.mxu0 0
      %1558 = vmatpush.bf16.msra.mxu0 %v1405
      %1559 = vmatmul.bf16.gmra.mxu0 %v1451
      %v1560 = vpop.f32.mrf.mxu0
      %v1561 = vadd.f32 %v1542, %v1560
      %v1562 = vpop.f32.mrf.mxu0
      %v1563 = vadd.f32 %v1544, %v1562
      %1564 = vmatmul.bf16.gmra.mxu0 %v1454
      %v1565 = vpop.f32.mrf.mxu0
      %v1566 = vadd.f32 %v1547, %v1565
      %v1567 = vpop.f32.mrf.mxu0
      %v1568 = vadd.f32 %v1549, %v1567
      %1569 = vdwg.mxu0
      %1570 = vmatpush.bf16.msra.mxu0 %v1402
      %1571 = vmatpush.bf16.msra.mxu0 %v1398
      %1572 = vmatpush.bf16.msra.mxu0 %v1394
      %1573 = vmatpush.bf16.msra.mxu0 %v1390
      %1574 = vmatpush.bf16.msra.mxu0 %v1386
      %1575 = vmatpush.bf16.msra.mxu0 %v1382
      %1576 = vmatpush.bf16.msra.mxu0 %v1378
      %1577 = vmatpush.bf16.msra.mxu0 %v1374
      %1578 = vmatmul.bf16.gmra.mxu0 %v1443
      %v1579 = vpop.f32.mrf.mxu0
      %v1580 = vadd.f32 %v1414, %v1579
      %v1581 = vpop.f32.mrf.mxu0
      %v1582 = vadd.f32 %v1419, %v1581
      %1583 = vmatmul.bf16.gmra.mxu0 %v1445
      %v1584 = vpop.f32.mrf.mxu0
      %v1585 = vadd.f32 %v1424, %v1584
      %v1586 = vpop.f32.mrf.mxu0
      %v1587 = vadd.f32 %v1429, %v1586
      %1588 = vdwg.mxu0
      %1589 = vmatpush.bf16.msra.mxu0 0
      %1590 = vmatpush.bf16.msra.mxu0 0
      %1591 = vmatpush.bf16.msra.mxu0 0
      %1592 = vmatpush.bf16.msra.mxu0 0
      %1593 = vmatpush.bf16.msra.mxu0 0
      %1594 = vmatpush.bf16.msra.mxu0 0
      %1595 = vmatpush.bf16.msra.mxu0 0
      %1596 = vmatpush.bf16.msra.mxu0 %v1406
      %1597 = vmatmul.bf16.gmra.mxu0 %v1451
      %v1598 = vpop.f32.mrf.mxu0
      %v1599 = vadd.f32 %v1580, %v1598
      %v1600 = vpop.f32.mrf.mxu0
      %v1601 = vadd.f32 %v1582, %v1600
      %1602 = vmatmul.bf16.gmra.mxu0 %v1454
      %v1603 = vpop.f32.mrf.mxu0
      %v1604 = vadd.f32 %v1585, %v1603
      %v1605 = vpop.f32.mrf.mxu0
      %v1606 = vadd.f32 %v1587, %v1605
      %1607 = vdwg.mxu0
      %v1608 = vmax.f32 %v1485, 0.0
      %v1609 = vmax.f32 %v1523, 0.0
      %v1610 = vmax.f32 %v1561, 0.0
      %v1611 = vmax.f32 %v1599, 0.0
      %v1612 = vmax.f32 %v1487, 0.0
      %v1613 = vmax.f32 %v1525, 0.0
      %v1614 = vmax.f32 %v1563, 0.0
      %v1615 = vmax.f32 %v1601, 0.0
      %v1616 = vmax.f32 %v1490, 0.0
      %v1617 = vmax.f32 %v1528, 0.0
      %v1618 = vmax.f32 %v1566, 0.0
      %v1619 = vmax.f32 %v1604, 0.0
      %v1620 = vmax.f32 %v1492, 0.0
      %v1621 = vmax.f32 %v1530, 0.0
      %v1622 = vmax.f32 %v1568, 0.0
      %v1623 = vmax.f32 %v1606, 0.0
      %v1624 = vld [vmem:[%s12] sm:$0xf]
      %v1626 = vperm.slane %v1624, 0
      %v1627 = vperm.slane %v1624, 1
      %v1628 = vperm.slane %v1624, 2
      %v1629 = vperm.slane %v1624, 3
      %v1634 = vmul.f32 %v1608, %v1626
      %v1635 = vmul.f32 %v1609, %v1627
      %v1636 = vmul.f32 %v1610, %v1628
      %v1637 = vmul.f32 %v1611, %v1629
      %v1638 = vmul.f32 %v1612, %v1626
      %v1639 = vmul.f32 %v1613, %v1627
      %v1640 = vmul.f32 %v1614, %v1628
      %v1641 = vmul.f32 %v1615, %v1629
      %v1642 = vmul.f32 %v1616, %v1626
      %v1643 = vmul.f32 %v1617, %v1627
      %v1644 = vmul.f32 %v1618, %v1628
      %v1645 = vmul.f32 %v1619, %v1629
      %v1646 = vmul.f32 %v1620, %v1626
      %v1647 = vmul.f32 %v1621, %v1627
      %v1648 = vmul.f32 %v1622, %v1628
      %v1649 = vmul.f32 %v1623, %v1629
      %1650 = vrot.lane.b32.xlu0 %v1634, 9
      %v1651 = vpop.permute.xlu0 %1650
      %1652 = vrot.lane.b32.xlu0 %v1638, 9
      %v1653 = vpop.permute.xlu0 %1652
      %1654 = vrot.lane.b32.xlu0 %v1642, 9
      %v1655 = vpop.permute.xlu0 %1654
      %1656 = vrot.lane.b32.xlu0 %v1646, 9
      %v1657 = vpop.permute.xlu0 %1656
      %1658 = vrot.lane.b32.xlu0 %v1635, 9
      %v1659 = vpop.permute.xlu0 %1658
      %1660 = vrot.lane.b32.xlu0 %v1639, 9
      %v1661 = vpop.permute.xlu0 %1660
      %1662 = vrot.lane.b32.xlu0 %v1643, 9
      %v1663 = vpop.permute.xlu0 %1662
      %1664 = vrot.lane.b32.xlu0 %v1647, 9
      %v1665 = vpop.permute.xlu0 %1664
      %1666 = vrot.lane.b32.xlu0 %v1636, 9
      %v1667 = vpop.permute.xlu0 %1666
      %1668 = vrot.lane.b32.xlu0 %v1640, 9
      %v1669 = vpop.permute.xlu0 %1668
      %1670 = vrot.lane.b32.xlu0 %v1644, 9
      %v1671 = vpop.permute.xlu0 %1670
      %1672 = vrot.lane.b32.xlu0 %v1648, 9
      %v1673 = vpop.permute.xlu0 %1672
      %1674 = vrot.lane.b32.xlu0 %v1637, 9
      %v1675 = vpop.permute.xlu0 %1674
      %1676 = vrot.lane.b32.xlu0 %v1641, 9
      %v1677 = vpop.permute.xlu0 %1676
      %1678 = vrot.lane.b32.xlu0 %v1645, 9
      %v1679 = vpop.permute.xlu0 %1678
      %1680 = vrot.lane.b32.xlu0 %v1649, 9
      %v1681 = vpop.permute.xlu0 %1680
      %v1682 = vsel %vm468, %v1667, %v1675
      %v1683 = vsel %vm468, %v1669, %v1677
      %v1684 = vsel %vm468, %v1671, %v1679
      %v1685 = vsel %vm468, %v1673, %v1681
      %v1686 = vsel %vm468, %v1659, %v1667
      %v1687 = vsel %vm468, %v1661, %v1669
      %v1688 = vsel %vm468, %v1663, %v1671
      %v1689 = vsel %vm468, %v1665, %v1673
      %v1690 = vsel %vm468, %v1651, %v1659
      %v1691 = vsel %vm468, %v1653, %v1661
      %v1692 = vsel %vm468, %v1655, %v1663
      %v1693 = vsel %vm468, %v1657, %v1665
      %v1694 = vsel %vm468, %v1675, %v1651
      %v1695 = vsel %vm468, %v1677, %v1653
      %v1696 = vsel %vm468, %v1679, %v1655
      %v1697 = vsel %vm468, %v1681, %v1657
      %v1698 = vmul.f32 %v1694, %v475
      %v1699 = vmul.f32 %v1690, %v476
      %v1700 = vmul.f32 %v1686, %v477
      %v1701 = vmul.f32 %v1682, %v478
      %v1702 = vmul.f32 %v1695, %v475
      %v1703 = vmul.f32 %v1691, %v476
      %v1704 = vmul.f32 %v1687, %v477
      %v1705 = vmul.f32 %v1683, %v478
      %v1706 = vmul.f32 %v1696, %v475
      %v1707 = vmul.f32 %v1692, %v476
      %v1708 = vmul.f32 %v1688, %v477
      %v1709 = vmul.f32 %v1684, %v478
      %v1710 = vmul.f32 %v1697, %v475
      %v1711 = vmul.f32 %v1693, %v476
      %v1712 = vmul.f32 %v1689, %v477
      %v1713 = vmul.f32 %v1685, %v478
      %1714 = vrot.lane.b32.xlu0 %v1634, 8
      %v1715 = vpop.permute.xlu0 %1714
      %1716 = vrot.lane.b32.xlu0 %v1638, 8
      %v1717 = vpop.permute.xlu0 %1716
      %1718 = vrot.lane.b32.xlu0 %v1642, 8
      %v1719 = vpop.permute.xlu0 %1718
      %1720 = vrot.lane.b32.xlu0 %v1646, 8
      %v1721 = vpop.permute.xlu0 %1720
      %1722 = vrot.lane.b32.xlu0 %v1635, 8
      %v1723 = vpop.permute.xlu0 %1722
      %1724 = vrot.lane.b32.xlu0 %v1639, 8
      %v1725 = vpop.permute.xlu0 %1724
      %1726 = vrot.lane.b32.xlu0 %v1643, 8
      %v1727 = vpop.permute.xlu0 %1726
      %1728 = vrot.lane.b32.xlu0 %v1647, 8
      %v1729 = vpop.permute.xlu0 %1728
      %1730 = vrot.lane.b32.xlu0 %v1636, 8
      %v1731 = vpop.permute.xlu0 %1730
      %1732 = vrot.lane.b32.xlu0 %v1640, 8
      %v1733 = vpop.permute.xlu0 %1732
      %1734 = vrot.lane.b32.xlu0 %v1644, 8
      %v1735 = vpop.permute.xlu0 %1734
      %1736 = vrot.lane.b32.xlu0 %v1648, 8
      %v1737 = vpop.permute.xlu0 %1736
      %1738 = vrot.lane.b32.xlu0 %v1637, 8
      %v1739 = vpop.permute.xlu0 %1738
      %1740 = vrot.lane.b32.xlu0 %v1641, 8
      %v1741 = vpop.permute.xlu0 %1740
      %1742 = vrot.lane.b32.xlu0 %v1645, 8
      %v1743 = vpop.permute.xlu0 %1742
      %1744 = vrot.lane.b32.xlu0 %v1649, 8
      %v1745 = vpop.permute.xlu0 %1744
      %v1746 = vsel %vm495, %v1731, %v1739
      %v1747 = vsel %vm495, %v1733, %v1741
      %v1748 = vsel %vm495, %v1735, %v1743
      %v1749 = vsel %vm495, %v1737, %v1745
      %v1750 = vsel %vm495, %v1723, %v1731
      %v1751 = vsel %vm495, %v1725, %v1733
      %v1752 = vsel %vm495, %v1727, %v1735
      %v1753 = vsel %vm495, %v1729, %v1737
      %v1754 = vsel %vm495, %v1715, %v1723
      %v1755 = vsel %vm495, %v1717, %v1725
      %v1756 = vsel %vm495, %v1719, %v1727
      %v1757 = vsel %vm495, %v1721, %v1729
      %v1758 = vsel %vm495, %v1739, %v1715
      %v1759 = vsel %vm495, %v1741, %v1717
      %v1760 = vsel %vm495, %v1743, %v1719
      %v1761 = vsel %vm495, %v1745, %v1721
      %v1762 = vmul.f32 %v1758, %v503
      %v1763 = vmul.f32 %v1754, %v504
      %v1764 = vmul.f32 %v1750, %v505
      %v1765 = vmul.f32 %v1746, %v506
      %v1766 = vmul.f32 %v1759, %v503
      %v1767 = vmul.f32 %v1755, %v504
      %v1768 = vmul.f32 %v1751, %v505
      %v1769 = vmul.f32 %v1747, %v506
      %v1770 = vmul.f32 %v1760, %v503
      %v1771 = vmul.f32 %v1756, %v504
      %v1772 = vmul.f32 %v1752, %v505
      %v1773 = vmul.f32 %v1748, %v506
      %v1774 = vmul.f32 %v1761, %v503
      %v1775 = vmul.f32 %v1757, %v504
      %v1776 = vmul.f32 %v1753, %v505
      %v1777 = vmul.f32 %v1749, %v506
      %1778 = vrot.lane.b32.xlu0 %v1634, 7
      %v1779 = vpop.permute.xlu0 %1778
      %1780 = vrot.lane.b32.xlu0 %v1638, 7
      %v1781 = vpop.permute.xlu0 %1780
      %1782 = vrot.lane.b32.xlu0 %v1642, 7
      %v1783 = vpop.permute.xlu0 %1782
      %1784 = vrot.lane.b32.xlu0 %v1646, 7
      %v1785 = vpop.permute.xlu0 %1784
      %1786 = vrot.lane.b32.xlu0 %v1635, 7
      %v1787 = vpop.permute.xlu0 %1786
      %1788 = vrot.lane.b32.xlu0 %v1639, 7
      %v1789 = vpop.permute.xlu0 %1788
      %1790 = vrot.lane.b32.xlu0 %v1643, 7
      %v1791 = vpop.permute.xlu0 %1790
      %1792 = vrot.lane.b32.xlu0 %v1647, 7
      %v1793 = vpop.permute.xlu0 %1792
      %1794 = vrot.lane.b32.xlu0 %v1636, 7
      %v1795 = vpop.permute.xlu0 %1794
      %1796 = vrot.lane.b32.xlu0 %v1640, 7
      %v1797 = vpop.permute.xlu0 %1796
      %1798 = vrot.lane.b32.xlu0 %v1644, 7
      %v1799 = vpop.permute.xlu0 %1798
      %1800 = vrot.lane.b32.xlu0 %v1648, 7
      %v1801 = vpop.permute.xlu0 %1800
      %1802 = vrot.lane.b32.xlu0 %v1637, 7
      %v1803 = vpop.permute.xlu0 %1802
      %1804 = vrot.lane.b32.xlu0 %v1641, 7
      %v1805 = vpop.permute.xlu0 %1804
      %1806 = vrot.lane.b32.xlu0 %v1645, 7
      %v1807 = vpop.permute.xlu0 %1806
      %1808 = vrot.lane.b32.xlu0 %v1649, 7
      %v1809 = vpop.permute.xlu0 %1808
      %v1810 = vsel %vm539, %v1795, %v1803
      %v1811 = vsel %vm539, %v1797, %v1805
      %v1812 = vsel %vm539, %v1799, %v1807
      %v1813 = vsel %vm539, %v1801, %v1809
      %v1814 = vsel %vm539, %v1787, %v1795
      %v1815 = vsel %vm539, %v1789, %v1797
      %v1816 = vsel %vm539, %v1791, %v1799
      %v1817 = vsel %vm539, %v1793, %v1801
      %v1818 = vsel %vm539, %v1779, %v1787
      %v1819 = vsel %vm539, %v1781, %v1789
      %v1820 = vsel %vm539, %v1783, %v1791
      %v1821 = vsel %vm539, %v1785, %v1793
      %v1822 = vsel %vm539, %v1803, %v1779
      %v1823 = vsel %vm539, %v1805, %v1781
      %v1824 = vsel %vm539, %v1807, %v1783
      %v1825 = vsel %vm539, %v1809, %v1785
      %v1826 = vmul.f32 %v1822, %v547
      %v1827 = vmul.f32 %v1818, %v548
      %v1828 = vmul.f32 %v1814, %v549
      %v1829 = vmul.f32 %v1810, %v550
      %v1830 = vmul.f32 %v1823, %v547
      %v1831 = vmul.f32 %v1819, %v548
      %v1832 = vmul.f32 %v1815, %v549
      %v1833 = vmul.f32 %v1811, %v550
      %v1834 = vmul.f32 %v1824, %v547
      %v1835 = vmul.f32 %v1820, %v548
      %v1836 = vmul.f32 %v1816, %v549
      %v1837 = vmul.f32 %v1812, %v550
      %v1838 = vmul.f32 %v1825, %v547
      %v1839 = vmul.f32 %v1821, %v548
      %v1840 = vmul.f32 %v1817, %v549
      %v1841 = vmul.f32 %v1813, %v550
      %1842 = vrot.lane.b32.xlu0 %v1634, 1
      %v1843 = vpop.permute.xlu0 %1842
      %1844 = vrot.lane.b32.xlu0 %v1638, 1
      %v1845 = vpop.permute.xlu0 %1844
      %1846 = vrot.lane.b32.xlu0 %v1642, 1
      %v1847 = vpop.permute.xlu0 %1846
      %1848 = vrot.lane.b32.xlu0 %v1646, 1
      %v1849 = vpop.permute.xlu0 %1848
      %1850 = vrot.lane.b32.xlu0 %v1635, 1
      %v1851 = vpop.permute.xlu0 %1850
      %1852 = vrot.lane.b32.xlu0 %v1639, 1
      %v1853 = vpop.permute.xlu0 %1852
      %1854 = vrot.lane.b32.xlu0 %v1643, 1
      %v1855 = vpop.permute.xlu0 %1854
      %1856 = vrot.lane.b32.xlu0 %v1647, 1
      %v1857 = vpop.permute.xlu0 %1856
      %1858 = vrot.lane.b32.xlu0 %v1636, 1
      %v1859 = vpop.permute.xlu0 %1858
      %1860 = vrot.lane.b32.xlu0 %v1640, 1
      %v1861 = vpop.permute.xlu0 %1860
      %1862 = vrot.lane.b32.xlu0 %v1644, 1
      %v1863 = vpop.permute.xlu0 %1862
      %1864 = vrot.lane.b32.xlu0 %v1648, 1
      %v1865 = vpop.permute.xlu0 %1864
      %1866 = vrot.lane.b32.xlu0 %v1637, 1
      %v1867 = vpop.permute.xlu0 %1866
      %1868 = vrot.lane.b32.xlu0 %v1641, 1
      %v1869 = vpop.permute.xlu0 %1868
      %1870 = vrot.lane.b32.xlu0 %v1645, 1
      %v1871 = vpop.permute.xlu0 %1870
      %1872 = vrot.lane.b32.xlu0 %v1649, 1
      %v1873 = vpop.permute.xlu0 %1872
      %v1874 = vsel %vm567, %v1859, %v1867
      %v1875 = vsel %vm567, %v1861, %v1869
      %v1876 = vsel %vm567, %v1863, %v1871
      %v1877 = vsel %vm567, %v1865, %v1873
      %v1878 = vsel %vm567, %v1851, %v1859
      %v1879 = vsel %vm567, %v1853, %v1861
      %v1880 = vsel %vm567, %v1855, %v1863
      %v1881 = vsel %vm567, %v1857, %v1865
      %v1882 = vsel %vm567, %v1843, %v1851
      %v1883 = vsel %vm567, %v1845, %v1853
      %v1884 = vsel %vm567, %v1847, %v1855
      %v1885 = vsel %vm567, %v1849, %v1857
      %v1886 = vsel %vm567, %v1867, %v1843
      %v1887 = vsel %vm567, %v1869, %v1845
      %v1888 = vsel %vm567, %v1871, %v1847
      %v1889 = vsel %vm567, %v1873, %v1849
      %v1890 = vmul.f32 %v1886, %v575
      %v1891 = vmul.f32 %v1882, %v576
      %v1892 = vmul.f32 %v1878, %v577
      %v1893 = vmul.f32 %v1874, %v578
      %v1894 = vmul.f32 %v1887, %v575
      %v1895 = vmul.f32 %v1883, %v576
      %v1896 = vmul.f32 %v1879, %v577
      %v1897 = vmul.f32 %v1875, %v578
      %v1898 = vmul.f32 %v1888, %v575
      %v1899 = vmul.f32 %v1884, %v576
      %v1900 = vmul.f32 %v1880, %v577
      %v1901 = vmul.f32 %v1876, %v578
      %v1902 = vmul.f32 %v1889, %v575
      %v1903 = vmul.f32 %v1885, %v576
      %v1904 = vmul.f32 %v1881, %v577
      %v1905 = vmul.f32 %v1877, %v578
      %1906 = vrot.lane.b32.xlu0 %v1634, 127
      %v1907 = vpop.permute.xlu0 %1906
      %1908 = vrot.lane.b32.xlu0 %v1638, 127
      %v1909 = vpop.permute.xlu0 %1908
      %1910 = vrot.lane.b32.xlu0 %v1642, 127
      %v1911 = vpop.permute.xlu0 %1910
      %1912 = vrot.lane.b32.xlu0 %v1646, 127
      %v1913 = vpop.permute.xlu0 %1912
      %1914 = vrot.lane.b32.xlu0 %v1635, 127
      %v1915 = vpop.permute.xlu0 %1914
      %1916 = vrot.lane.b32.xlu0 %v1639, 127
      %v1917 = vpop.permute.xlu0 %1916
      %1918 = vrot.lane.b32.xlu0 %v1643, 127
      %v1919 = vpop.permute.xlu0 %1918
      %1920 = vrot.lane.b32.xlu0 %v1647, 127
      %v1921 = vpop.permute.xlu0 %1920
      %1922 = vrot.lane.b32.xlu0 %v1636, 127
      %v1923 = vpop.permute.xlu0 %1922
      %1924 = vrot.lane.b32.xlu0 %v1640, 127
      %v1925 = vpop.permute.xlu0 %1924
      %1926 = vrot.lane.b32.xlu0 %v1644, 127
      %v1927 = vpop.permute.xlu0 %1926
      %1928 = vrot.lane.b32.xlu0 %v1648, 127
      %v1929 = vpop.permute.xlu0 %1928
      %1930 = vrot.lane.b32.xlu0 %v1637, 127
      %v1931 = vpop.permute.xlu0 %1930
      %1932 = vrot.lane.b32.xlu0 %v1641, 127
      %v1933 = vpop.permute.xlu0 %1932
      %1934 = vrot.lane.b32.xlu0 %v1645, 127
      %v1935 = vpop.permute.xlu0 %1934
      %1936 = vrot.lane.b32.xlu0 %v1649, 127
      %v1937 = vpop.permute.xlu0 %1936
      %v1938 = vsel %vm595, %v1923, %v1931
      %v1939 = vsel %vm595, %v1925, %v1933
      %v1940 = vsel %vm595, %v1927, %v1935
      %v1941 = vsel %vm595, %v1929, %v1937
      %v1942 = vsel %vm595, %v1915, %v1923
      %v1943 = vsel %vm595, %v1917, %v1925
      %v1944 = vsel %vm595, %v1919, %v1927
      %v1945 = vsel %vm595, %v1921, %v1929
      %v1946 = vsel %vm595, %v1907, %v1915
      %v1947 = vsel %vm595, %v1909, %v1917
      %v1948 = vsel %vm595, %v1911, %v1919
      %v1949 = vsel %vm595, %v1913, %v1921
      %v1950 = vsel %vm595, %v1931, %v1907
      %v1951 = vsel %vm595, %v1933, %v1909
      %v1952 = vsel %vm595, %v1935, %v1911
      %v1953 = vsel %vm595, %v1937, %v1913
      %v1954 = vmul.f32 %v1946, %v603
      %v1955 = vmul.f32 %v1942, %v604
      %v1956 = vmul.f32 %v1938, %v605
      %v1957 = vmul.f32 %v1950, %v606
      %v1958 = vmul.f32 %v1947, %v603
      %v1959 = vmul.f32 %v1943, %v604
      %v1960 = vmul.f32 %v1939, %v605
      %v1961 = vmul.f32 %v1951, %v606
      %v1962 = vmul.f32 %v1948, %v603
      %v1963 = vmul.f32 %v1944, %v604
      %v1964 = vmul.f32 %v1940, %v605
      %v1965 = vmul.f32 %v1952, %v606
      %v1966 = vmul.f32 %v1949, %v603
      %v1967 = vmul.f32 %v1945, %v604
      %v1968 = vmul.f32 %v1941, %v605
      %v1969 = vmul.f32 %v1953, %v606
      %1970 = vrot.lane.b32.xlu0 %v1634, 121
      %v1971 = vpop.permute.xlu0 %1970
      %1972 = vrot.lane.b32.xlu0 %v1638, 121
      %v1973 = vpop.permute.xlu0 %1972
      %1974 = vrot.lane.b32.xlu0 %v1642, 121
      %v1975 = vpop.permute.xlu0 %1974
      %1976 = vrot.lane.b32.xlu0 %v1646, 121
      %v1977 = vpop.permute.xlu0 %1976
      %1978 = vrot.lane.b32.xlu0 %v1635, 121
      %v1979 = vpop.permute.xlu0 %1978
      %1980 = vrot.lane.b32.xlu0 %v1639, 121
      %v1981 = vpop.permute.xlu0 %1980
      %1982 = vrot.lane.b32.xlu0 %v1643, 121
      %v1983 = vpop.permute.xlu0 %1982
      %1984 = vrot.lane.b32.xlu0 %v1647, 121
      %v1985 = vpop.permute.xlu0 %1984
      %1986 = vrot.lane.b32.xlu0 %v1636, 121
      %v1987 = vpop.permute.xlu0 %1986
      %1988 = vrot.lane.b32.xlu0 %v1640, 121
      %v1989 = vpop.permute.xlu0 %1988
      %1990 = vrot.lane.b32.xlu0 %v1644, 121
      %v1991 = vpop.permute.xlu0 %1990
      %1992 = vrot.lane.b32.xlu0 %v1648, 121
      %v1993 = vpop.permute.xlu0 %1992
      %1994 = vrot.lane.b32.xlu0 %v1637, 121
      %v1995 = vpop.permute.xlu0 %1994
      %1996 = vrot.lane.b32.xlu0 %v1641, 121
      %v1997 = vpop.permute.xlu0 %1996
      %1998 = vrot.lane.b32.xlu0 %v1645, 121
      %v1999 = vpop.permute.xlu0 %1998
      %2000 = vrot.lane.b32.xlu0 %v1649, 121
      %v2001 = vpop.permute.xlu0 %2000
      %v2002 = vsel %vm655, %v1987, %v1995
      %v2003 = vsel %vm655, %v1989, %v1997
      %v2004 = vsel %vm655, %v1991, %v1999
      %v2005 = vsel %vm655, %v1993, %v2001
      %v2006 = vsel %vm655, %v1979, %v1987
      %v2007 = vsel %vm655, %v1981, %v1989
      %v2008 = vsel %vm655, %v1983, %v1991
      %v2009 = vsel %vm655, %v1985, %v1993
      %v2010 = vsel %vm655, %v1971, %v1979
      %v2011 = vsel %vm655, %v1973, %v1981
      %v2012 = vsel %vm655, %v1975, %v1983
      %v2013 = vsel %vm655, %v1977, %v1985
      %v2014 = vsel %vm655, %v1995, %v1971
      %v2015 = vsel %vm655, %v1997, %v1973
      %v2016 = vsel %vm655, %v1999, %v1975
      %v2017 = vsel %vm655, %v2001, %v1977
      %v2018 = vmul.f32 %v2010, %v663
      %v2019 = vmul.f32 %v2006, %v664
      %v2020 = vmul.f32 %v2002, %v665
      %v2021 = vmul.f32 %v2014, %v666
      %v2022 = vmul.f32 %v2011, %v663
      %v2023 = vmul.f32 %v2007, %v664
      %v2024 = vmul.f32 %v2003, %v665
      %v2025 = vmul.f32 %v2015, %v666
      %v2026 = vmul.f32 %v2012, %v663
      %v2027 = vmul.f32 %v2008, %v664
      %v2028 = vmul.f32 %v2004, %v665
      %v2029 = vmul.f32 %v2016, %v666
      %v2030 = vmul.f32 %v2013, %v663
      %v2031 = vmul.f32 %v2009, %v664
      %v2032 = vmul.f32 %v2005, %v665
      %v2033 = vmul.f32 %v2017, %v666
      %2034 = vrot.lane.b32.xlu0 %v1634, 120
      %v2035 = vpop.permute.xlu0 %2034
      %2036 = vrot.lane.b32.xlu0 %v1638, 120
      %v2037 = vpop.permute.xlu0 %2036
      %2038 = vrot.lane.b32.xlu0 %v1642, 120
      %v2039 = vpop.permute.xlu0 %2038
      %2040 = vrot.lane.b32.xlu0 %v1646, 120
      %v2041 = vpop.permute.xlu0 %2040
      %2042 = vrot.lane.b32.xlu0 %v1635, 120
      %v2043 = vpop.permute.xlu0 %2042
      %2044 = vrot.lane.b32.xlu0 %v1639, 120
      %v2045 = vpop.permute.xlu0 %2044
      %2046 = vrot.lane.b32.xlu0 %v1643, 120
      %v2047 = vpop.permute.xlu0 %2046
      %2048 = vrot.lane.b32.xlu0 %v1647, 120
      %v2049 = vpop.permute.xlu0 %2048
      %2050 = vrot.lane.b32.xlu0 %v1636, 120
      %v2051 = vpop.permute.xlu0 %2050
      %2052 = vrot.lane.b32.xlu0 %v1640, 120
      %v2053 = vpop.permute.xlu0 %2052
      %2054 = vrot.lane.b32.xlu0 %v1644, 120
      %v2055 = vpop.permute.xlu0 %2054
      %2056 = vrot.lane.b32.xlu0 %v1648, 120
      %v2057 = vpop.permute.xlu0 %2056
      %2058 = vrot.lane.b32.xlu0 %v1637, 120
      %v2059 = vpop.permute.xlu0 %2058
      %2060 = vrot.lane.b32.xlu0 %v1641, 120
      %v2061 = vpop.permute.xlu0 %2060
      %2062 = vrot.lane.b32.xlu0 %v1645, 120
      %v2063 = vpop.permute.xlu0 %2062
      %2064 = vrot.lane.b32.xlu0 %v1649, 120
      %v2065 = vpop.permute.xlu0 %2064
      %v2066 = vsel %vm683, %v2051, %v2059
      %v2067 = vsel %vm683, %v2053, %v2061
      %v2068 = vsel %vm683, %v2055, %v2063
      %v2069 = vsel %vm683, %v2057, %v2065
      %v2070 = vsel %vm683, %v2043, %v2051
      %v2071 = vsel %vm683, %v2045, %v2053
      %v2072 = vsel %vm683, %v2047, %v2055
      %v2073 = vsel %vm683, %v2049, %v2057
      %v2074 = vsel %vm683, %v2035, %v2043
      %v2075 = vsel %vm683, %v2037, %v2045
      %v2076 = vsel %vm683, %v2039, %v2047
      %v2077 = vsel %vm683, %v2041, %v2049
      %v2078 = vsel %vm683, %v2059, %v2035
      %v2079 = vsel %vm683, %v2061, %v2037
      %v2080 = vsel %vm683, %v2063, %v2039
      %v2081 = vsel %vm683, %v2065, %v2041
      %v2082 = vmul.f32 %v2074, %v691
      %v2083 = vmul.f32 %v2070, %v692
      %v2084 = vmul.f32 %v2066, %v693
      %v2085 = vmul.f32 %v2078, %v694
      %v2086 = vmul.f32 %v2075, %v691
      %v2087 = vmul.f32 %v2071, %v692
      %v2088 = vmul.f32 %v2067, %v693
      %v2089 = vmul.f32 %v2079, %v694
      %v2090 = vmul.f32 %v2076, %v691
      %v2091 = vmul.f32 %v2072, %v692
      %v2092 = vmul.f32 %v2068, %v693
      %v2093 = vmul.f32 %v2080, %v694
      %v2094 = vmul.f32 %v2077, %v691
      %v2095 = vmul.f32 %v2073, %v692
      %v2096 = vmul.f32 %v2069, %v693
      %v2097 = vmul.f32 %v2081, %v694
      %2098 = vrot.lane.b32.xlu0 %v1634, 119
      %v2099 = vpop.permute.xlu0 %2098
      %2100 = vrot.lane.b32.xlu0 %v1638, 119
      %v2101 = vpop.permute.xlu0 %2100
      %2102 = vrot.lane.b32.xlu0 %v1642, 119
      %v2103 = vpop.permute.xlu0 %2102
      %2104 = vrot.lane.b32.xlu0 %v1646, 119
      %v2105 = vpop.permute.xlu0 %2104
      %2106 = vrot.lane.b32.xlu0 %v1635, 119
      %v2107 = vpop.permute.xlu0 %2106
      %2108 = vrot.lane.b32.xlu0 %v1639, 119
      %v2109 = vpop.permute.xlu0 %2108
      %2110 = vrot.lane.b32.xlu0 %v1643, 119
      %v2111 = vpop.permute.xlu0 %2110
      %2112 = vrot.lane.b32.xlu0 %v1647, 119
      %v2113 = vpop.permute.xlu0 %2112
      %2114 = vrot.lane.b32.xlu0 %v1636, 119
      %v2115 = vpop.permute.xlu0 %2114
      %2116 = vrot.lane.b32.xlu0 %v1640, 119
      %v2117 = vpop.permute.xlu0 %2116
      %2118 = vrot.lane.b32.xlu0 %v1644, 119
      %v2119 = vpop.permute.xlu0 %2118
      %2120 = vrot.lane.b32.xlu0 %v1648, 119
      %v2121 = vpop.permute.xlu0 %2120
      %2122 = vrot.lane.b32.xlu0 %v1637, 119
      %v2123 = vpop.permute.xlu0 %2122
      %2124 = vrot.lane.b32.xlu0 %v1641, 119
      %v2125 = vpop.permute.xlu0 %2124
      %2126 = vrot.lane.b32.xlu0 %v1645, 119
      %v2127 = vpop.permute.xlu0 %2126
      %2128 = vrot.lane.b32.xlu0 %v1649, 119
      %v2129 = vpop.permute.xlu0 %2128
      %v2130 = vsel %vm727, %v2115, %v2123
      %v2131 = vsel %vm727, %v2117, %v2125
      %v2132 = vsel %vm727, %v2119, %v2127
      %v2133 = vsel %vm727, %v2121, %v2129
      %v2134 = vsel %vm727, %v2107, %v2115
      %v2135 = vsel %vm727, %v2109, %v2117
      %v2136 = vsel %vm727, %v2111, %v2119
      %v2137 = vsel %vm727, %v2113, %v2121
      %v2138 = vsel %vm727, %v2099, %v2107
      %v2139 = vsel %vm727, %v2101, %v2109
      %v2140 = vsel %vm727, %v2103, %v2111
      %v2141 = vsel %vm727, %v2105, %v2113
      %v2142 = vsel %vm727, %v2123, %v2099
      %v2143 = vsel %vm727, %v2125, %v2101
      %v2144 = vsel %vm727, %v2127, %v2103
      %v2145 = vsel %vm727, %v2129, %v2105
      %v2146 = vmul.f32 %v2138, %v735
      %v2147 = vmul.f32 %v2134, %v736
      %v2148 = vmul.f32 %v2130, %v737
      %v2149 = vmul.f32 %v2142, %v738
      %v2150 = vmul.f32 %v2139, %v735
      %v2151 = vmul.f32 %v2135, %v736
      %v2152 = vmul.f32 %v2131, %v737
      %v2153 = vmul.f32 %v2143, %v738
      %v2154 = vmul.f32 %v2140, %v735
      %v2155 = vmul.f32 %v2136, %v736
      %v2156 = vmul.f32 %v2132, %v737
      %v2157 = vmul.f32 %v2144, %v738
      %v2158 = vmul.f32 %v2141, %v735
      %v2159 = vmul.f32 %v2137, %v736
      %v2160 = vmul.f32 %v2133, %v737
      %v2161 = vmul.f32 %v2145, %v738
      %v2162 = vld [vmem:[%s7] sm:$0xff]
      %v2163 = vld [vmem:[%s7 + $0x8] sm:$0xf]
      %v2164 = vld [vmem:[%s7 + $0xc] sm:$0xff]
      %v2165 = vld [vmem:[%s7 + $0x14] sm:$0xf]
      %v2166 = vpack.c.bf16 %v1702, %v1698
      %v2167 = vpack.c.bf16 %v1703, %v1699
      %v2168 = vpack.c.bf16 %v1704, %v1700
      %v2169 = vpack.c.bf16 %v1705, %v1701
      %v2170 = vpack.c.bf16 %v1710, %v1706
      %v2171 = vpack.c.bf16 %v1711, %v1707
      %v2172 = vpack.c.bf16 %v1712, %v1708
      %v2173 = vpack.c.bf16 %v1713, %v1709
      %v2174 = vpack.c.bf16 %v1766, %v1762
      %v2175 = vpack.c.bf16 %v1767, %v1763
      %v2176 = vpack.c.bf16 %v1768, %v1764
      %v2177 = vpack.c.bf16 %v1769, %v1765
      %v2178 = vpack.c.bf16 %v1774, %v1770
      %v2179 = vpack.c.bf16 %v1775, %v1771
      %v2180 = vpack.c.bf16 %v1776, %v1772
      %v2181 = vpack.c.bf16 %v1777, %v1773
      %v2182 = vpack.c.bf16 %v1830, %v1826
      %v2183 = vpack.c.bf16 %v1831, %v1827
      %v2184 = vpack.c.bf16 %v1832, %v1828
      %v2185 = vpack.c.bf16 %v1833, %v1829
      %v2186 = vpack.c.bf16 %v1838, %v1834
      %v2187 = vpack.c.bf16 %v1839, %v1835
      %v2188 = vpack.c.bf16 %v1840, %v1836
      %v2189 = vpack.c.bf16 %v1841, %v1837
      %v2190 = vpack.c.bf16 %v1894, %v1890
      %v2191 = vpack.c.bf16 %v1895, %v1891
      %v2192 = vpack.c.bf16 %v1896, %v1892
      %v2193 = vpack.c.bf16 %v1897, %v1893
      %v2194 = vpack.c.bf16 %v1902, %v1898
      %v2195 = vpack.c.bf16 %v1903, %v1899
      %v2196 = vpack.c.bf16 %v1904, %v1900
      %v2197 = vpack.c.bf16 %v1905, %v1901
      %v2198 = vpack.c.bf16 %v1638, %v1634
      %v2199 = vpack.c.bf16 %v1639, %v1635
      %v2200 = vpack.c.bf16 %v1640, %v1636
      %v2201 = vpack.c.bf16 %v1641, %v1637
      %v2202 = vpack.c.bf16 %v1646, %v1642
      %v2203 = vpack.c.bf16 %v1647, %v1643
      %v2204 = vpack.c.bf16 %v1648, %v1644
      %v2205 = vpack.c.bf16 %v1649, %v1645
      %v2206 = vpack.c.bf16 %v1958, %v1954
      %v2207 = vpack.c.bf16 %v1959, %v1955
      %v2208 = vpack.c.bf16 %v1960, %v1956
      %v2209 = vpack.c.bf16 %v1961, %v1957
      %v2210 = vpack.c.bf16 %v1966, %v1962
      %v2211 = vpack.c.bf16 %v1967, %v1963
      %v2212 = vpack.c.bf16 %v1968, %v1964
      %v2213 = vpack.c.bf16 %v1969, %v1965
      %v2214 = vpack.c.bf16 %v2022, %v2018
      %v2215 = vpack.c.bf16 %v2023, %v2019
      %v2216 = vpack.c.bf16 %v2024, %v2020
      %v2217 = vpack.c.bf16 %v2025, %v2021
      %v2218 = vpack.c.bf16 %v2030, %v2026
      %v2219 = vpack.c.bf16 %v2031, %v2027
      %v2220 = vpack.c.bf16 %v2032, %v2028
      %v2221 = vpack.c.bf16 %v2033, %v2029
      %v2222 = vpack.c.bf16 %v2086, %v2082
      %v2223 = vpack.c.bf16 %v2087, %v2083
      %v2224 = vpack.c.bf16 %v2088, %v2084
      %v2225 = vpack.c.bf16 %v2089, %v2085
      %v2226 = vpack.c.bf16 %v2094, %v2090
      %v2227 = vpack.c.bf16 %v2095, %v2091
      %v2228 = vpack.c.bf16 %v2096, %v2092
      %v2229 = vpack.c.bf16 %v2097, %v2093
      %v2230 = vpack.c.bf16 %v2150, %v2146
      %v2231 = vpack.c.bf16 %v2151, %v2147
      %v2232 = vpack.c.bf16 %v2152, %v2148
      %v2233 = vpack.c.bf16 %v2153, %v2149
      %v2234 = vpack.c.bf16 %v2158, %v2154
      %v2235 = vpack.c.bf16 %v2159, %v2155
      %v2236 = vpack.c.bf16 %v2160, %v2156
      %v2237 = vpack.c.bf16 %v2161, %v2157
      %v2242 = vunpack.c.l.b16 %v2162
      %v2243 = vunpack.c.h.b16 %v2162
      %v2244 = vunpack.c.l.b16 %v2163
      %v2245 = vunpack.c.l.b16 %v2164
      %v2246 = vunpack.c.h.b16 %v2164
      %v2247 = vunpack.c.l.b16 %v2165
      %v2248 = vpack.c.b16 %v2245, %v2242
      %v2249 = vpack.c.b16 %v2246, %v2243
      %v2250 = vpack.c.b16 %v2247, %v2244
      %vm2253 = vcmask 261120
      %v2255 = vsel %vm2253, %v2250, 0
      %2257 = vmatpush.bf16.msra.mxu0 %v2194
      %2258 = vmatpush.bf16.msra.mxu0 %v2190
      %2259 = vmatpush.bf16.msra.mxu0 %v2186
      %2260 = vmatpush.bf16.msra.mxu0 %v2182
      %2261 = vmatpush.bf16.msra.mxu0 %v2178
      %2262 = vmatpush.bf16.msra.mxu0 %v2174
      %2263 = vmatpush.bf16.msra.mxu0 %v2170
      %2264 = vmatpush.bf16.msra.mxu0 %v2166
      %2265 = vmatmul.bf16.gmra.mxu0 %v2248
      %v2266 = vpop.f32.mrf.mxu0
      %v2267 = vadd.f32 0.0, %v2266
      %v2268 = vpop.f32.mrf.mxu0
      %v2269 = vadd.f32 0.0, %v2268
      %2270 = vdwg.mxu0
      %2271 = vmatpush.bf16.msra.mxu0 %v2226
      %2272 = vmatpush.bf16.msra.mxu0 %v2222
      %2273 = vmatpush.bf16.msra.mxu0 %v2218
      %2274 = vmatpush.bf16.msra.mxu0 %v2214
      %2275 = vmatpush.bf16.msra.mxu0 %v2210
      %2276 = vmatpush.bf16.msra.mxu0 %v2206
      %2277 = vmatpush.bf16.msra.mxu0 %v2202
      %2278 = vmatpush.bf16.msra.mxu0 %v2198
      %2279 = vmatmul.bf16.gmra.mxu0 %v2249
      %v2280 = vpop.f32.mrf.mxu0
      %v2281 = vadd.f32 %v2267, %v2280
      %v2282 = vpop.f32.mrf.mxu0
      %v2283 = vadd.f32 %v2269, %v2282
      %2284 = vdwg.mxu0
      %2285 = vmatpush.bf16.msra.mxu0 0
      %2286 = vmatpush.bf16.msra.mxu0 0
      %2287 = vmatpush.bf16.msra.mxu0 0
      %2288 = vmatpush.bf16.msra.mxu0 0
      %2289 = vmatpush.bf16.msra.mxu0 0
      %2290 = vmatpush.bf16.msra.mxu0 0
      %2291 = vmatpush.bf16.msra.mxu0 %v2234
      %2292 = vmatpush.bf16.msra.mxu0 %v2230
      %2293 = vmatmul.bf16.gmra.mxu0 %v2255
      %v2294 = vpop.f32.mrf.mxu0
      %v2295 = vadd.f32 %v2281, %v2294
      %v2296 = vpop.f32.mrf.mxu0
      %v2297 = vadd.f32 %v2283, %v2296
      %2298 = vdwg.mxu0
      %2299 = vmatpush.bf16.msra.mxu0 %v2195
      %2300 = vmatpush.bf16.msra.mxu0 %v2191
      %2301 = vmatpush.bf16.msra.mxu0 %v2187
      %2302 = vmatpush.bf16.msra.mxu0 %v2183
      %2303 = vmatpush.bf16.msra.mxu0 %v2179
      %2304 = vmatpush.bf16.msra.mxu0 %v2175
      %2305 = vmatpush.bf16.msra.mxu0 %v2171
      %2306 = vmatpush.bf16.msra.mxu0 %v2167
      %2307 = vmatmul.bf16.gmra.mxu0 %v2248
      %v2308 = vpop.f32.mrf.mxu0
      %v2309 = vadd.f32 0.0, %v2308
      %v2310 = vpop.f32.mrf.mxu0
      %v2311 = vadd.f32 0.0, %v2310
      %2312 = vdwg.mxu0
      %2313 = vmatpush.bf16.msra.mxu0 %v2227
      %2314 = vmatpush.bf16.msra.mxu0 %v2223
      %2315 = vmatpush.bf16.msra.mxu0 %v2219
      %2316 = vmatpush.bf16.msra.mxu0 %v2215
      %2317 = vmatpush.bf16.msra.mxu0 %v2211
      %2318 = vmatpush.bf16.msra.mxu0 %v2207
      %2319 = vmatpush.bf16.msra.mxu0 %v2203
      %2320 = vmatpush.bf16.msra.mxu0 %v2199
      %2321 = vmatmul.bf16.gmra.mxu0 %v2249
      %v2322 = vpop.f32.mrf.mxu0
      %v2323 = vadd.f32 %v2309, %v2322
      %v2324 = vpop.f32.mrf.mxu0
      %v2325 = vadd.f32 %v2311, %v2324
      %2326 = vdwg.mxu0
      %2327 = vmatpush.bf16.msra.mxu0 0
      %2328 = vmatpush.bf16.msra.mxu0 0
      %2329 = vmatpush.bf16.msra.mxu0 0
      %2330 = vmatpush.bf16.msra.mxu0 0
      %2331 = vmatpush.bf16.msra.mxu0 0
      %2332 = vmatpush.bf16.msra.mxu0 0
      %2333 = vmatpush.bf16.msra.mxu0 %v2235
      %2334 = vmatpush.bf16.msra.mxu0 %v2231
      %2335 = vmatmul.bf16.gmra.mxu0 %v2255
      %v2336 = vpop.f32.mrf.mxu0
      %v2337 = vadd.f32 %v2323, %v2336
      %v2338 = vpop.f32.mrf.mxu0
      %v2339 = vadd.f32 %v2325, %v2338
      %2340 = vdwg.mxu0
      %2341 = vmatpush.bf16.msra.mxu0 %v2196
      %2342 = vmatpush.bf16.msra.mxu0 %v2192
      %2343 = vmatpush.bf16.msra.mxu0 %v2188
      %2344 = vmatpush.bf16.msra.mxu0 %v2184
      %2345 = vmatpush.bf16.msra.mxu0 %v2180
      %2346 = vmatpush.bf16.msra.mxu0 %v2176
      %2347 = vmatpush.bf16.msra.mxu0 %v2172
      %2348 = vmatpush.bf16.msra.mxu0 %v2168
      %2349 = vmatmul.bf16.gmra.mxu0 %v2248
      %v2350 = vpop.f32.mrf.mxu0
      %v2351 = vadd.f32 0.0, %v2350
      %v2352 = vpop.f32.mrf.mxu0
      %v2353 = vadd.f32 0.0, %v2352
      %2354 = vdwg.mxu0
      %2355 = vmatpush.bf16.msra.mxu0 %v2228
      %2356 = vmatpush.bf16.msra.mxu0 %v2224
      %2357 = vmatpush.bf16.msra.mxu0 %v2220
      %2358 = vmatpush.bf16.msra.mxu0 %v2216
      %2359 = vmatpush.bf16.msra.mxu0 %v2212
      %2360 = vmatpush.bf16.msra.mxu0 %v2208
      %2361 = vmatpush.bf16.msra.mxu0 %v2204
      %2362 = vmatpush.bf16.msra.mxu0 %v2200
      %2363 = vmatmul.bf16.gmra.mxu0 %v2249
      %v2364 = vpop.f32.mrf.mxu0
      %v2365 = vadd.f32 %v2351, %v2364
      %v2366 = vpop.f32.mrf.mxu0
      %v2367 = vadd.f32 %v2353, %v2366
      %2368 = vdwg.mxu0
      %2369 = vmatpush.bf16.msra.mxu0 0
      %2370 = vmatpush.bf16.msra.mxu0 0
      %2371 = vmatpush.bf16.msra.mxu0 0
      %2372 = vmatpush.bf16.msra.mxu0 0
      %2373 = vmatpush.bf16.msra.mxu0 0
      %2374 = vmatpush.bf16.msra.mxu0 0
      %2375 = vmatpush.bf16.msra.mxu0 %v2236
      %2376 = vmatpush.bf16.msra.mxu0 %v2232
      %2377 = vmatmul.bf16.gmra.mxu0 %v2255
      %v2378 = vpop.f32.mrf.mxu0
      %v2379 = vadd.f32 %v2365, %v2378
      %v2380 = vpop.f32.mrf.mxu0
      %v2381 = vadd.f32 %v2367, %v2380
      %2382 = vdwg.mxu0
      %2383 = vmatpush.bf16.msra.mxu0 %v2197
      %2384 = vmatpush.bf16.msra.mxu0 %v2193
      %2385 = vmatpush.bf16.msra.mxu0 %v2189
      %2386 = vmatpush.bf16.msra.mxu0 %v2185
      %2387 = vmatpush.bf16.msra.mxu0 %v2181
      %2388 = vmatpush.bf16.msra.mxu0 %v2177
      %2389 = vmatpush.bf16.msra.mxu0 %v2173
      %2390 = vmatpush.bf16.msra.mxu0 %v2169
      %2391 = vmatmul.bf16.gmra.mxu0 %v2248
      %v2392 = vpop.f32.mrf.mxu0
      %v2393 = vadd.f32 0.0, %v2392
      %v2394 = vpop.f32.mrf.mxu0
      %v2395 = vadd.f32 0.0, %v2394
      %2396 = vdwg.mxu0
      %2397 = vmatpush.bf16.msra.mxu0 %v2229
      %2398 = vmatpush.bf16.msra.mxu0 %v2225
      %2399 = vmatpush.bf16.msra.mxu0 %v2221
      %2400 = vmatpush.bf16.msra.mxu0 %v2217
      %2401 = vmatpush.bf16.msra.mxu0 %v2213
      %2402 = vmatpush.bf16.msra.mxu0 %v2209
      %2403 = vmatpush.bf16.msra.mxu0 %v2205
      %2404 = vmatpush.bf16.msra.mxu0 %v2201
      %2405 = vmatmul.bf16.gmra.mxu0 %v2249
      %v2406 = vpop.f32.mrf.mxu0
      %v2407 = vadd.f32 %v2393, %v2406
      %v2408 = vpop.f32.mrf.mxu0
      %v2409 = vadd.f32 %v2395, %v2408
      %2410 = vdwg.mxu0
      %2411 = vmatpush.bf16.msra.mxu0 0
      %2412 = vmatpush.bf16.msra.mxu0 0
      %2413 = vmatpush.bf16.msra.mxu0 0
      %2414 = vmatpush.bf16.msra.mxu0 0
      %2415 = vmatpush.bf16.msra.mxu0 0
      %2416 = vmatpush.bf16.msra.mxu0 0
      %2417 = vmatpush.bf16.msra.mxu0 %v2237
      %2418 = vmatpush.bf16.msra.mxu0 %v2233
      %2419 = vmatmul.bf16.gmra.mxu0 %v2255
      %v2420 = vpop.f32.mrf.mxu0
      %v2421 = vadd.f32 %v2407, %v2420
      %v2422 = vpop.f32.mrf.mxu0
      %v2423 = vadd.f32 %v2409, %v2422
      %2424 = vdwg.mxu0
      %v2425 = vadd.f32 %v1103, %v2295
      %v2426 = vadd.f32 %v1104, %v2337
      %v2427 = vadd.f32 %v1105, %v2379
      %v2428 = vadd.f32 %v1106, %v2421
      %v2429 = vadd.f32 %v1107, %v2297
      %v2430 = vadd.f32 %v1108, %v2339
      %v2431 = vadd.f32 %v1109, %v2381
      %v2432 = vadd.f32 %v1110, %v2423
      %2433 = vrot.lane.b32.xlu0 %v2425, 127
      %v2434 = vpop.permute.xlu0 %2433
      %2435 = vrot.lane.b32.xlu0 %v2429, 127
      %v2436 = vpop.permute.xlu0 %2435
      %2437 = vrot.lane.b32.xlu0 %v2426, 127
      %v2438 = vpop.permute.xlu0 %2437
      %2439 = vrot.lane.b32.xlu0 %v2430, 127
      %v2440 = vpop.permute.xlu0 %2439
      %2441 = vrot.lane.b32.xlu0 %v2427, 127
      %v2442 = vpop.permute.xlu0 %2441
      %2443 = vrot.lane.b32.xlu0 %v2431, 127
      %v2444 = vpop.permute.xlu0 %2443
      %2445 = vrot.lane.b32.xlu0 %v2428, 127
      %v2446 = vpop.permute.xlu0 %2445
      %2447 = vrot.lane.b32.xlu0 %v2432, 127
      %v2448 = vpop.permute.xlu0 %2447
      %v2449 = vsel %vm595, %v2442, %v2446
      %v2450 = vsel %vm595, %v2444, %v2448
      %v2451 = vsel %vm595, %v2438, %v2442
      %v2452 = vsel %vm595, %v2440, %v2444
      %v2453 = vsel %vm595, %v2434, %v2438
      %v2454 = vsel %vm595, %v2436, %v2440
      %v2455 = vsel %vm595, %v2446, %v2434
      %v2456 = vsel %vm595, %v2448, %v2436
      %v2457 = vmul.f32 %v2453, %v603
      %v2458 = vmul.f32 %v2451, %v604
      %v2459 = vmul.f32 %v2449, %v605
      %v2460 = vmul.f32 %v2455, %v606
      %v2461 = vmul.f32 %v2454, %v603
      %v2462 = vmul.f32 %v2452, %v604
      %v2463 = vmul.f32 %v2450, %v605
      %v2464 = vmul.f32 %v2456, %v606
      %2465 = vrot.lane.b32.xlu0 %v2425, 120
      %v2466 = vpop.permute.xlu0 %2465
      %2467 = vrot.lane.b32.xlu0 %v2429, 120
      %v2468 = vpop.permute.xlu0 %2467
      %2469 = vrot.lane.b32.xlu0 %v2426, 120
      %v2470 = vpop.permute.xlu0 %2469
      %2471 = vrot.lane.b32.xlu0 %v2430, 120
      %v2472 = vpop.permute.xlu0 %2471
      %2473 = vrot.lane.b32.xlu0 %v2427, 120
      %v2474 = vpop.permute.xlu0 %2473
      %2475 = vrot.lane.b32.xlu0 %v2431, 120
      %v2476 = vpop.permute.xlu0 %2475
      %2477 = vrot.lane.b32.xlu0 %v2428, 120
      %v2478 = vpop.permute.xlu0 %2477
      %2479 = vrot.lane.b32.xlu0 %v2432, 120
      %v2480 = vpop.permute.xlu0 %2479
      %v2481 = vsel %vm683, %v2474, %v2478
      %v2482 = vsel %vm683, %v2476, %v2480
      %v2483 = vsel %vm683, %v2470, %v2474
      %v2484 = vsel %vm683, %v2472, %v2476
      %v2485 = vsel %vm683, %v2466, %v2470
      %v2486 = vsel %vm683, %v2468, %v2472
      %v2487 = vsel %vm683, %v2478, %v2466
      %v2488 = vsel %vm683, %v2480, %v2468
      %v2489 = vmul.f32 %v2485, %v691
      %v2490 = vmul.f32 %v2483, %v692
      %v2491 = vmul.f32 %v2481, %v693
      %v2492 = vmul.f32 %v2487, %v694
      %v2493 = vmul.f32 %v2486, %v691
      %v2494 = vmul.f32 %v2484, %v692
      %v2495 = vmul.f32 %v2482, %v693
      %v2496 = vmul.f32 %v2488, %v694
      %2497 = vrot.lane.b32.xlu0 %v2425, 119
      %v2498 = vpop.permute.xlu0 %2497
      %2499 = vrot.lane.b32.xlu0 %v2429, 119
      %v2500 = vpop.permute.xlu0 %2499
      %2501 = vrot.lane.b32.xlu0 %v2426, 119
      %v2502 = vpop.permute.xlu0 %2501
      %2503 = vrot.lane.b32.xlu0 %v2430, 119
      %v2504 = vpop.permute.xlu0 %2503
      %2505 = vrot.lane.b32.xlu0 %v2427, 119
      %v2506 = vpop.permute.xlu0 %2505
      %2507 = vrot.lane.b32.xlu0 %v2431, 119
      %v2508 = vpop.permute.xlu0 %2507
      %2509 = vrot.lane.b32.xlu0 %v2428, 119
      %v2510 = vpop.permute.xlu0 %2509
      %2511 = vrot.lane.b32.xlu0 %v2432, 119
      %v2512 = vpop.permute.xlu0 %2511
      %v2513 = vsel %vm727, %v2506, %v2510
      %v2514 = vsel %vm727, %v2508, %v2512
      %v2515 = vsel %vm727, %v2502, %v2506
      %v2516 = vsel %vm727, %v2504, %v2508
      %v2517 = vsel %vm727, %v2498, %v2502
      %v2518 = vsel %vm727, %v2500, %v2504
      %v2519 = vsel %vm727, %v2510, %v2498
      %v2520 = vsel %vm727, %v2512, %v2500
      %v2521 = vmul.f32 %v2517, %v735
      %v2522 = vmul.f32 %v2515, %v736
      %v2523 = vmul.f32 %v2513, %v737
      %v2524 = vmul.f32 %v2519, %v738
      %v2525 = vmul.f32 %v2518, %v735
      %v2526 = vmul.f32 %v2516, %v736
      %v2527 = vmul.f32 %v2514, %v737
      %v2528 = vmul.f32 %v2520, %v738
      %v2529 = vld [vmem:[%s8] sm:$0xf]
      %v2530 = vld [vmem:[%s8 + $0x4] sm:$0xf]
      %v2531 = vld [vmem:[%s8 + $0x8] sm:$0xf]
      %v2532 = vld [vmem:[%s8 + $0xc] sm:$0xf]
      %v2533 = vpack.c.bf16 %v2429, %v2425
      %v2534 = vpack.c.bf16 %v2430, %v2426
      %v2535 = vpack.c.bf16 %v2431, %v2427
      %v2536 = vpack.c.bf16 %v2432, %v2428
      %v2537 = vpack.c.bf16 %v2461, %v2457
      %v2538 = vpack.c.bf16 %v2462, %v2458
      %v2539 = vpack.c.bf16 %v2463, %v2459
      %v2540 = vpack.c.bf16 %v2464, %v2460
      %v2541 = vpack.c.bf16 %v2493, %v2489
      %v2542 = vpack.c.bf16 %v2494, %v2490
      %v2543 = vpack.c.bf16 %v2495, %v2491
      %v2544 = vpack.c.bf16 %v2496, %v2492
      %v2545 = vpack.c.bf16 %v2525, %v2521
      %v2546 = vpack.c.bf16 %v2526, %v2522
      %v2547 = vpack.c.bf16 %v2527, %v2523
      %v2548 = vpack.c.bf16 %v2528, %v2524
      %v2553 = vunpack.c.l.b16 %v2529
      %v2554 = vunpack.c.l.b16 %v2530
      %v2555 = vunpack.c.l.b16 %v2531
      %v2556 = vunpack.c.l.b16 %v2532
      %v2557 = vpack.c.b16 %v2554, %v2553
      %v2558 = vpack.c.b16 %v2556, %v2555
      %vm2559 = vcmask 523264
      %v2561 = vsel %vm2559, %v2557, 0
      %v2564 = vsel %vm2559, %v2558, 0
      %2566 = vmatpush.bf16.msra.mxu0 0
      %2567 = vmatpush.bf16.msra.mxu0 0
      %2568 = vmatpush.bf16.msra.mxu0 0
      %2569 = vmatpush.bf16.msra.mxu0 0
      %2570 = vmatpush.bf16.msra.mxu0 %v2545
      %2571 = vmatpush.bf16.msra.mxu0 %v2541
      %2572 = vmatpush.bf16.msra.mxu0 %v2537
      %2573 = vmatpush.bf16.msra.mxu0 %v2533
      %2574 = vmatmul.bf16.gmra.mxu0 %v2561
      %v2575 = vpop.f32.mrf.mxu0
      %v2576 = vadd.f32 0.0, %v2575
      %v2577 = vpop.f32.mrf.mxu0
      %v2578 = vadd.f32 0.0, %v2577
      %2579 = vmatmul.bf16.gmra.mxu0 %v2564
      %v2580 = vpop.f32.mrf.mxu0
      %v2581 = vadd.f32 0.0, %v2580
      %v2582 = vpop.f32.mrf.mxu0
      %v2583 = vadd.f32 0.0, %v2582
      %2584 = vdwg.mxu0
      %2585 = vmatpush.bf16.msra.mxu0 0
      %2586 = vmatpush.bf16.msra.mxu0 0
      %2587 = vmatpush.bf16.msra.mxu0 0
      %2588 = vmatpush.bf16.msra.mxu0 0
      %2589 = vmatpush.bf16.msra.mxu0 %v2546
      %2590 = vmatpush.bf16.msra.mxu0 %v2542
      %2591 = vmatpush.bf16.msra.mxu0 %v2538
      %2592 = vmatpush.bf16.msra.mxu0 %v2534
      %2593 = vmatmul.bf16.gmra.mxu0 %v2561
      %v2594 = vpop.f32.mrf.mxu0
      %v2595 = vadd.f32 0.0, %v2594
      %v2596 = vpop.f32.mrf.mxu0
      %v2597 = vadd.f32 0.0, %v2596
      %2598 = vmatmul.bf16.gmra.mxu0 %v2564
      %v2599 = vpop.f32.mrf.mxu0
      %v2600 = vadd.f32 0.0, %v2599
      %v2601 = vpop.f32.mrf.mxu0
      %v2602 = vadd.f32 0.0, %v2601
      %2603 = vdwg.mxu0
      %2604 = vmatpush.bf16.msra.mxu0 0
      %2605 = vmatpush.bf16.msra.mxu0 0
      %2606 = vmatpush.bf16.msra.mxu0 0
      %2607 = vmatpush.bf16.msra.mxu0 0
      %2608 = vmatpush.bf16.msra.mxu0 %v2547
      %2609 = vmatpush.bf16.msra.mxu0 %v2543
      %2610 = vmatpush.bf16.msra.mxu0 %v2539
      %2611 = vmatpush.bf16.msra.mxu0 %v2535
      %2612 = vmatmul.bf16.gmra.mxu0 %v2561
      %v2613 = vpop.f32.mrf.mxu0
      %v2614 = vadd.f32 0.0, %v2613
      %v2615 = vpop.f32.mrf.mxu0
      %v2616 = vadd.f32 0.0, %v2615
      %2617 = vmatmul.bf16.gmra.mxu0 %v2564
      %v2618 = vpop.f32.mrf.mxu0
      %v2619 = vadd.f32 0.0, %v2618
      %v2620 = vpop.f32.mrf.mxu0
      %v2621 = vadd.f32 0.0, %v2620
      %2622 = vdwg.mxu0
      %2623 = vmatpush.bf16.msra.mxu0 0
      %2624 = vmatpush.bf16.msra.mxu0 0
      %2625 = vmatpush.bf16.msra.mxu0 0
      %2626 = vmatpush.bf16.msra.mxu0 0
      %2627 = vmatpush.bf16.msra.mxu0 %v2548
      %2628 = vmatpush.bf16.msra.mxu0 %v2544
      %2629 = vmatpush.bf16.msra.mxu0 %v2540
      %2630 = vmatpush.bf16.msra.mxu0 %v2536
      %2631 = vmatmul.bf16.gmra.mxu0 %v2561
      %v2632 = vpop.f32.mrf.mxu0
      %v2633 = vadd.f32 0.0, %v2632
      %v2634 = vpop.f32.mrf.mxu0
      %v2635 = vadd.f32 0.0, %v2634
      %2636 = vmatmul.bf16.gmra.mxu0 %v2564
      %v2637 = vpop.f32.mrf.mxu0
      %v2638 = vadd.f32 0.0, %v2637
      %v2639 = vpop.f32.mrf.mxu0
      %v2640 = vadd.f32 0.0, %v2639
      %2641 = vdwg.mxu0
      %v2642 = vadd.f32 %v895, %v2576
      %v2643 = vadd.f32 %v896, %v2595
      %v2644 = vadd.f32 %v897, %v2614
      %v2645 = vadd.f32 %v898, %v2633
      %v2646 = vadd.f32 %v899, %v2578
      %v2647 = vadd.f32 %v900, %v2597
      %v2648 = vadd.f32 %v901, %v2616
      %v2649 = vadd.f32 %v902, %v2635
      %v2650 = vadd.f32 %v903, %v2581
      %v2651 = vadd.f32 %v904, %v2600
      %v2652 = vadd.f32 %v905, %v2619
      %v2653 = vadd.f32 %v906, %v2638
      %v2654 = vadd.f32 %v907, %v2583
      %v2655 = vadd.f32 %v908, %v2602
      %v2656 = vadd.f32 %v909, %v2621
      %v2657 = vadd.f32 %v910, %v2640
      %2658 = vrot.lane.b32.xlu0 %v2654, 9
      %v2659 = vpop.permute.xlu0 %2658
      %2660 = vrot.lane.b32.xlu0 %v2655, 9
      %v2661 = vpop.permute.xlu0 %2660
      %2662 = vrot.lane.b32.xlu0 %v2656, 9
      %v2663 = vpop.permute.xlu0 %2662
      %2664 = vrot.lane.b32.xlu0 %v2657, 9
      %v2665 = vpop.permute.xlu0 %2664
      %v2666 = vsel %vm468, %v2663, %v2665
      %v2667 = vsel %vm468, %v2661, %v2663
      %v2668 = vsel %vm468, %v2659, %v2661
      %v2669 = vsel %vm468, %v2665, %v2659
      %v2670 = vmul.f32 %v2669, %v475
      %v2671 = vmul.f32 %v2668, %v476
      %v2672 = vmul.f32 %v2667, %v477
      %v2673 = vmul.f32 %v2666, %v478
      %2674 = vrot.lane.b32.xlu0 %v2650, 8
      %v2675 = vpop.permute.xlu0 %2674
      %2676 = vrot.lane.b32.xlu0 %v2651, 8
      %v2677 = vpop.permute.xlu0 %2676
      %2678 = vrot.lane.b32.xlu0 %v2652, 8
      %v2679 = vpop.permute.xlu0 %2678
      %2680 = vrot.lane.b32.xlu0 %v2653, 8
      %v2681 = vpop.permute.xlu0 %2680
      %v2682 = vsel %vm495, %v2679, %v2681
      %v2683 = vsel %vm495, %v2677, %v2679
      %v2684 = vsel %vm495, %v2675, %v2677
      %v2685 = vsel %vm495, %v2681, %v2675
      %v2686 = vmul.f32 %v2685, %v503
      %v2687 = vmul.f32 %v2684, %v504
      %v2688 = vmul.f32 %v2683, %v505
      %v2689 = vmul.f32 %v2682, %v506
      %2690 = vrot.lane.b32.xlu0 %v2654, 8
      %v2691 = vpop.permute.xlu0 %2690
      %2692 = vrot.lane.b32.xlu0 %v2655, 8
      %v2693 = vpop.permute.xlu0 %2692
      %2694 = vrot.lane.b32.xlu0 %v2656, 8
      %v2695 = vpop.permute.xlu0 %2694
      %2696 = vrot.lane.b32.xlu0 %v2657, 8
      %v2697 = vpop.permute.xlu0 %2696
      %v2698 = vsel %vm495, %v2695, %v2697
      %v2699 = vsel %vm495, %v2693, %v2695
      %v2700 = vsel %vm495, %v2691, %v2693
      %v2701 = vsel %vm495, %v2697, %v2691
      %v2702 = vmul.f32 %v2701, %v503
      %v2703 = vmul.f32 %v2700, %v504
      %v2704 = vmul.f32 %v2699, %v505
      %v2705 = vmul.f32 %v2698, %v506
      %2706 = vrot.lane.b32.xlu0 %v2650, 7
      %v2707 = vpop.permute.xlu0 %2706
      %2708 = vrot.lane.b32.xlu0 %v2651, 7
      %v2709 = vpop.permute.xlu0 %2708
      %2710 = vrot.lane.b32.xlu0 %v2652, 7
      %v2711 = vpop.permute.xlu0 %2710
      %2712 = vrot.lane.b32.xlu0 %v2653, 7
      %v2713 = vpop.permute.xlu0 %2712
      %v2714 = vsel %vm539, %v2711, %v2713
      %v2715 = vsel %vm539, %v2709, %v2711
      %v2716 = vsel %vm539, %v2707, %v2709
      %v2717 = vsel %vm539, %v2713, %v2707
      %v2718 = vmul.f32 %v2717, %v547
      %v2719 = vmul.f32 %v2716, %v548
      %v2720 = vmul.f32 %v2715, %v549
      %v2721 = vmul.f32 %v2714, %v550
      %2722 = vrot.lane.b32.xlu0 %v2646, 1
      %v2723 = vpop.permute.xlu0 %2722
      %2724 = vrot.lane.b32.xlu0 %v2647, 1
      %v2725 = vpop.permute.xlu0 %2724
      %2726 = vrot.lane.b32.xlu0 %v2648, 1
      %v2727 = vpop.permute.xlu0 %2726
      %2728 = vrot.lane.b32.xlu0 %v2649, 1
      %v2729 = vpop.permute.xlu0 %2728
      %v2730 = vsel %vm567, %v2727, %v2729
      %v2731 = vsel %vm567, %v2725, %v2727
      %v2732 = vsel %vm567, %v2723, %v2725
      %v2733 = vsel %vm567, %v2729, %v2723
      %v2734 = vmul.f32 %v2733, %v575
      %v2735 = vmul.f32 %v2732, %v576
      %v2736 = vmul.f32 %v2731, %v577
      %v2737 = vmul.f32 %v2730, %v578
      %2738 = vrot.lane.b32.xlu0 %v2642, 127
      %v2739 = vpop.permute.xlu0 %2738
      %2740 = vrot.lane.b32.xlu0 %v2643, 127
      %v2741 = vpop.permute.xlu0 %2740
      %2742 = vrot.lane.b32.xlu0 %v2644, 127
      %v2743 = vpop.permute.xlu0 %2742
      %2744 = vrot.lane.b32.xlu0 %v2645, 127
      %v2745 = vpop.permute.xlu0 %2744
      %v2746 = vsel %vm595, %v2743, %v2745
      %v2747 = vsel %vm595, %v2741, %v2743
      %v2748 = vsel %vm595, %v2739, %v2741
      %v2749 = vsel %vm595, %v2745, %v2739
      %v2750 = vmul.f32 %v2748, %v603
      %v2751 = vmul.f32 %v2747, %v604
      %v2752 = vmul.f32 %v2746, %v605
      %v2753 = vmul.f32 %v2749, %v606
      %2754 = vrot.lane.b32.xlu0 %v2654, 1
      %v2755 = vpop.permute.xlu0 %2754
      %2756 = vrot.lane.b32.xlu0 %v2655, 1
      %v2757 = vpop.permute.xlu0 %2756
      %2758 = vrot.lane.b32.xlu0 %v2656, 1
      %v2759 = vpop.permute.xlu0 %2758
      %2760 = vrot.lane.b32.xlu0 %v2657, 1
      %v2761 = vpop.permute.xlu0 %2760
      %v2762 = vsel %vm567, %v2759, %v2761
      %v2763 = vsel %vm567, %v2757, %v2759
      %v2764 = vsel %vm567, %v2755, %v2757
      %v2765 = vsel %vm567, %v2761, %v2755
      %v2766 = vmul.f32 %v2765, %v575
      %v2767 = vmul.f32 %v2764, %v576
      %v2768 = vmul.f32 %v2763, %v577
      %v2769 = vmul.f32 %v2762, %v578
      %2770 = vrot.lane.b32.xlu0 %v2650, 127
      %v2771 = vpop.permute.xlu0 %2770
      %2772 = vrot.lane.b32.xlu0 %v2651, 127
      %v2773 = vpop.permute.xlu0 %2772
      %2774 = vrot.lane.b32.xlu0 %v2652, 127
      %v2775 = vpop.permute.xlu0 %2774
      %2776 = vrot.lane.b32.xlu0 %v2653, 127
      %v2777 = vpop.permute.xlu0 %2776
      %v2778 = vsel %vm595, %v2775, %v2777
      %v2779 = vsel %vm595, %v2773, %v2775
      %v2780 = vsel %vm595, %v2771, %v2773
      %v2781 = vsel %vm595, %v2777, %v2771
      %v2782 = vmul.f32 %v2780, %v603
      %v2783 = vmul.f32 %v2779, %v604
      %v2784 = vmul.f32 %v2778, %v605
      %v2785 = vmul.f32 %v2781, %v606
      %2786 = vrot.lane.b32.xlu0 %v2646, 121
      %v2787 = vpop.permute.xlu0 %2786
      %2788 = vrot.lane.b32.xlu0 %v2647, 121
      %v2789 = vpop.permute.xlu0 %2788
      %2790 = vrot.lane.b32.xlu0 %v2648, 121
      %v2791 = vpop.permute.xlu0 %2790
      %2792 = vrot.lane.b32.xlu0 %v2649, 121
      %v2793 = vpop.permute.xlu0 %2792
      %v2794 = vsel %vm655, %v2791, %v2793
      %v2795 = vsel %vm655, %v2789, %v2791
      %v2796 = vsel %vm655, %v2787, %v2789
      %v2797 = vsel %vm655, %v2793, %v2787
      %v2798 = vmul.f32 %v2796, %v663
      %v2799 = vmul.f32 %v2795, %v664
      %v2800 = vmul.f32 %v2794, %v665
      %v2801 = vmul.f32 %v2797, %v666
      %2802 = vrot.lane.b32.xlu0 %v2642, 120
      %v2803 = vpop.permute.xlu0 %2802
      %2804 = vrot.lane.b32.xlu0 %v2643, 120
      %v2805 = vpop.permute.xlu0 %2804
      %2806 = vrot.lane.b32.xlu0 %v2644, 120
      %v2807 = vpop.permute.xlu0 %2806
      %2808 = vrot.lane.b32.xlu0 %v2645, 120
      %v2809 = vpop.permute.xlu0 %2808
      %v2810 = vsel %vm683, %v2807, %v2809
      %v2811 = vsel %vm683, %v2805, %v2807
      %v2812 = vsel %vm683, %v2803, %v2805
      %v2813 = vsel %vm683, %v2809, %v2803
      %v2814 = vmul.f32 %v2812, %v691
      %v2815 = vmul.f32 %v2811, %v692
      %v2816 = vmul.f32 %v2810, %v693
      %v2817 = vmul.f32 %v2813, %v694
      %2818 = vrot.lane.b32.xlu0 %v2646, 120
      %v2819 = vpop.permute.xlu0 %2818
      %2820 = vrot.lane.b32.xlu0 %v2647, 120
      %v2821 = vpop.permute.xlu0 %2820
      %2822 = vrot.lane.b32.xlu0 %v2648, 120
      %v2823 = vpop.permute.xlu0 %2822
      %2824 = vrot.lane.b32.xlu0 %v2649, 120
      %v2825 = vpop.permute.xlu0 %2824
      %v2826 = vsel %vm683, %v2823, %v2825
      %v2827 = vsel %vm683, %v2821, %v2823
      %v2828 = vsel %vm683, %v2819, %v2821
      %v2829 = vsel %vm683, %v2825, %v2819
      %v2830 = vmul.f32 %v2828, %v691
      %v2831 = vmul.f32 %v2827, %v692
      %v2832 = vmul.f32 %v2826, %v693
      %v2833 = vmul.f32 %v2829, %v694
      %2834 = vrot.lane.b32.xlu0 %v2642, 119
      %v2835 = vpop.permute.xlu0 %2834
      %2836 = vrot.lane.b32.xlu0 %v2643, 119
      %v2837 = vpop.permute.xlu0 %2836
      %2838 = vrot.lane.b32.xlu0 %v2644, 119
      %v2839 = vpop.permute.xlu0 %2838
      %2840 = vrot.lane.b32.xlu0 %v2645, 119
      %v2841 = vpop.permute.xlu0 %2840
      %v2842 = vsel %vm727, %v2839, %v2841
      %v2843 = vsel %vm727, %v2837, %v2839
      %v2844 = vsel %vm727, %v2835, %v2837
      %v2845 = vsel %vm727, %v2841, %v2835
      %v2846 = vmul.f32 %v2844, %v735
      %v2847 = vmul.f32 %v2843, %v736
      %v2848 = vmul.f32 %v2842, %v737
      %v2849 = vmul.f32 %v2845, %v738
      %v2850 = vld [vmem:[%s9] sm:$0x3]
      %v2851 = vpack.c.bf16 %v2686, %v2670
      %v2852 = vpack.c.bf16 %v2687, %v2671
      %v2853 = vpack.c.bf16 %v2688, %v2672
      %v2854 = vpack.c.bf16 %v2689, %v2673
      %v2855 = vpack.c.bf16 %v2718, %v2702
      %v2856 = vpack.c.bf16 %v2719, %v2703
      %v2857 = vpack.c.bf16 %v2720, %v2704
      %v2858 = vpack.c.bf16 %v2721, %v2705
      %v2859 = vpack.c.bf16 %v2642, %v2734
      %v2860 = vpack.c.bf16 %v2643, %v2735
      %v2861 = vpack.c.bf16 %v2644, %v2736
      %v2862 = vpack.c.bf16 %v2645, %v2737
      %v2863 = vpack.c.bf16 %v2750, %v2646
      %v2864 = vpack.c.bf16 %v2751, %v2647
      %v2865 = vpack.c.bf16 %v2752, %v2648
      %v2866 = vpack.c.bf16 %v2753, %v2649
      %v2867 = vpack.c.bf16 %v2650, %v2766
      %v2868 = vpack.c.bf16 %v2651, %v2767
      %v2869 = vpack.c.bf16 %v2652, %v2768
      %v2870 = vpack.c.bf16 %v2653, %v2769
      %v2871 = vpack.c.bf16 %v2782, %v2654
      %v2872 = vpack.c.bf16 %v2783, %v2655
      %v2873 = vpack.c.bf16 %v2784, %v2656
      %v2874 = vpack.c.bf16 %v2785, %v2657
      %v2875 = vpack.c.bf16 %v2814, %v2798
      %v2876 = vpack.c.bf16 %v2815, %v2799
      %v2877 = vpack.c.bf16 %v2816, %v2800
      %v2878 = vpack.c.bf16 %v2817, %v2801
      %v2879 = vpack.c.bf16 %v2846, %v2830
      %v2880 = vpack.c.bf16 %v2847, %v2831
      %v2881 = vpack.c.bf16 %v2848, %v2832
      %v2882 = vpack.c.bf16 %v2849, %v2833
      %v2883 = vld [vmem:[%s10] sm:$0xf]
      %2885 = vset.pattern.permute.xlu0 0
      %2886 = vperm.xlu0 %2885, %v2883
      %v2887 = vpop.permute.xlu0 %2886
      %2889 = vmatpush.bf16.msra.mxu0 %v2879
      %2890 = vmatpush.bf16.msra.mxu0 %v2875
      %2891 = vmatpush.bf16.msra.mxu0 %v2871
      %2892 = vmatpush.bf16.msra.mxu0 %v2867
      %2893 = vmatpush.bf16.msra.mxu0 %v2863
      %2894 = vmatpush.bf16.msra.mxu0 %v2859
      %2895 = vmatpush.bf16.msra.mxu0 %v2855
      %2896 = vmatpush.bf16.msra.mxu0 %v2851
      %2897 = vmatmul.bf16.gmra.mxu0 %v2850
      %v2898 = vpop.f32.mrf.mxu0
      %v2899 = vadd.f32 %v2887, %v2898
      %v2900 = vpop.f32.mrf.mxu0
      %2901 = vdwg.mxu0
      %2902 = vmatpush.bf16.msra.mxu0 %v2880
      %2903 = vmatpush.bf16.msra.mxu0 %v2876
      %2904 = vmatpush.bf16.msra.mxu0 %v2872
      %2905 = vmatpush.bf16.msra.mxu0 %v2868
      %2906 = vmatpush.bf16.msra.mxu0 %v2864
      %2907 = vmatpush.bf16.msra.mxu0 %v2860
      %2908 = vmatpush.bf16.msra.mxu0 %v2856
      %2909 = vmatpush.bf16.msra.mxu0 %v2852
      %2910 = vmatmul.bf16.gmra.mxu0 %v2850
      %v2911 = vpop.f32.mrf.mxu0
      %v2912 = vadd.f32 %v2887, %v2911
      %v2913 = vpop.f32.mrf.mxu0
      %2914 = vdwg.mxu0
      %2915 = vmatpush.bf16.msra.mxu0 %v2881
      %2916 = vmatpush.bf16.msra.mxu0 %v2877
      %2917 = vmatpush.bf16.msra.mxu0 %v2873
      %2918 = vmatpush.bf16.msra.mxu0 %v2869
      %2919 = vmatpush.bf16.msra.mxu0 %v2865
      %2920 = vmatpush.bf16.msra.mxu0 %v2861
      %2921 = vmatpush.bf16.msra.mxu0 %v2857
      %2922 = vmatpush.bf16.msra.mxu0 %v2853
      %2923 = vmatmul.bf16.gmra.mxu0 %v2850
      %v2924 = vpop.f32.mrf.mxu0
      %v2925 = vadd.f32 %v2887, %v2924
      %v2926 = vpop.f32.mrf.mxu0
      %2927 = vdwg.mxu0
      %2928 = vmatpush.bf16.msra.mxu0 %v2882
      %2929 = vmatpush.bf16.msra.mxu0 %v2878
      %2930 = vmatpush.bf16.msra.mxu0 %v2874
      %2931 = vmatpush.bf16.msra.mxu0 %v2870
      %2932 = vmatpush.bf16.msra.mxu0 %v2866
      %2933 = vmatpush.bf16.msra.mxu0 %v2862
      %2934 = vmatpush.bf16.msra.mxu0 %v2858
      %2935 = vmatpush.bf16.msra.mxu0 %v2854
      %2936 = vmatmul.bf16.gmra.mxu0 %v2850
      %v2937 = vpop.f32.mrf.mxu0
      %v2938 = vadd.f32 %v2887, %v2937
      %v2939 = vpop.f32.mrf.mxu0
      %2940 = vdwg.mxu0
      %v2945 = vrot.slane %v2912, 4
      %v2946 = vrot.slane %v2938, 4
      %v2947 = vsel %vm1034, %v2899, %v2945
      %v2948 = vsel %vm1034, %v2925, %v2946
      %2951 = vst [vmem:[%s440] sm:$0xff] %v2947
      %2952 = vst [vmem:[%s440 + $0x8] sm:$0xff] %v2948
      %p2953 = scmp.lt.s32.totalorder %s24, 1
      %s2954 = scalar_select %p2953, %s24, 1
      %s2955 = smul.addr %s2954, 4
      %s2956 = smul.addr %s2955, 4
      %s2957 = scalar_lea.vmem %s13, %s2956
      // Predicated region
      $region73: #{corrnet_forward.1} parent=71 // pred_check
        %p2958 = pneg %p320
      $region74: #{corrnet_forward.1} parent=71 // pred_check_branch
        %2960 = sbr.rel (%p2958) target = $region76
      $region75: #{corrnet_forward.1} parent=71 // pred_region
        _
      $region76: #{corrnet_forward.1} parent=71 // pred_fallthru
        _
    $region72: #{corrnet_forward.1} parent=5 // pred_fallthru
      _
    %p2961 = scmp.le.s32.totalorder 2, %s19
    // Predicated region
    $region77: #{corrnet_forward.1} parent=5 // pred_check
      %p2962 = pneg %p2961
    $region78: #{corrnet_forward.1} parent=5 // pred_check_branch
      %2964 = sbr.rel (%p2962) target = $region80
    $region79: #{corrnet_forward.1} parent=5 // pred_region
      %s2965 = ssub.s32 %s19, 2
      // Predicated region
      $region81: #{corrnet_forward.1} parent=79 // pred_check
        %p2966 = pneg %p326
      $region82: #{corrnet_forward.1} parent=79 // pred_check_branch
        %2968 = sbr.rel (%p2966) target = $region84
      $region83: #{corrnet_forward.1} parent=79 // pred_region
        %p2969 = scmp.lt.s32.totalorder %s25, 1
        %s2970 = scalar_select %p2969, %s25, 1
        %s2971 = smul.addr %s2970, 4
        %s2972 = smul.addr %s2971, 4
        %s2973 = scalar_lea.vmem %s13, %s2972
      $region84: #{corrnet_forward.1} parent=79 // pred_fallthru
        _
    $region80: #{corrnet_forward.1} parent=5 // pred_fallthru
      _
  $region6: #{corrnet_forward.1} parent=0 // loop_footer
    %s23 = sadd.s32 1, %s19
  $region7: #{corrnet_forward.1} parent=0 // loop_footer_branch
    %18 = sbr.rel target = $region3
  $region8: #{corrnet_forward.1} parent=0 // loop_exit
    _

</llo_original>
